<compile_context>
chip_gen: v5e
topology: v5e:2x2
jax: 0.10.0
libtpu: 0.0.40
codegen_flags: <defaults>
</compile_context>

<pallas_src>
import jax
import jax.numpy as jnp
from jax import lax
from jax.experimental import pallas as pl
from jax.experimental.pallas import tpu as pltpu


def caa_kernel(alpha_ref, x_ref, wqk_ref, wv_ref, tqk_ref, t3_ref, o_ref):
    bt, C, N = x_ref.shape
    Q2 = wqk_ref.shape[0]          # 2 * (N // 8)
    Q = Q2 // 2

    # ---- fused query/key projection over all bt batch slabs at once --------
    #   qk[(b,c), o] = sum_n x[b, c, n] * w_qk[o, n]     (BN scales pre-folded)
    # Output is (bt*C, 2Q): 128-lane dense, one MXU pass instead of 2*bt.
    x2 = x_ref[...].reshape(bt * C, N)
    qk = lax.dot_general(x2, wqk_ref[...], (((1,), (1,)), ((), ())),
                         preferred_element_type=jnp.float32)      # (bt*C, 2Q)
    qk = jnp.maximum(qk + tqk_ref[...], 0.0)                      # BN shift + ReLU
    qk = qk.reshape(bt, C, Q2)
    q = qk[..., :Q]                # == proj_query^T : (bt, C, Q)
    k = qk[..., Q:]                # == proj_key     : (bt, C, Q)

    # ---- channel affinity: sim[b, c1, c2] = sum_o k[b,c1,o] * q[b,c2,o] -----
    sim = jnp.einsum('bco,bdo->bcd', k, q,
                     preferred_element_type=jnp.float32)          # (bt, C, C)

    # softmax(rowmax(sim) - sim)  ==  exp(rowmin(sim) - sim) / rowsum
    e = jnp.exp(jnp.min(sim, axis=-1, keepdims=True) - sim)
    inv = pl.reciprocal(jnp.sum(e, axis=-1, keepdims=True), approx=False)
    aff = e * (alpha_ref[0] * inv)   # alpha folded into the softmax scale

    wv = wv_ref[...]                 # (C, C), BN3 scale pre-folded
    t3 = t3_ref[...]                 # (C, 1)

    # ---- value conv + attention + residual, one (C, N) slab per batch -------
    # N = 512 lanes -> unmasked, lane-dense stores.  bt is small: static unroll.
    for b in range(bt):
        x_b = x_ref[b]                                            # (C, N)
        v_b = jnp.maximum(
            jnp.dot(wv, x_b, preferred_element_type=jnp.float32) + t3, 0.0)
        o_ref[b] = (jnp.dot(aff[b], v_b, preferred_element_type=jnp.float32)
                    + x_b).astype(o_ref.dtype)


def caa_forward(x, alpha, wq, wk, wv, s1, t1, s2, t2, s3, t3, *, batch_tile=None):
    B, C, N = x.shape
    Q = wq.shape[0]                      # N // 8

    if batch_tile is None:
        batch_tile = max(d for d in range(1, min(B, 8) + 1) if B % d == 0)
    bt = batch_tile
    assert B % bt == 0, "batch_tile must divide the batch size"

    # ---- host-side folding ---------------------------------------------------
    w_qk = jnp.concatenate([s1 * wq, s2 * wk], axis=0)            # (2Q, N)
    t_qk = jnp.concatenate([t1, t2], axis=0).reshape(1, 2 * Q)    # (1, 2Q)
    wv_f = s3 * wv                                                # (C, C)
    alpha_s = jnp.asarray(alpha, jnp.float32).reshape(1)          # SMEM scalar

    const2 = lambda b: (0, 0)
    grid_spec = pltpu.PrefetchScalarGridSpec(
        num_scalar_prefetch=0,
        grid=(B // bt,),
        in_specs=[
            pl.BlockSpec(memory_space=pltpu.MemorySpace.SMEM),    # alpha (scalar)
            pl.BlockSpec((bt, C, N), lambda b: (b, 0, 0)),        # x slab
            pl.BlockSpec((2 * Q, N), const2),                     # fused Wq|Wk (scaled)
            pl.BlockSpec((C, C), const2),                         # Wv (scaled)
            pl.BlockSpec((1, 2 * Q), const2),                     # fused BN1|BN2 shifts
            pl.BlockSpec((C, 1), const2),                         # BN3 shift
        ],
        out_specs=pl.BlockSpec((bt, C, N), lambda b: (b, 0, 0)),
    )
    return pl.pallas_call(
        caa_kernel,
        out_shape=jax.ShapeDtypeStruct((B, C, N), x.dtype),
        grid_spec=grid_spec,
        compiler_params=pltpu.CompilerParams(
            dimension_semantics=("parallel",),     # lets v7x split batches over 2 TCs
            vmem_limit_bytes=32 * 1024 * 1024,     # raise v5e's 16 MiB default, safe on v7x
        ),
    )(alpha_s, x, w_qk, wv_f, t_qk, t3)


def caa_reference(x, alpha, wq, wk, wv, s1, t1, s2, t2, s3, t3):
    """Pure-JAX mirror of the PyTorch forward (inference-mode BN)."""
    q = jnp.maximum(jnp.einsum('on,bcn->boc', wq, x) * s1[None] + t1[None], 0.0)
    k = jnp.maximum(jnp.einsum('on,bcn->boc', wk, x) * s2[None] + t2[None], 0.0)
    sim = jnp.einsum('boc,bod->bcd', k, q)
    aff = jnp.max(sim, axis=-1, keepdims=True) - sim
    aff = jax.nn.softmax(aff, axis=-1)
    v = jnp.maximum(jnp.einsum('cd,bdn->bcn', wv, x) * s3[None] + t3[None], 0.0)
    a = jnp.asarray(alpha).reshape(())
    return a * jnp.einsum('bcd,bdn->bcn', aff, v) + x


def fold_bn(gamma, beta, mean, var, eps=1e-5):
    scale = gamma / jnp.sqrt(var + eps)
    shift = beta - mean * scale
    return scale[:, None].astype(jnp.float32), shift[:, None].astype(jnp.float32)


if __name__ == "__main__":
    # Module hard-codes point_num = 512 (N must equal 512); C = in_dim kept small.
    B, C, N = 8, 64, 512
    Q = N // 8

    key = jax.random.PRNGKey(0)
    kx, kq, kk, kv, kg1, kb1, kg2, kb2, kg3, kb3 = jax.random.split(key, 10)

    x = jax.random.normal(kx, (B, C, N), dtype=jnp.float32)

    # Conv1d(k=1, bias=False) weights
    wq = jax.random.normal(kq, (Q, N), dtype=jnp.float32) * 0.05
    wk = jax.random.normal(kk, (Q, N), dtype=jnp.float32) * 0.05
    wv = jax.random.normal(kv, (C, C), dtype=jnp.float32) * 0.05

    # BatchNorm params (inference form, deterministic synthetic stats)
    def bn_params(kg, kb, n):
        gamma = 1.0 + 0.1 * jax.random.normal(kg, (n,), dtype=jnp.float32)
        beta = 0.1 * jax.random.normal(kb, (n,), dtype=jnp.float32)
        mean = jnp.zeros((n,), jnp.float32)
        var = jnp.ones((n,), jnp.float32)
        return fold_bn(gamma, beta, mean, var)

    s1, t1 = bn_params(kg1, kb1, Q)
    s2, t2 = bn_params(kg2, kb2, Q)
    s3, t3 = bn_params(kg3, kb3, C)

    # nn.Parameter(torch.zeros(1)) — nonzero here so the attention path is exercised.
    alpha = jnp.full((1,), 0.5, dtype=jnp.float32)

    out = caa_forward(x, alpha, wq, wk, wv, s1, t1, s2, t2, s3, t3, batch_tile=4)
    out = jax.block_until_ready(out)

    ref = caa_reference(x, alpha, wq, wk, wv, s1, t1, s2, t2, s3, t3)
    assert out.shape == (B, C, N)
    assert jnp.allclose(out, ref, rtol=1e-3, atol=1e-3), "mismatch vs reference"

    print("KERNEL_OK")
</pallas_src>

<mosaic_0001>
module attributes {stable_mosaic.version = 11 : i64} {
  func.func @caa_kernel(%arg0: i32, %arg1: memref<1xf32, #tpu.memory_space<smem>>, %arg2: memref<4x64x512xf32, #tpu.memory_space<vmem>>, %arg3: memref<128x512xf32, #tpu.memory_space<vmem>>, %arg4: memref<64x64xf32, #tpu.memory_space<vmem>>, %arg5: memref<1x128xf32, #tpu.memory_space<vmem>>, %arg6: memref<64x1xf32, #tpu.memory_space<vmem>>, %arg7: memref<4x64x512xf32, #tpu.memory_space<vmem>>) attributes {dimension_semantics = [#tpu.dimension_semantics<parallel>], iteration_bounds = array<i64: 2>, scalar_prefetch = 0 : i64, scratch_operands = 0 : i64, tpu.core_type = #tpu.core_type<tc>, window_params = [{transform_indices = @transform_0, window_bounds = array<i64: 1>}, {transform_indices = @transform_1, window_bounds = array<i64: 4, 64, 512>}, {pipeline_mode = #tpu.pipeline_mode<synchronous>, transform_indices = @transform_2, window_bounds = array<i64: 128, 512>}, {pipeline_mode = #tpu.pipeline_mode<synchronous>, transform_indices = @transform_3, window_bounds = array<i64: 64, 64>}, {pipeline_mode = #tpu.pipeline_mode<synchronous>, transform_indices = @transform_4, window_bounds = array<i64: 1, 128>}, {pipeline_mode = #tpu.pipeline_mode<synchronous>, transform_indices = @transform_5, window_bounds = array<i64: 64, 1>}, {transform_indices = @transform_6, window_bounds = array<i64: 4, 64, 512>}]} {
    %c0 = arith.constant 0 : index
    %c0_0 = arith.constant 0 : index
    %c0_1 = arith.constant 0 : index
    %0 = vector.load %arg2[%c0, %c0_0, %c0_1] : memref<4x64x512xf32, #tpu.memory_space<vmem>>, vector<4x64x512xf32>
    %1 = vector.shape_cast %0 : vector<4x64x512xf32> to vector<256x512xf32>
    %c0_2 = arith.constant 0 : index
    %c0_3 = arith.constant 0 : index
    %2 = vector.load %arg3[%c0_2, %c0_3] : memref<128x512xf32, #tpu.memory_space<vmem>>, vector<128x512xf32>
    %cst = arith.constant dense<0.000000e+00> : vector<256x128xf32>
    %3 = tpu.matmul %1, %2, %cst {dimension_numbers = #tpu.dot_dimension_numbers<[1], [1], [0], [0], [0, 0, 1, 0], [], []>} : vector<256x512xf32>, vector<128x512xf32>, vector<256x128xf32> -> vector<256x128xf32>
    %c0_4 = arith.constant 0 : index
    %c0_5 = arith.constant 0 : index
    %4 = vector.load %arg5[%c0_4, %c0_5] : memref<1x128xf32, #tpu.memory_space<vmem>>, vector<1x128xf32>
    %5 = vector.broadcast %4 : vector<1x128xf32> to vector<256x128xf32>
    %6 = arith.addf %3, %5 : vector<256x128xf32>
    %cst_6 = arith.constant 0.000000e+00 : f32
    %7 = vector.broadcast %cst_6 : f32 to vector<256x128xf32>
    %8 = arith.maximumf %6, %7 : vector<256x128xf32>
    %9 = vector.shape_cast %8 : vector<256x128xf32> to vector<4x64x128xf32>
    %10 = vector.extract_strided_slice %9 {offsets = [0, 0, 0], sizes = [4, 64, 64], strides = [1, 1, 1]} : vector<4x64x128xf32> to vector<4x64x64xf32>
    %11 = vector.extract_strided_slice %9 {offsets = [0, 0, 64], sizes = [4, 64, 64], strides = [1, 1, 1]} : vector<4x64x128xf32> to vector<4x64x64xf32>
    "tpu.trace_start"() <{level = 10 : i32, message = "bco,bdo->bcd"}> : () -> ()
    %cst_7 = arith.constant dense<0.000000e+00> : vector<4x64x64xf32>
    %12 = tpu.matmul %11, %10, %cst_7 {dimension_numbers = #tpu.dot_dimension_numbers<[2], [2], [1], [1], [0, 0, 0, 1, 1, 1], [0], [0]>} : vector<4x64x64xf32>, vector<4x64x64xf32>, vector<4x64x64xf32> -> vector<4x64x64xf32>
    "tpu.trace_stop"() : () -> ()
    %cst_8 = arith.constant dense<0x7F800000> : vector<4x64xf32>
    %13 = vector.multi_reduction <minimumf>, %12, %cst_8 [2] : vector<4x64x64xf32> to vector<4x64xf32>
    %14 = vector.shape_cast %13 : vector<4x64xf32> to vector<4x64x1xf32>
    %15 = vector.broadcast %14 : vector<4x64x1xf32> to vector<4x64x64xf32>
    %16 = arith.subf %15, %12 : vector<4x64x64xf32>
    %17 = math.exp %16 : vector<4x64x64xf32>
    %cst_9 = arith.constant dense<0.000000e+00> : vector<4x64xf32>
    %18 = vector.multi_reduction <add>, %17, %cst_9 [2] : vector<4x64x64xf32> to vector<4x64xf32>
    %19 = vector.shape_cast %18 : vector<4x64xf32> to vector<4x64x1xf32>
    %20 = tpu.reciprocal %19 : vector<4x64x1xf32> -> vector<4x64x1xf32>
    %c0_10 = arith.constant 0 : index
    %21 = memref.load %arg1[%c0_10] : memref<1xf32, #tpu.memory_space<smem>>
    %22 = vector.broadcast %21 : f32 to vector<4x64x1xf32>
    %23 = arith.mulf %22, %20 : vector<4x64x1xf32>
    %24 = vector.broadcast %23 : vector<4x64x1xf32> to vector<4x64x64xf32>
    %25 = arith.mulf %17, %24 : vector<4x64x64xf32>
    %c0_11 = arith.constant 0 : index
    %c0_12 = arith.constant 0 : index
    %26 = vector.load %arg4[%c0_11, %c0_12] : memref<64x64xf32, #tpu.memory_space<vmem>>, vector<64x64xf32>
    %c0_13 = arith.constant 0 : index
    %c0_14 = arith.constant 0 : index
    %27 = vector.load %arg6[%c0_13, %c0_14] : memref<64x1xf32, #tpu.memory_space<vmem>>, vector<64x1xf32>
    %c0_15 = arith.constant 0 : index
    %c0_16 = arith.constant 0 : index
    %c0_17 = arith.constant 0 : index
    %28 = vector.load %arg2[%c0_15, %c0_16, %c0_17] : memref<4x64x512xf32, #tpu.memory_space<vmem>>, vector<1x64x512xf32>
    %29 = vector.shape_cast %28 : vector<1x64x512xf32> to vector<64x512xf32>
    %cst_18 = arith.constant dense<0.000000e+00> : vector<64x512xf32>
    %30 = tpu.matmul %26, %29, %cst_18 {dimension_numbers = #tpu.dot_dimension_numbers<[1], [0], [0], [1], [0, 0, 1, 1], [], []>} : vector<64x64xf32>, vector<64x512xf32>, vector<64x512xf32> -> vector<64x512xf32>
    %31 = vector.broadcast %27 : vector<64x1xf32> to vector<64x512xf32>
    %32 = arith.addf %30, %31 : vector<64x512xf32>
    %cst_19 = arith.constant 0.000000e+00 : f32
    %33 = vector.broadcast %cst_19 : f32 to vector<64x512xf32>
    %34 = arith.maximumf %32, %33 : vector<64x512xf32>
    %35 = vector.extract_strided_slice %25 {offsets = [0, 0, 0], sizes = [1, 64, 64], strides = [1, 1, 1]} : vector<4x64x64xf32> to vector<1x64x64xf32>
    %36 = vector.shape_cast %35 : vector<1x64x64xf32> to vector<64x64xf32>
    %cst_20 = arith.constant dense<0.000000e+00> : vector<64x512xf32>
    %37 = tpu.matmul %36, %34, %cst_20 {dimension_numbers = #tpu.dot_dimension_numbers<[1], [0], [0], [1], [0, 0, 1, 1], [], []>} : vector<64x64xf32>, vector<64x512xf32>, vector<64x512xf32> -> vector<64x512xf32>
    %38 = arith.addf %37, %29 : vector<64x512xf32>
    %c0_21 = arith.constant 0 : index
    %c0_22 = arith.constant 0 : index
    %c0_23 = arith.constant 0 : index
    %39 = vector.load %arg7[%c0_21, %c0_22, %c0_23] : memref<4x64x512xf32, #tpu.memory_space<vmem>>, vector<1x64x512xf32>
    %40 = vector.shape_cast %39 : vector<1x64x512xf32> to vector<64x512xf32>
    %41 = vector.shape_cast %38 : vector<64x512xf32> to vector<1x64x512xf32>
    tpu.vector_store %arg7[%c0_21, %c0_22, %c0_23], %41 {strides = array<i32>} : memref<4x64x512xf32, #tpu.memory_space<vmem>>, vector<1x64x512xf32>,
    %c1 = arith.constant 1 : index
    %c0_24 = arith.constant 0 : index
    %c0_25 = arith.constant 0 : index
    %42 = vector.load %arg2[%c1, %c0_24, %c0_25] : memref<4x64x512xf32, #tpu.memory_space<vmem>>, vector<1x64x512xf32>
    %43 = vector.shape_cast %42 : vector<1x64x512xf32> to vector<64x512xf32>
    %cst_26 = arith.constant dense<0.000000e+00> : vector<64x512xf32>
    %44 = tpu.matmul %26, %43, %cst_26 {dimension_numbers = #tpu.dot_dimension_numbers<[1], [0], [0], [1], [0, 0, 1, 1], [], []>} : vector<64x64xf32>, vector<64x512xf32>, vector<64x512xf32> -> vector<64x512xf32>
    %45 = vector.broadcast %27 : vector<64x1xf32> to vector<64x512xf32>
    %46 = arith.addf %44, %45 : vector<64x512xf32>
    %cst_27 = arith.constant 0.000000e+00 : f32
    %47 = vector.broadcast %cst_27 : f32 to vector<64x512xf32>
    %48 = arith.maximumf %46, %47 : vector<64x512xf32>
    %49 = vector.extract_strided_slice %25 {offsets = [1, 0, 0], sizes = [1, 64, 64], strides = [1, 1, 1]} : vector<4x64x64xf32> to vector<1x64x64xf32>
    %50 = vector.shape_cast %49 : vector<1x64x64xf32> to vector<64x64xf32>
    %cst_28 = arith.constant dense<0.000000e+00> : vector<64x512xf32>
    %51 = tpu.matmul %50, %48, %cst_28 {dimension_numbers = #tpu.dot_dimension_numbers<[1], [0], [0], [1], [0, 0, 1, 1], [], []>} : vector<64x64xf32>, vector<64x512xf32>, vector<64x512xf32> -> vector<64x512xf32>
    %52 = arith.addf %51, %43 : vector<64x512xf32>
    %c1_29 = arith.constant 1 : index
    %c0_30 = arith.constant 0 : index
    %c0_31 = arith.constant 0 : index
    %53 = vector.load %arg7[%c1_29, %c0_30, %c0_31] : memref<4x64x512xf32, #tpu.memory_space<vmem>>, vector<1x64x512xf32>
    %54 = vector.shape_cast %53 : vector<1x64x512xf32> to vector<64x512xf32>
    %55 = vector.shape_cast %52 : vector<64x512xf32> to vector<1x64x512xf32>
    tpu.vector_store %arg7[%c1_29, %c0_30, %c0_31], %55 {strides = array<i32>} : memref<4x64x512xf32, #tpu.memory_space<vmem>>, vector<1x64x512xf32>,
    %c2 = arith.constant 2 : index
    %c0_32 = arith.constant 0 : index
    %c0_33 = arith.constant 0 : index
    %56 = vector.load %arg2[%c2, %c0_32, %c0_33] : memref<4x64x512xf32, #tpu.memory_space<vmem>>, vector<1x64x512xf32>
    %57 = vector.shape_cast %56 : vector<1x64x512xf32> to vector<64x512xf32>
    %cst_34 = arith.constant dense<0.000000e+00> : vector<64x512xf32>
    %58 = tpu.matmul %26, %57, %cst_34 {dimension_numbers = #tpu.dot_dimension_numbers<[1], [0], [0], [1], [0, 0, 1, 1], [], []>} : vector<64x64xf32>, vector<64x512xf32>, vector<64x512xf32> -> vector<64x512xf32>
    %59 = vector.broadcast %27 : vector<64x1xf32> to vector<64x512xf32>
    %60 = arith.addf %58, %59 : vector<64x512xf32>
    %cst_35 = arith.constant 0.000000e+00 : f32
    %61 = vector.broadcast %cst_35 : f32 to vector<64x512xf32>
    %62 = arith.maximumf %60, %61 : vector<64x512xf32>
    %63 = vector.extract_strided_slice %25 {offsets = [2, 0, 0], sizes = [1, 64, 64], strides = [1, 1, 1]} : vector<4x64x64xf32> to vector<1x64x64xf32>
    %64 = vector.shape_cast %63 : vector<1x64x64xf32> to vector<64x64xf32>
    %cst_36 = arith.constant dense<0.000000e+00> : vector<64x512xf32>
    %65 = tpu.matmul %64, %62, %cst_36 {dimension_numbers = #tpu.dot_dimension_numbers<[1], [0], [0], [1], [0, 0, 1, 1], [], []>} : vector<64x64xf32>, vector<64x512xf32>, vector<64x512xf32> -> vector<64x512xf32>
    %66 = arith.addf %65, %57 : vector<64x512xf32>
    %c2_37 = arith.constant 2 : index
    %c0_38 = arith.constant 0 : index
    %c0_39 = arith.constant 0 : index
    %67 = vector.load %arg7[%c2_37, %c0_38, %c0_39] : memref<4x64x512xf32, #tpu.memory_space<vmem>>, vector<1x64x512xf32>
    %68 = vector.shape_cast %67 : vector<1x64x512xf32> to vector<64x512xf32>
    %69 = vector.shape_cast %66 : vector<64x512xf32> to vector<1x64x512xf32>
    tpu.vector_store %arg7[%c2_37, %c0_38, %c0_39], %69 {strides = array<i32>} : memref<4x64x512xf32, #tpu.memory_space<vmem>>, vector<1x64x512xf32>,
    %c3 = arith.constant 3 : index
    %c0_40 = arith.constant 0 : index
    %c0_41 = arith.constant 0 : index
    %70 = vector.load %arg2[%c3, %c0_40, %c0_41] : memref<4x64x512xf32, #tpu.memory_space<vmem>>, vector<1x64x512xf32>
    %71 = vector.shape_cast %70 : vector<1x64x512xf32> to vector<64x512xf32>
    %cst_42 = arith.constant dense<0.000000e+00> : vector<64x512xf32>
    %72 = tpu.matmul %26, %71, %cst_42 {dimension_numbers = #tpu.dot_dimension_numbers<[1], [0], [0], [1], [0, 0, 1, 1], [], []>} : vector<64x64xf32>, vector<64x512xf32>, vector<64x512xf32> -> vector<64x512xf32>
    %73 = vector.broadcast %27 : vector<64x1xf32> to vector<64x512xf32>
    %74 = arith.addf %72, %73 : vector<64x512xf32>
    %cst_43 = arith.constant 0.000000e+00 : f32
    %75 = vector.broadcast %cst_43 : f32 to vector<64x512xf32>
    %76 = arith.maximumf %74, %75 : vector<64x512xf32>
    %77 = vector.extract_strided_slice %25 {offsets = [3, 0, 0], sizes = [1, 64, 64], strides = [1, 1, 1]} : vector<4x64x64xf32> to vector<1x64x64xf32>
    %78 = vector.shape_cast %77 : vector<1x64x64xf32> to vector<64x64xf32>
    %cst_44 = arith.constant dense<0.000000e+00> : vector<64x512xf32>
    %79 = tpu.matmul %78, %76, %cst_44 {dimension_numbers = #tpu.dot_dimension_numbers<[1], [0], [0], [1], [0, 0, 1, 1], [], []>} : vector<64x64xf32>, vector<64x512xf32>, vector<64x512xf32> -> vector<64x512xf32>
    %80 = arith.addf %79, %71 : vector<64x512xf32>
    %c3_45 = arith.constant 3 : index
    %c0_46 = arith.constant 0 : index
    %c0_47 = arith.constant 0 : index
    %81 = vector.load %arg7[%c3_45, %c0_46, %c0_47] : memref<4x64x512xf32, #tpu.memory_space<vmem>>, vector<1x64x512xf32>
    %82 = vector.shape_cast %81 : vector<1x64x512xf32> to vector<64x512xf32>
    %83 = vector.shape_cast %80 : vector<64x512xf32> to vector<1x64x512xf32>
    tpu.vector_store %arg7[%c3_45, %c0_46, %c0_47], %83 {strides = array<i32>} : memref<4x64x512xf32, #tpu.memory_space<vmem>>, vector<1x64x512xf32>,
    return
  }
  func.func @transform_0(%arg0: i32) -> i32 {
    %c0_i32 = arith.constant 0 : i32
    %c0_i32_0 = arith.constant 0 : i32
    return %c0_i32 : i32
  }
  func.func @transform_1(%arg0: i32) -> (i32, i32, i32) {
    %c0_i32 = arith.constant 0 : i32
    %c0_i32_0 = arith.constant 0 : i32
    %c0_i32_1 = arith.constant 0 : i32
    return %arg0, %c0_i32, %c0_i32_0 : i32, i32, i32
  }
  func.func @transform_2(%arg0: i32) -> (i32, i32) {
    %c0_i32 = arith.constant 0 : i32
    %c0_i32_0 = arith.constant 0 : i32
    %c0_i32_1 = arith.constant 0 : i32
    return %c0_i32, %c0_i32_0 : i32, i32
  }
  func.func @transform_3(%arg0: i32) -> (i32, i32) {
    %c0_i32 = arith.constant 0 : i32
    %c0_i32_0 = arith.constant 0 : i32
    %c0_i32_1 = arith.constant 0 : i32
    return %c0_i32, %c0_i32_0 : i32, i32
  }
  func.func @transform_4(%arg0: i32) -> (i32, i32) {
    %c0_i32 = arith.constant 0 : i32
    %c0_i32_0 = arith.constant 0 : i32
    %c0_i32_1 = arith.constant 0 : i32
    return %c0_i32, %c0_i32_0 : i32, i32
  }
  func.func @transform_5(%arg0: i32) -> (i32, i32) {
    %c0_i32 = arith.constant 0 : i32
    %c0_i32_0 = arith.constant 0 : i32
    %c0_i32_1 = arith.constant 0 : i32
    return %c0_i32, %c0_i32_0 : i32, i32
  }
  func.func @transform_6(%arg0: i32) -> (i32, i32, i32) {
    %c0_i32 = arith.constant 0 : i32
    %c0_i32_0 = arith.constant 0 : i32
    %c0_i32_1 = arith.constant 0 : i32
    return %arg0, %c0_i32, %c0_i32_0 : i32, i32, i32
  }
}

</mosaic_0001>

<llo_original>
// kernel: tpu_custom_call.1
$region0: #{tpu_custom_call.1}
  #allocation0 [shape = 'u32[]', space=smem, size = 0x4, offset = 0x4, fixed_abs, tag = 'smem constant byte address 0x4 - core index']
  #allocation1 [shape = 'u32[72,128]{1,0:T(1,128)}', space=vmem, size = 0x9000, scoped, tag = 'internal scratch']
  #allocation2 [shape = 'f32[1]{0:T(128)S(6)}', space=smem, size = 0x200, scoped, tag = 'scoped memory for tpu_custom_call.1']
  %s0 = inlined_call_operand.<no memory space> [shape: f32[1], index: 0, kind: input, shape index: {}]
  %s1 = inlined_call_operand.hbm [shape: f32[8,64,512], index: 1, kind: input, shape index: {}]
  %s2 = inlined_call_operand.hbm [shape: f32[128,512], index: 2, kind: input, shape index: {}]
  %s3 = inlined_call_operand.vmem [shape: f32[64,64], index: 3, kind: input, shape index: {}]
  %s4 = inlined_call_operand.vmem [shape: f32[1,128], index: 4, kind: input, shape index: {}]
  %s5 = inlined_call_operand.vmem [shape: f32[64,1], index: 5, kind: input, shape index: {}]
  %s6 = inlined_call_operand.hbm [shape: f32[8,64,512], index: 6, kind: output, shape index: {}]
  %s7 = sld [smem:[#allocation0]]
  $region65: #{tpu_custom_call.1} parent=0
    _
  %s9 = ssub.s32 1, %s7
  %s10 = scalar_select 0, %s9, %s7
  %11 = sst [smem:[#allocation2]] %s0
  $region1: #{tpu_custom_call.1} parent=0
    #allocation3 [shape = 'u8[1048576]{0}', space=vmem, size = 0x100000, scoped, tag = 'input window, operand 1']
    #allocation4 [shape = 's32[2]{0}', space=sflag, size = 0x8, scoped, tag = 'scoped memory for tpu_custom_call.1']
    #allocation5 [shape = 's32[2]{0}', space=sflag, size = 0x8, scoped, tag = 'scoped memory for tpu_custom_call.1']
    #allocation6 [shape = 'u8[262144]{0}', space=vmem, size = 0x40000, scoped, tag = 'input window, operand 2, single buffered']
    #allocation7 [shape = 's32[1]{0}', space=sflag, size = 0x4, scoped, tag = 'scoped memory for tpu_custom_call.1']
    #allocation8 [shape = 'u8[1048576]{0}', space=vmem, size = 0x100000, scoped, tag = 'output window, operand 0']
    %12 = vsyncpa [#allocation4], 0
    %s13 = scalar_lea.sflag [#allocation4], 1
    %14 = vsyncpa %s13, 0
    %15 = vsyncpa [#allocation7], 0
    %16 = vsyncpa [#allocation5], 0
    %s17 = scalar_lea.sflag [#allocation5], 1
    %18 = vsyncpa %s17, 0
    loop: start=0, step=1, limit=4
    $region2: #{tpu_custom_call.1} parent=1 // loop_pre_header
      _
    $region3: #{tpu_custom_call.1} parent=1 // loop_header
      %s20 = sphi 0, %s24
      %p21 = scmp.ge.s32.totalorder %s20, 4
      %s28 = sphi 0, %s28
      %s30 = sphi 0, %s28
      %s31 = sphi 0, %s30
      %s45 = sphi 0, %s31
      %s51 = sphi 0, %s53
      %s54 = sphi 0, %s51
      %s55 = sphi 0, %s54
      %s71 = sphi 0, %s55
      %s75 = sphi 0, %s75
      %s77 = sphi 0, %s75
      %s78 = sphi 0, %s77
      %s92 = sphi 0, %s78
      %s96 = sphi 0, %s96
      %s98 = sphi 0, %s96
      %s99 = sphi 0, %s98
      %s113 = sphi 0, %s99
      %s117 = sphi 0, %s117
      %s119 = sphi 0, %s117
      %s120 = sphi 0, %s119
      %s134 = sphi 0, %s120
      %s138 = sphi 0, %s138
      %s140 = sphi 0, %s138
      %s141 = sphi 0, %s140
      %s155 = sphi 0, %s141
      %s161 = sphi 0, %s163
      %s164 = sphi 0, %s161
      %s165 = sphi 0, %s164
      %s181 = sphi 0, %s165
    $region4: #{tpu_custom_call.1} parent=1 // loop_header_branch
      %23 = sbr.rel (%p21) target = $region8
    $region5: #{tpu_custom_call.1} parent=1 // loop_body
      %s25 = ssub.s32 %s20, 1
      %s26 = ssub.s32 %s20, 2
      %s27 = sadd.s32 %s20, 1
      %s29 = sadd.s32 %s28, 1
      %p32 = scmp.eq.s32.totalorder %s20, 1
      %p33 = scmp.ne.s32.totalorder %s28, %s30
      %p34 = scmp.eq.s32.totalorder %s20, 0
      %p35 = por %p33, %p34
      %p36 = scmp.ne.s32.totalorder %s28, %s30
      %p37 = scmp.eq.s32.totalorder %s25, 1
      %p38 = por %p36, %p37
      %p39 = scmp.ne.s32.totalorder %s30, %s31
      %p40 = scmp.eq.s32.totalorder %s25, 0
      %p41 = por %p39, %p40
      %p42 = scmp.ne.s32.totalorder %s30, %s31
      %p43 = scmp.eq.s32.totalorder %s26, 1
      %p44 = por %p42, %p43
      %p46 = scmp.ne.s32.totalorder %s31, %s45
      %p47 = scmp.eq.s32.totalorder %s26, 0
      %p48 = por %p46, %p47
      %s49 = ssub.s32 %s20, %s27
      %p50 = scmp.eq.s32.totalorder %s49, 0
      %s52 = sadd.s32 %s51, 1
      %s53 = scalar_select %p50, %s51, %s52
      %p56 = pneg %p50
      %p57 = scmp.eq.s32.totalorder %s20, 1
      %p58 = por %p56, %p57
      %p59 = scmp.ne.s32.totalorder %s51, %s54
      %p60 = scmp.eq.s32.totalorder %s20, 0
      %p61 = por %p59, %p60
      %p62 = scmp.ne.s32.totalorder %s51, %s54
      %p63 = scmp.eq.s32.totalorder %s25, 1
      %p64 = por %p62, %p63
      %p65 = scmp.ne.s32.totalorder %s54, %s55
      %p66 = scmp.eq.s32.totalorder %s25, 0
      %p67 = por %p65, %p66
      %p68 = scmp.ne.s32.totalorder %s54, %s55
      %p69 = scmp.eq.s32.totalorder %s26, 1
      %p70 = por %p68, %p69
      %p72 = scmp.ne.s32.totalorder %s55, %s71
      %p73 = scmp.eq.s32.totalorder %s26, 0
      %p74 = por %p72, %p73
      %s76 = sadd.s32 %s75, 1
      %p79 = scmp.eq.s32.totalorder %s20, 1
      %p80 = scmp.ne.s32.totalorder %s75, %s77
      %p81 = scmp.eq.s32.totalorder %s20, 0
      %p82 = por %p80, %p81
      %p83 = scmp.ne.s32.totalorder %s75, %s77
      %p84 = scmp.eq.s32.totalorder %s25, 1
      %p85 = por %p83, %p84
      %p86 = scmp.ne.s32.totalorder %s77, %s78
      %p87 = scmp.eq.s32.totalorder %s25, 0
      %p88 = por %p86, %p87
      %p89 = scmp.ne.s32.totalorder %s77, %s78
      %p90 = scmp.eq.s32.totalorder %s26, 1
      %p91 = por %p89, %p90
      %p93 = scmp.ne.s32.totalorder %s78, %s92
      %p94 = scmp.eq.s32.totalorder %s26, 0
      %p95 = por %p93, %p94
      %s97 = sadd.s32 %s96, 1
      %p100 = scmp.eq.s32.totalorder %s20, 1
      %p101 = scmp.ne.s32.totalorder %s96, %s98
      %p102 = scmp.eq.s32.totalorder %s20, 0
      %p103 = por %p101, %p102
      %p104 = scmp.ne.s32.totalorder %s96, %s98
      %p105 = scmp.eq.s32.totalorder %s25, 1
      %p106 = por %p104, %p105
      %p107 = scmp.ne.s32.totalorder %s98, %s99
      %p108 = scmp.eq.s32.totalorder %s25, 0
      %p109 = por %p107, %p108
      %p110 = scmp.ne.s32.totalorder %s98, %s99
      %p111 = scmp.eq.s32.totalorder %s26, 1
      %p112 = por %p110, %p111
      %p114 = scmp.ne.s32.totalorder %s99, %s113
      %p115 = scmp.eq.s32.totalorder %s26, 0
      %p116 = por %p114, %p115
      %s118 = sadd.s32 %s117, 1
      %p121 = scmp.eq.s32.totalorder %s20, 1
      %p122 = scmp.ne.s32.totalorder %s117, %s119
      %p123 = scmp.eq.s32.totalorder %s20, 0
      %p124 = por %p122, %p123
      %p125 = scmp.ne.s32.totalorder %s117, %s119
      %p126 = scmp.eq.s32.totalorder %s25, 1
      %p127 = por %p125, %p126
      %p128 = scmp.ne.s32.totalorder %s119, %s120
      %p129 = scmp.eq.s32.totalorder %s25, 0
      %p130 = por %p128, %p129
      %p131 = scmp.ne.s32.totalorder %s119, %s120
      %p132 = scmp.eq.s32.totalorder %s26, 1
      %p133 = por %p131, %p132
      %p135 = scmp.ne.s32.totalorder %s120, %s134
      %p136 = scmp.eq.s32.totalorder %s26, 0
      %p137 = por %p135, %p136
      %s139 = sadd.s32 %s138, 1
      %p142 = scmp.eq.s32.totalorder %s20, 1
      %p143 = scmp.ne.s32.totalorder %s138, %s140
      %p144 = scmp.eq.s32.totalorder %s20, 0
      %p145 = por %p143, %p144
      %p146 = scmp.ne.s32.totalorder %s138, %s140
      %p147 = scmp.eq.s32.totalorder %s25, 1
      %p148 = por %p146, %p147
      %p149 = scmp.ne.s32.totalorder %s140, %s141
      %p150 = scmp.eq.s32.totalorder %s25, 0
      %p151 = por %p149, %p150
      %p152 = scmp.ne.s32.totalorder %s140, %s141
      %p153 = scmp.eq.s32.totalorder %s26, 1
      %p154 = por %p152, %p153
      %p156 = scmp.ne.s32.totalorder %s141, %s155
      %p157 = scmp.eq.s32.totalorder %s26, 0
      %p158 = por %p156, %p157
      %s159 = ssub.s32 %s20, %s27
      %p160 = scmp.eq.s32.totalorder %s159, 0
      %s162 = sadd.s32 %s161, 1
      %s163 = scalar_select %p160, %s161, %s162
      %p166 = pneg %p160
      %p167 = scmp.eq.s32.totalorder %s20, 1
      %p168 = por %p166, %p167
      %p169 = scmp.ne.s32.totalorder %s161, %s164
      %p170 = scmp.eq.s32.totalorder %s20, 0
      %p171 = por %p169, %p170
      %p172 = scmp.ne.s32.totalorder %s161, %s164
      %p173 = scmp.eq.s32.totalorder %s25, 1
      %p174 = por %p172, %p173
      %p175 = scmp.ne.s32.totalorder %s164, %s165
      %p176 = scmp.eq.s32.totalorder %s25, 0
      %p177 = por %p175, %p176
      %p178 = scmp.ne.s32.totalorder %s164, %s165
      %p179 = scmp.eq.s32.totalorder %s26, 1
      %p180 = por %p178, %p179
      %p182 = scmp.ne.s32.totalorder %s165, %s181
      %p183 = scmp.eq.s32.totalorder %s26, 0
      %p184 = por %p182, %p183
      %p185 = scmp.le.s32.totalorder 1, %s20
      %p186 = scmp.lt.s32.totalorder %s20, 3
      %p187 = pnand %p185, %p186
      %p188 = pneg %p187
      // Predicated region
      $region9: #{tpu_custom_call.1} parent=5 // pred_check
        _
      $region10: #{tpu_custom_call.1} parent=5 // pred_check_branch
        %190 = sbr.rel (%p187) target = $region12
      $region11: #{tpu_custom_call.1} parent=5 // pred_region
        %s191 = ssub.s32 %s20, 1
        // Predicated region
        $region13: #{tpu_custom_call.1} parent=11 // pred_check
          %p192 = pneg %p41
        $region14: #{tpu_custom_call.1} parent=11 // pred_check_branch
          %194 = sbr.rel (%p192) target = $region16
        $region15: #{tpu_custom_call.1} parent=11 // pred_region
          _
        $region16: #{tpu_custom_call.1} parent=11 // pred_fallthru
          _
        // Predicated region
        $region17: #{tpu_custom_call.1} parent=11 // pred_check
          %p195 = pneg %p88
        $region18: #{tpu_custom_call.1} parent=11 // pred_check_branch
          %197 = sbr.rel (%p195) target = $region20
        $region19: #{tpu_custom_call.1} parent=11 // pred_region
          %199 = vsyncadd [#allocation7], 0
          %s200 = sshll.u32 %s2, 4
          %s201 = int_to_ptr.hbm [resolvable:$true] %s200
          %s202 = sshll.u32 [#allocation6], 4
          %s203 = int_to_ptr.vmem [resolvable:$true] %s202
          %208 = dma.hbm_to_vmem [thread:$0]  %s201, 8192, %s203, [#allocation7], 512, 512, 32
        $region20: #{tpu_custom_call.1} parent=11 // pred_fallthru
          _
        // Predicated region
        $region21: #{tpu_custom_call.1} parent=11 // pred_check
          %p209 = pneg %p109
        $region22: #{tpu_custom_call.1} parent=11 // pred_check_branch
          %211 = sbr.rel (%p209) target = $region24
        $region23: #{tpu_custom_call.1} parent=11 // pred_region
          _
        $region24: #{tpu_custom_call.1} parent=11 // pred_fallthru
          _
        // Predicated region
        $region25: #{tpu_custom_call.1} parent=11 // pred_check
          %p212 = pneg %p130
        $region26: #{tpu_custom_call.1} parent=11 // pred_check_branch
          %214 = sbr.rel (%p212) target = $region28
        $region27: #{tpu_custom_call.1} parent=11 // pred_region
          _
        $region28: #{tpu_custom_call.1} parent=11 // pred_fallthru
          _
        // Predicated region
        $region29: #{tpu_custom_call.1} parent=11 // pred_check
          %p215 = pneg %p151
        $region30: #{tpu_custom_call.1} parent=11 // pred_check_branch
          %217 = sbr.rel (%p215) target = $region32
        $region31: #{tpu_custom_call.1} parent=11 // pred_region
          _
        $region32: #{tpu_custom_call.1} parent=11 // pred_fallthru
          _
      $region12: #{tpu_custom_call.1} parent=5 // pred_fallthru
        _
      %p218 = scmp.lt.s32.totalorder %s20, 2
      // Predicated region
      $region33: #{tpu_custom_call.1} parent=5 // pred_check
        %p219 = pneg %p218
      $region34: #{tpu_custom_call.1} parent=5 // pred_check_branch
        %221 = sbr.rel (%p219) target = $region36
      $region35: #{tpu_custom_call.1} parent=5 // pred_region
        // Predicated region
        $region37: #{tpu_custom_call.1} parent=35 // pred_check
          %p222 = pneg %p61
        $region38: #{tpu_custom_call.1} parent=35 // pred_check_branch
          %224 = sbr.rel (%p222) target = $region40
        $region39: #{tpu_custom_call.1} parent=35 // pred_region
          %s225 = sand.u32 %s51, 1
          %s226 = scalar_lea.sflag [#allocation4], %s225
          %s227 = sand.u32 %s51, 1
          %s228 = smul.addr %s227, 1024
          %s229 = scalar_lea.vmem [#allocation3], %s228
          %s230 = smul.u32 4, %s20
          %232 = vsyncadd %s226, 0
          %s233 = smul.addr %s230, 32
          %s234 = smul.addr %s233, 8
          %s235 = scalar_lea.hbm %s1, %s234
          %s236 = sshll.u32 %s235, 4
          %s237 = int_to_ptr.hbm [resolvable:$true] %s236
          %s238 = sshll.u32 %s229, 4
          %s239 = int_to_ptr.vmem [resolvable:$true] %s238
          %244 = dma.hbm_to_vmem [thread:$0]  %s237, 16384, %s239, %s226, 512, 512, 32
        $region40: #{tpu_custom_call.1} parent=35 // pred_fallthru
          _
      $region36: #{tpu_custom_call.1} parent=5 // pred_fallthru
        _
      %p245 = scmp.le.s32.totalorder 1, %s20
      %p246 = scmp.lt.s32.totalorder %s20, 3
      %p247 = pnand %p245, %p246
      %p248 = pneg %p247
      // Predicated region
      $region41: #{tpu_custom_call.1} parent=5 // pred_check
        _
      $region42: #{tpu_custom_call.1} parent=5 // pred_check_branch
        %250 = sbr.rel (%p247) target = $region44
      $region43: #{tpu_custom_call.1} parent=5 // pred_region
        %s251 = ssub.s32 %s20, 1
        %s252 = sand.u32 %s54, 1
        %s253 = scalar_lea.sflag [#allocation4], %s252
        %s254 = sand.u32 %s54, 1
        %s255 = smul.addr %s254, 1024
        %s256 = scalar_lea.vmem [#allocation3], %s255
        // Predicated region
        $region45: #{tpu_custom_call.1} parent=43 // pred_check
          %p257 = pneg %p67
        $region46: #{tpu_custom_call.1} parent=43 // pred_check_branch
          %259 = sbr.rel (%p257) target = $region48
        $region47: #{tpu_custom_call.1} parent=43 // pred_region
          %261 = dma.done %s253, 16384
        $region48: #{tpu_custom_call.1} parent=43 // pred_fallthru
          _
        // Predicated region
        $region49: #{tpu_custom_call.1} parent=43 // pred_check
          %p262 = pneg %p88
        $region50: #{tpu_custom_call.1} parent=43 // pred_check_branch
          %264 = sbr.rel (%p262) target = $region52
        $region51: #{tpu_custom_call.1} parent=43 // pred_region
          %266 = dma.done [#allocation7], 8192
        $region52: #{tpu_custom_call.1} parent=43 // pred_fallthru
          _
        %p267 = pneg %p41
        %p268 = pneg %p38
        %s269 = sand.u32 %s54, 1
        %s270 = scalar_lea.sflag [#allocation4], %s269
        %s271 = sand.u32 %s54, 1
        %s272 = smul.addr %s271, 1024
        %s273 = scalar_lea.vmem [#allocation3], %s272
        %p274 = pneg %p67
        %p275 = pneg %p64
        %p276 = pneg %p88
        %p277 = pneg %p85
        %p278 = pneg %p109
        %p279 = pneg %p106
        %p280 = pneg %p130
        %p281 = pneg %p127
        %p282 = pneg %p151
        %p283 = pneg %p148
        %p284 = pneg %p177
        %p285 = pneg %p174
        %s286 = sand.u32 %s164, 1
        %s287 = scalar_lea.sflag [#allocation5], %s286
        %s288 = sand.u32 %s164, 1
        %s289 = smul.addr %s288, 1024
        %s290 = scalar_lea.vmem [#allocation8], %s289
        %s291 = smul.u32 4, %s25
        %s292 = smul.u32 4, %s25
        %v293 = vld [vmem:[%s256] sm:$0xff]
        %v294 = vld [vmem:[%s256 + $0x8] sm:$0xff]
        %v295 = vld [vmem:[%s256 + $0x10] sm:$0xff]
        %v296 = vld [vmem:[%s256 + $0x18] sm:$0xff]
        %v297 = vld [vmem:[%s256 + $0x20] sm:$0xff]
        %v298 = vld [vmem:[%s256 + $0x28] sm:$0xff]
        %v299 = vld [vmem:[%s256 + $0x30] sm:$0xff]
        %v300 = vld [vmem:[%s256 + $0x38] sm:$0xff]
        %v301 = vld [vmem:[%s256 + $0x40] sm:$0xff]
        %v302 = vld [vmem:[%s256 + $0x48] sm:$0xff]
        %v303 = vld [vmem:[%s256 + $0x50] sm:$0xff]
        %v304 = vld [vmem:[%s256 + $0x58] sm:$0xff]
        %v305 = vld [vmem:[%s256 + $0x60] sm:$0xff]
        %v306 = vld [vmem:[%s256 + $0x68] sm:$0xff]
        %v307 = vld [vmem:[%s256 + $0x70] sm:$0xff]
        %v308 = vld [vmem:[%s256 + $0x78] sm:$0xff]
        %v309 = vld [vmem:[%s256 + $0x80] sm:$0xff]
        %v310 = vld [vmem:[%s256 + $0x88] sm:$0xff]
        %v311 = vld [vmem:[%s256 + $0x90] sm:$0xff]
        %v312 = vld [vmem:[%s256 + $0x98] sm:$0xff]
        %v313 = vld [vmem:[%s256 + $0xa0] sm:$0xff]
        %v314 = vld [vmem:[%s256 + $0xa8] sm:$0xff]
        %v315 = vld [vmem:[%s256 + $0xb0] sm:$0xff]
        %v316 = vld [vmem:[%s256 + $0xb8] sm:$0xff]
        %v317 = vld [vmem:[%s256 + $0xc0] sm:$0xff]
        %v318 = vld [vmem:[%s256 + $0xc8] sm:$0xff]
        %v319 = vld [vmem:[%s256 + $0xd0] sm:$0xff]
        %v320 = vld [vmem:[%s256 + $0xd8] sm:$0xff]
        %v321 = vld [vmem:[%s256 + $0xe0] sm:$0xff]
        %v322 = vld [vmem:[%s256 + $0xe8] sm:$0xff]
        %v323 = vld [vmem:[%s256 + $0xf0] sm:$0xff]
        %v324 = vld [vmem:[%s256 + $0xf8] sm:$0xff]
        %v325 = vld [vmem:[%s256 + $0x100] sm:$0xff]
        %v326 = vld [vmem:[%s256 + $0x108] sm:$0xff]
        %v327 = vld [vmem:[%s256 + $0x110] sm:$0xff]
        %v328 = vld [vmem:[%s256 + $0x118] sm:$0xff]
        %v329 = vld [vmem:[%s256 + $0x120] sm:$0xff]
        %v330 = vld [vmem:[%s256 + $0x128] sm:$0xff]
        %v331 = vld [vmem:[%s256 + $0x130] sm:$0xff]
        %v332 = vld [vmem:[%s256 + $0x138] sm:$0xff]
        %v333 = vld [vmem:[%s256 + $0x140] sm:$0xff]
        %v334 = vld [vmem:[%s256 + $0x148] sm:$0xff]
        %v335 = vld [vmem:[%s256 + $0x150] sm:$0xff]
        %v336 = vld [vmem:[%s256 + $0x158] sm:$0xff]
        %v337 = vld [vmem:[%s256 + $0x160] sm:$0xff]
        %v338 = vld [vmem:[%s256 + $0x168] sm:$0xff]
        %v339 = vld [vmem:[%s256 + $0x170] sm:$0xff]
        %v340 = vld [vmem:[%s256 + $0x178] sm:$0xff]
        %v341 = vld [vmem:[%s256 + $0x180] sm:$0xff]
        %v342 = vld [vmem:[%s256 + $0x188] sm:$0xff]
        %v343 = vld [vmem:[%s256 + $0x190] sm:$0xff]
        %v344 = vld [vmem:[%s256 + $0x198] sm:$0xff]
        %v345 = vld [vmem:[%s256 + $0x1a0] sm:$0xff]
        %v346 = vld [vmem:[%s256 + $0x1a8] sm:$0xff]
        %v347 = vld [vmem:[%s256 + $0x1b0] sm:$0xff]
        %v348 = vld [vmem:[%s256 + $0x1b8] sm:$0xff]
        %v349 = vld [vmem:[%s256 + $0x1c0] sm:$0xff]
        %v350 = vld [vmem:[%s256 + $0x1c8] sm:$0xff]
        %v351 = vld [vmem:[%s256 + $0x1d0] sm:$0xff]
        %v352 = vld [vmem:[%s256 + $0x1d8] sm:$0xff]
        %v353 = vld [vmem:[%s256 + $0x1e0] sm:$0xff]
        %v354 = vld [vmem:[%s256 + $0x1e8] sm:$0xff]
        %v355 = vld [vmem:[%s256 + $0x1f0] sm:$0xff]
        %v356 = vld [vmem:[%s256 + $0x1f8] sm:$0xff]
        %v357 = vld [vmem:[%s256 + $0x200] sm:$0xff]
        %v358 = vld [vmem:[%s256 + $0x208] sm:$0xff]
        %v359 = vld [vmem:[%s256 + $0x210] sm:$0xff]
        %v360 = vld [vmem:[%s256 + $0x218] sm:$0xff]
        %v361 = vld [vmem:[%s256 + $0x220] sm:$0xff]
        %v362 = vld [vmem:[%s256 + $0x228] sm:$0xff]
        %v363 = vld [vmem:[%s256 + $0x230] sm:$0xff]
        %v364 = vld [vmem:[%s256 + $0x238] sm:$0xff]
        %v365 = vld [vmem:[%s256 + $0x240] sm:$0xff]
        %v366 = vld [vmem:[%s256 + $0x248] sm:$0xff]
        %v367 = vld [vmem:[%s256 + $0x250] sm:$0xff]
        %v368 = vld [vmem:[%s256 + $0x258] sm:$0xff]
        %v369 = vld [vmem:[%s256 + $0x260] sm:$0xff]
        %v370 = vld [vmem:[%s256 + $0x268] sm:$0xff]
        %v371 = vld [vmem:[%s256 + $0x270] sm:$0xff]
        %v372 = vld [vmem:[%s256 + $0x278] sm:$0xff]
        %v373 = vld [vmem:[%s256 + $0x280] sm:$0xff]
        %v374 = vld [vmem:[%s256 + $0x288] sm:$0xff]
        %v375 = vld [vmem:[%s256 + $0x290] sm:$0xff]
        %v376 = vld [vmem:[%s256 + $0x298] sm:$0xff]
        %v377 = vld [vmem:[%s256 + $0x2a0] sm:$0xff]
        %v378 = vld [vmem:[%s256 + $0x2a8] sm:$0xff]
        %v379 = vld [vmem:[%s256 + $0x2b0] sm:$0xff]
        %v380 = vld [vmem:[%s256 + $0x2b8] sm:$0xff]
        %v381 = vld [vmem:[%s256 + $0x2c0] sm:$0xff]
        %v382 = vld [vmem:[%s256 + $0x2c8] sm:$0xff]
        %v383 = vld [vmem:[%s256 + $0x2d0] sm:$0xff]
        %v384 = vld [vmem:[%s256 + $0x2d8] sm:$0xff]
        %v385 = vld [vmem:[%s256 + $0x2e0] sm:$0xff]
        %v386 = vld [vmem:[%s256 + $0x2e8] sm:$0xff]
        %v387 = vld [vmem:[%s256 + $0x2f0] sm:$0xff]
        %v388 = vld [vmem:[%s256 + $0x2f8] sm:$0xff]
        %v389 = vld [vmem:[%s256 + $0x300] sm:$0xff]
        %v390 = vld [vmem:[%s256 + $0x308] sm:$0xff]
        %v391 = vld [vmem:[%s256 + $0x310] sm:$0xff]
        %v392 = vld [vmem:[%s256 + $0x318] sm:$0xff]
        %v393 = vld [vmem:[%s256 + $0x320] sm:$0xff]
        %v394 = vld [vmem:[%s256 + $0x328] sm:$0xff]
        %v395 = vld [vmem:[%s256 + $0x330] sm:$0xff]
        %v396 = vld [vmem:[%s256 + $0x338] sm:$0xff]
        %v397 = vld [vmem:[%s256 + $0x340] sm:$0xff]
        %v398 = vld [vmem:[%s256 + $0x348] sm:$0xff]
        %v399 = vld [vmem:[%s256 + $0x350] sm:$0xff]
        %v400 = vld [vmem:[%s256 + $0x358] sm:$0xff]
        %v401 = vld [vmem:[%s256 + $0x360] sm:$0xff]
        %v402 = vld [vmem:[%s256 + $0x368] sm:$0xff]
        %v403 = vld [vmem:[%s256 + $0x370] sm:$0xff]
        %v404 = vld [vmem:[%s256 + $0x378] sm:$0xff]
        %v405 = vld [vmem:[%s256 + $0x380] sm:$0xff]
        %v406 = vld [vmem:[%s256 + $0x388] sm:$0xff]
        %v407 = vld [vmem:[%s256 + $0x390] sm:$0xff]
        %v408 = vld [vmem:[%s256 + $0x398] sm:$0xff]
        %v409 = vld [vmem:[%s256 + $0x3a0] sm:$0xff]
        %v410 = vld [vmem:[%s256 + $0x3a8] sm:$0xff]
        %v411 = vld [vmem:[%s256 + $0x3b0] sm:$0xff]
        %v412 = vld [vmem:[%s256 + $0x3b8] sm:$0xff]
        %v413 = vld [vmem:[%s256 + $0x3c0] sm:$0xff]
        %v414 = vld [vmem:[%s256 + $0x3c8] sm:$0xff]
        %v415 = vld [vmem:[%s256 + $0x3d0] sm:$0xff]
        %v416 = vld [vmem:[%s256 + $0x3d8] sm:$0xff]
        %v417 = vld [vmem:[%s256 + $0x3e0] sm:$0xff]
        %v418 = vld [vmem:[%s256 + $0x3e8] sm:$0xff]
        %v419 = vld [vmem:[%s256 + $0x3f0] sm:$0xff]
        %v420 = vld [vmem:[%s256 + $0x3f8] sm:$0xff]
        %v421 = vld [vmem:[#allocation6] sm:$0xff]
        %v422 = vld [vmem:[#allocation6 + $0x8] sm:$0xff]
        %v423 = vld [vmem:[#allocation6 + $0x10] sm:$0xff]
        %v424 = vld [vmem:[#allocation6 + $0x18] sm:$0xff]
        %v425 = vld [vmem:[#allocation6 + $0x20] sm:$0xff]
        %v426 = vld [vmem:[#allocation6 + $0x28] sm:$0xff]
        %v427 = vld [vmem:[#allocation6 + $0x30] sm:$0xff]
        %v428 = vld [vmem:[#allocation6 + $0x38] sm:$0xff]
        %v429 = vld [vmem:[#allocation6 + $0x40] sm:$0xff]
        %v430 = vld [vmem:[#allocation6 + $0x48] sm:$0xff]
        %v431 = vld [vmem:[#allocation6 + $0x50] sm:$0xff]
        %v432 = vld [vmem:[#allocation6 + $0x58] sm:$0xff]
        %v433 = vld [vmem:[#allocation6 + $0x60] sm:$0xff]
        %v434 = vld [vmem:[#allocation6 + $0x68] sm:$0xff]
        %v435 = vld [vmem:[#allocation6 + $0x70] sm:$0xff]
        %v436 = vld [vmem:[#allocation6 + $0x78] sm:$0xff]
        %v437 = vld [vmem:[#allocation6 + $0x80] sm:$0xff]
        %v438 = vld [vmem:[#allocation6 + $0x88] sm:$0xff]
        %v439 = vld [vmem:[#allocation6 + $0x90] sm:$0xff]
        %v440 = vld [vmem:[#allocation6 + $0x98] sm:$0xff]
        %v441 = vld [vmem:[#allocation6 + $0xa0] sm:$0xff]
        %v442 = vld [vmem:[#allocation6 + $0xa8] sm:$0xff]
        %v443 = vld [vmem:[#allocation6 + $0xb0] sm:$0xff]
        %v444 = vld [vmem:[#allocation6 + $0xb8] sm:$0xff]
        %v445 = vld [vmem:[#allocation6 + $0xc0] sm:$0xff]
        %v446 = vld [vmem:[#allocation6 + $0xc8] sm:$0xff]
        %v447 = vld [vmem:[#allocation6 + $0xd0] sm:$0xff]
        %v448 = vld [vmem:[#allocation6 + $0xd8] sm:$0xff]
        %v449 = vld [vmem:[#allocation6 + $0xe0] sm:$0xff]
        %v450 = vld [vmem:[#allocation6 + $0xe8] sm:$0xff]
        %v451 = vld [vmem:[#allocation6 + $0xf0] sm:$0xff]
        %v452 = vld [vmem:[#allocation6 + $0xf8] sm:$0xff]
        %v453 = vld [vmem:[#allocation6 + $0x100] sm:$0xff]
        %v454 = vld [vmem:[#allocation6 + $0x108] sm:$0xff]
        %v455 = vld [vmem:[#allocation6 + $0x110] sm:$0xff]
        %v456 = vld [vmem:[#allocation6 + $0x118] sm:$0xff]
        %v457 = vld [vmem:[#allocation6 + $0x120] sm:$0xff]
        %v458 = vld [vmem:[#allocation6 + $0x128] sm:$0xff]
        %v459 = vld [vmem:[#allocation6 + $0x130] sm:$0xff]
        %v460 = vld [vmem:[#allocation6 + $0x138] sm:$0xff]
        %v461 = vld [vmem:[#allocation6 + $0x140] sm:$0xff]
        %v462 = vld [vmem:[#allocation6 + $0x148] sm:$0xff]
        %v463 = vld [vmem:[#allocation6 + $0x150] sm:$0xff]
        %v464 = vld [vmem:[#allocation6 + $0x158] sm:$0xff]
        %v465 = vld [vmem:[#allocation6 + $0x160] sm:$0xff]
        %v466 = vld [vmem:[#allocation6 + $0x168] sm:$0xff]
        %v467 = vld [vmem:[#allocation6 + $0x170] sm:$0xff]
        %v468 = vld [vmem:[#allocation6 + $0x178] sm:$0xff]
        %v469 = vld [vmem:[#allocation6 + $0x180] sm:$0xff]
        %v470 = vld [vmem:[#allocation6 + $0x188] sm:$0xff]
        %v471 = vld [vmem:[#allocation6 + $0x190] sm:$0xff]
        %v472 = vld [vmem:[#allocation6 + $0x198] sm:$0xff]
        %v473 = vld [vmem:[#allocation6 + $0x1a0] sm:$0xff]
        %v474 = vld [vmem:[#allocation6 + $0x1a8] sm:$0xff]
        %v475 = vld [vmem:[#allocation6 + $0x1b0] sm:$0xff]
        %v476 = vld [vmem:[#allocation6 + $0x1b8] sm:$0xff]
        %v477 = vld [vmem:[#allocation6 + $0x1c0] sm:$0xff]
        %v478 = vld [vmem:[#allocation6 + $0x1c8] sm:$0xff]
        %v479 = vld [vmem:[#allocation6 + $0x1d0] sm:$0xff]
        %v480 = vld [vmem:[#allocation6 + $0x1d8] sm:$0xff]
        %v481 = vld [vmem:[#allocation6 + $0x1e0] sm:$0xff]
        %v482 = vld [vmem:[#allocation6 + $0x1e8] sm:$0xff]
        %v483 = vld [vmem:[#allocation6 + $0x1f0] sm:$0xff]
        %v484 = vld [vmem:[#allocation6 + $0x1f8] sm:$0xff]
        %v485 = vld [vmem:[%s4] sm:$0x1]
        %v487 = vperm.slane %v485, 0
        %489 = vmatpush.xpose.msra.mxu0 %v481
        %490 = vmatpush.xpose.msra.mxu0 %v477
        %491 = vmatpush.xpose.msra.mxu0 %v473
        %492 = vmatpush.xpose.msra.mxu0 %v469
        %493 = vmatpush.xpose.msra.mxu0 %v465
        %494 = vmatpush.xpose.msra.mxu0 %v461
        %495 = vmatpush.xpose.msra.mxu0 %v457
        %496 = vmatpush.xpose.msra.mxu0 %v453
        %497 = vmatpush.xpose.msra.mxu0 %v449
        %498 = vmatpush.xpose.msra.mxu0 %v445
        %499 = vmatpush.xpose.msra.mxu0 %v441
        %500 = vmatpush.xpose.msra.mxu0 %v437
        %501 = vmatpush.xpose.msra.mxu0 %v433
        %502 = vmatpush.xpose.msra.mxu0 %v429
        %503 = vmatpush.xpose.msra.mxu0 %v425
        %504 = vmatpush.xpose.msra.mxu0 %v421
        %505 = vmatmul.f32.gmra.mxu0 %v293
        %v506 = vpop.f32.mrf.mxu0
        %v507 = vadd.f32 %v487, %v506
        %508 = vmatmul.f32.gmra.mxu0 %v297
        %v509 = vpop.f32.mrf.mxu0
        %v510 = vadd.f32 %v487, %v509
        %511 = vmatmul.f32.gmra.mxu0 %v301
        %v512 = vpop.f32.mrf.mxu0
        %v513 = vadd.f32 %v487, %v512
        %514 = vmatmul.f32.gmra.mxu0 %v305
        %v515 = vpop.f32.mrf.mxu0
        %v516 = vadd.f32 %v487, %v515
        %517 = vmatmul.f32.gmra.mxu0 %v309
        %v518 = vpop.f32.mrf.mxu0
        %v519 = vadd.f32 %v487, %v518
        %520 = vmatmul.f32.gmra.mxu0 %v313
        %v521 = vpop.f32.mrf.mxu0
        %v522 = vadd.f32 %v487, %v521
        %523 = vmatmul.f32.gmra.mxu0 %v317
        %v524 = vpop.f32.mrf.mxu0
        %v525 = vadd.f32 %v487, %v524
        %526 = vmatmul.f32.gmra.mxu0 %v321
        %v527 = vpop.f32.mrf.mxu0
        %v528 = vadd.f32 %v487, %v527
        %529 = vmatmul.f32.gmra.mxu0 %v325
        %v530 = vpop.f32.mrf.mxu0
        %v531 = vadd.f32 %v487, %v530
        %532 = vmatmul.f32.gmra.mxu0 %v329
        %v533 = vpop.f32.mrf.mxu0
        %v534 = vadd.f32 %v487, %v533
        %535 = vmatmul.f32.gmra.mxu0 %v333
        %v536 = vpop.f32.mrf.mxu0
        %v537 = vadd.f32 %v487, %v536
        %538 = vmatmul.f32.gmra.mxu0 %v337
        %v539 = vpop.f32.mrf.mxu0
        %v540 = vadd.f32 %v487, %v539
        %541 = vmatmul.f32.gmra.mxu0 %v341
        %v542 = vpop.f32.mrf.mxu0
        %v543 = vadd.f32 %v487, %v542
        %544 = vmatmul.f32.gmra.mxu0 %v345
        %v545 = vpop.f32.mrf.mxu0
        %v546 = vadd.f32 %v487, %v545
        %547 = vmatmul.f32.gmra.mxu0 %v349
        %v548 = vpop.f32.mrf.mxu0
        %v549 = vadd.f32 %v487, %v548
        %550 = vmatmul.f32.gmra.mxu0 %v353
        %v551 = vpop.f32.mrf.mxu0
        %v552 = vadd.f32 %v487, %v551
        %553 = vmatmul.f32.gmra.mxu0 %v357
        %v554 = vpop.f32.mrf.mxu0
        %v555 = vadd.f32 %v487, %v554
        %556 = vmatmul.f32.gmra.mxu0 %v361
        %v557 = vpop.f32.mrf.mxu0
        %v558 = vadd.f32 %v487, %v557
        %559 = vmatmul.f32.gmra.mxu0 %v365
        %v560 = vpop.f32.mrf.mxu0
        %v561 = vadd.f32 %v487, %v560
        %562 = vmatmul.f32.gmra.mxu0 %v369
        %v563 = vpop.f32.mrf.mxu0
        %v564 = vadd.f32 %v487, %v563
        %565 = vmatmul.f32.gmra.mxu0 %v373
        %v566 = vpop.f32.mrf.mxu0
        %v567 = vadd.f32 %v487, %v566
        %568 = vmatmul.f32.gmra.mxu0 %v377
        %v569 = vpop.f32.mrf.mxu0
        %v570 = vadd.f32 %v487, %v569
        %571 = vmatmul.f32.gmra.mxu0 %v381
        %v572 = vpop.f32.mrf.mxu0
        %v573 = vadd.f32 %v487, %v572
        %574 = vmatmul.f32.gmra.mxu0 %v385
        %v575 = vpop.f32.mrf.mxu0
        %v576 = vadd.f32 %v487, %v575
        %577 = vmatmul.f32.gmra.mxu0 %v389
        %v578 = vpop.f32.mrf.mxu0
        %v579 = vadd.f32 %v487, %v578
        %580 = vmatmul.f32.gmra.mxu0 %v393
        %v581 = vpop.f32.mrf.mxu0
        %v582 = vadd.f32 %v487, %v581
        %583 = vmatmul.f32.gmra.mxu0 %v397
        %v584 = vpop.f32.mrf.mxu0
        %v585 = vadd.f32 %v487, %v584
        %586 = vmatmul.f32.gmra.mxu0 %v401
        %v587 = vpop.f32.mrf.mxu0
        %v588 = vadd.f32 %v487, %v587
        %589 = vmatmul.f32.gmra.mxu0 %v405
        %v590 = vpop.f32.mrf.mxu0
        %v591 = vadd.f32 %v487, %v590
        %592 = vmatmul.f32.gmra.mxu0 %v409
        %v593 = vpop.f32.mrf.mxu0
        %v594 = vadd.f32 %v487, %v593
        %595 = vmatmul.f32.gmra.mxu0 %v413
        %v596 = vpop.f32.mrf.mxu0
        %v597 = vadd.f32 %v487, %v596
        %598 = vmatmul.f32.gmra.mxu0 %v417
        %v599 = vpop.f32.mrf.mxu0
        %v600 = vadd.f32 %v487, %v599
        %601 = vdwg.mxu0
        %602 = vmatpush.xpose.msra.mxu0 %v482
        %603 = vmatpush.xpose.msra.mxu0 %v478
        %604 = vmatpush.xpose.msra.mxu0 %v474
        %605 = vmatpush.xpose.msra.mxu0 %v470
        %606 = vmatpush.xpose.msra.mxu0 %v466
        %607 = vmatpush.xpose.msra.mxu0 %v462
        %608 = vmatpush.xpose.msra.mxu0 %v458
        %609 = vmatpush.xpose.msra.mxu0 %v454
        %610 = vmatpush.xpose.msra.mxu0 %v450
        %611 = vmatpush.xpose.msra.mxu0 %v446
        %612 = vmatpush.xpose.msra.mxu0 %v442
        %613 = vmatpush.xpose.msra.mxu0 %v438
        %614 = vmatpush.xpose.msra.mxu0 %v434
        %615 = vmatpush.xpose.msra.mxu0 %v430
        %616 = vmatpush.xpose.msra.mxu0 %v426
        %617 = vmatpush.xpose.msra.mxu0 %v422
        %618 = vmatmul.f32.gmra.mxu0 %v294
        %v619 = vpop.f32.mrf.mxu0
        %v620 = vadd.f32 %v507, %v619
        %621 = vmatmul.f32.gmra.mxu0 %v298
        %v622 = vpop.f32.mrf.mxu0
        %v623 = vadd.f32 %v510, %v622
        %624 = vmatmul.f32.gmra.mxu0 %v302
        %v625 = vpop.f32.mrf.mxu0
        %v626 = vadd.f32 %v513, %v625
        %627 = vmatmul.f32.gmra.mxu0 %v306
        %v628 = vpop.f32.mrf.mxu0
        %v629 = vadd.f32 %v516, %v628
        %630 = vmatmul.f32.gmra.mxu0 %v310
        %v631 = vpop.f32.mrf.mxu0
        %v632 = vadd.f32 %v519, %v631
        %633 = vmatmul.f32.gmra.mxu0 %v314
        %v634 = vpop.f32.mrf.mxu0
        %v635 = vadd.f32 %v522, %v634
        %636 = vmatmul.f32.gmra.mxu0 %v318
        %v637 = vpop.f32.mrf.mxu0
        %v638 = vadd.f32 %v525, %v637
        %639 = vmatmul.f32.gmra.mxu0 %v322
        %v640 = vpop.f32.mrf.mxu0
        %v641 = vadd.f32 %v528, %v640
        %642 = vmatmul.f32.gmra.mxu0 %v326
        %v643 = vpop.f32.mrf.mxu0
        %v644 = vadd.f32 %v531, %v643
        %645 = vmatmul.f32.gmra.mxu0 %v330
        %v646 = vpop.f32.mrf.mxu0
        %v647 = vadd.f32 %v534, %v646
        %648 = vmatmul.f32.gmra.mxu0 %v334
        %v649 = vpop.f32.mrf.mxu0
        %v650 = vadd.f32 %v537, %v649
        %651 = vmatmul.f32.gmra.mxu0 %v338
        %v652 = vpop.f32.mrf.mxu0
        %v653 = vadd.f32 %v540, %v652
        %654 = vmatmul.f32.gmra.mxu0 %v342
        %v655 = vpop.f32.mrf.mxu0
        %v656 = vadd.f32 %v543, %v655
        %657 = vmatmul.f32.gmra.mxu0 %v346
        %v658 = vpop.f32.mrf.mxu0
        %v659 = vadd.f32 %v546, %v658
        %660 = vmatmul.f32.gmra.mxu0 %v350
        %v661 = vpop.f32.mrf.mxu0
        %v662 = vadd.f32 %v549, %v661
        %663 = vmatmul.f32.gmra.mxu0 %v354
        %v664 = vpop.f32.mrf.mxu0
        %v665 = vadd.f32 %v552, %v664
        %666 = vmatmul.f32.gmra.mxu0 %v358
        %v667 = vpop.f32.mrf.mxu0
        %v668 = vadd.f32 %v555, %v667
        %669 = vmatmul.f32.gmra.mxu0 %v362
        %v670 = vpop.f32.mrf.mxu0
        %v671 = vadd.f32 %v558, %v670
        %672 = vmatmul.f32.gmra.mxu0 %v366
        %v673 = vpop.f32.mrf.mxu0
        %v674 = vadd.f32 %v561, %v673
        %675 = vmatmul.f32.gmra.mxu0 %v370
        %v676 = vpop.f32.mrf.mxu0
        %v677 = vadd.f32 %v564, %v676
        %678 = vmatmul.f32.gmra.mxu0 %v374
        %v679 = vpop.f32.mrf.mxu0
        %v680 = vadd.f32 %v567, %v679
        %681 = vmatmul.f32.gmra.mxu0 %v378
        %v682 = vpop.f32.mrf.mxu0
        %v683 = vadd.f32 %v570, %v682
        %684 = vmatmul.f32.gmra.mxu0 %v382
        %v685 = vpop.f32.mrf.mxu0
        %v686 = vadd.f32 %v573, %v685
        %687 = vmatmul.f32.gmra.mxu0 %v386
        %v688 = vpop.f32.mrf.mxu0
        %v689 = vadd.f32 %v576, %v688
        %690 = vmatmul.f32.gmra.mxu0 %v390
        %v691 = vpop.f32.mrf.mxu0
        %v692 = vadd.f32 %v579, %v691
        %693 = vmatmul.f32.gmra.mxu0 %v394
        %v694 = vpop.f32.mrf.mxu0
        %v695 = vadd.f32 %v582, %v694
        %696 = vmatmul.f32.gmra.mxu0 %v398
        %v697 = vpop.f32.mrf.mxu0
        %v698 = vadd.f32 %v585, %v697
        %699 = vmatmul.f32.gmra.mxu0 %v402
        %v700 = vpop.f32.mrf.mxu0
        %v701 = vadd.f32 %v588, %v700
        %702 = vmatmul.f32.gmra.mxu0 %v406
        %v703 = vpop.f32.mrf.mxu0
        %v704 = vadd.f32 %v591, %v703
        %705 = vmatmul.f32.gmra.mxu0 %v410
        %v706 = vpop.f32.mrf.mxu0
        %v707 = vadd.f32 %v594, %v706
        %708 = vmatmul.f32.gmra.mxu0 %v414
        %v709 = vpop.f32.mrf.mxu0
        %v710 = vadd.f32 %v597, %v709
        %711 = vmatmul.f32.gmra.mxu0 %v418
        %v712 = vpop.f32.mrf.mxu0
        %v713 = vadd.f32 %v600, %v712
        %714 = vdwg.mxu0
        %715 = vmatpush.xpose.msra.mxu0 %v483
        %716 = vmatpush.xpose.msra.mxu0 %v479
        %717 = vmatpush.xpose.msra.mxu0 %v475
        %718 = vmatpush.xpose.msra.mxu0 %v471
        %719 = vmatpush.xpose.msra.mxu0 %v467
        %720 = vmatpush.xpose.msra.mxu0 %v463
        %721 = vmatpush.xpose.msra.mxu0 %v459
        %722 = vmatpush.xpose.msra.mxu0 %v455
        %723 = vmatpush.xpose.msra.mxu0 %v451
        %724 = vmatpush.xpose.msra.mxu0 %v447
        %725 = vmatpush.xpose.msra.mxu0 %v443
        %726 = vmatpush.xpose.msra.mxu0 %v439
        %727 = vmatpush.xpose.msra.mxu0 %v435
        %728 = vmatpush.xpose.msra.mxu0 %v431
        %729 = vmatpush.xpose.msra.mxu0 %v427
        %730 = vmatpush.xpose.msra.mxu0 %v423
        %731 = vmatmul.f32.gmra.mxu0 %v295
        %v732 = vpop.f32.mrf.mxu0
        %v733 = vadd.f32 %v620, %v732
        %734 = vmatmul.f32.gmra.mxu0 %v299
        %v735 = vpop.f32.mrf.mxu0
        %v736 = vadd.f32 %v623, %v735
        %737 = vmatmul.f32.gmra.mxu0 %v303
        %v738 = vpop.f32.mrf.mxu0
        %v739 = vadd.f32 %v626, %v738
        %740 = vmatmul.f32.gmra.mxu0 %v307
        %v741 = vpop.f32.mrf.mxu0
        %v742 = vadd.f32 %v629, %v741
        %743 = vmatmul.f32.gmra.mxu0 %v311
        %v744 = vpop.f32.mrf.mxu0
        %v745 = vadd.f32 %v632, %v744
        %746 = vmatmul.f32.gmra.mxu0 %v315
        %v747 = vpop.f32.mrf.mxu0
        %v748 = vadd.f32 %v635, %v747
        %749 = vmatmul.f32.gmra.mxu0 %v319
        %v750 = vpop.f32.mrf.mxu0
        %v751 = vadd.f32 %v638, %v750
        %752 = vmatmul.f32.gmra.mxu0 %v323
        %v753 = vpop.f32.mrf.mxu0
        %v754 = vadd.f32 %v641, %v753
        %755 = vmatmul.f32.gmra.mxu0 %v327
        %v756 = vpop.f32.mrf.mxu0
        %v757 = vadd.f32 %v644, %v756
        %758 = vmatmul.f32.gmra.mxu0 %v331
        %v759 = vpop.f32.mrf.mxu0
        %v760 = vadd.f32 %v647, %v759
        %761 = vmatmul.f32.gmra.mxu0 %v335
        %v762 = vpop.f32.mrf.mxu0
        %v763 = vadd.f32 %v650, %v762
        %764 = vmatmul.f32.gmra.mxu0 %v339
        %v765 = vpop.f32.mrf.mxu0
        %v766 = vadd.f32 %v653, %v765
        %767 = vmatmul.f32.gmra.mxu0 %v343
        %v768 = vpop.f32.mrf.mxu0
        %v769 = vadd.f32 %v656, %v768
        %770 = vmatmul.f32.gmra.mxu0 %v347
        %v771 = vpop.f32.mrf.mxu0
        %v772 = vadd.f32 %v659, %v771
        %773 = vmatmul.f32.gmra.mxu0 %v351
        %v774 = vpop.f32.mrf.mxu0
        %v775 = vadd.f32 %v662, %v774
        %776 = vmatmul.f32.gmra.mxu0 %v355
        %v777 = vpop.f32.mrf.mxu0
        %v778 = vadd.f32 %v665, %v777
        %779 = vmatmul.f32.gmra.mxu0 %v359
        %v780 = vpop.f32.mrf.mxu0
        %v781 = vadd.f32 %v668, %v780
        %782 = vmatmul.f32.gmra.mxu0 %v363
        %v783 = vpop.f32.mrf.mxu0
        %v784 = vadd.f32 %v671, %v783
        %785 = vmatmul.f32.gmra.mxu0 %v367
        %v786 = vpop.f32.mrf.mxu0
        %v787 = vadd.f32 %v674, %v786
        %788 = vmatmul.f32.gmra.mxu0 %v371
        %v789 = vpop.f32.mrf.mxu0
        %v790 = vadd.f32 %v677, %v789
        %791 = vmatmul.f32.gmra.mxu0 %v375
        %v792 = vpop.f32.mrf.mxu0
        %v793 = vadd.f32 %v680, %v792
        %794 = vmatmul.f32.gmra.mxu0 %v379
        %v795 = vpop.f32.mrf.mxu0
        %v796 = vadd.f32 %v683, %v795
        %797 = vmatmul.f32.gmra.mxu0 %v383
        %v798 = vpop.f32.mrf.mxu0
        %v799 = vadd.f32 %v686, %v798
        %800 = vmatmul.f32.gmra.mxu0 %v387
        %v801 = vpop.f32.mrf.mxu0
        %v802 = vadd.f32 %v689, %v801
        %803 = vmatmul.f32.gmra.mxu0 %v391
        %v804 = vpop.f32.mrf.mxu0
        %v805 = vadd.f32 %v692, %v804
        %806 = vmatmul.f32.gmra.mxu0 %v395
        %v807 = vpop.f32.mrf.mxu0
        %v808 = vadd.f32 %v695, %v807
        %809 = vmatmul.f32.gmra.mxu0 %v399
        %v810 = vpop.f32.mrf.mxu0
        %v811 = vadd.f32 %v698, %v810
        %812 = vmatmul.f32.gmra.mxu0 %v403
        %v813 = vpop.f32.mrf.mxu0
        %v814 = vadd.f32 %v701, %v813
        %815 = vmatmul.f32.gmra.mxu0 %v407
        %v816 = vpop.f32.mrf.mxu0
        %v817 = vadd.f32 %v704, %v816
        %818 = vmatmul.f32.gmra.mxu0 %v411
        %v819 = vpop.f32.mrf.mxu0
        %v820 = vadd.f32 %v707, %v819
        %821 = vmatmul.f32.gmra.mxu0 %v415
        %v822 = vpop.f32.mrf.mxu0
        %v823 = vadd.f32 %v710, %v822
        %824 = vmatmul.f32.gmra.mxu0 %v419
        %v825 = vpop.f32.mrf.mxu0
        %v826 = vadd.f32 %v713, %v825
        %827 = vdwg.mxu0
        %828 = vmatpush.xpose.msra.mxu0 %v484
        %829 = vmatpush.xpose.msra.mxu0 %v480
        %830 = vmatpush.xpose.msra.mxu0 %v476
        %831 = vmatpush.xpose.msra.mxu0 %v472
        %832 = vmatpush.xpose.msra.mxu0 %v468
        %833 = vmatpush.xpose.msra.mxu0 %v464
        %834 = vmatpush.xpose.msra.mxu0 %v460
        %835 = vmatpush.xpose.msra.mxu0 %v456
        %836 = vmatpush.xpose.msra.mxu0 %v452
        %837 = vmatpush.xpose.msra.mxu0 %v448
        %838 = vmatpush.xpose.msra.mxu0 %v444
        %839 = vmatpush.xpose.msra.mxu0 %v440
        %840 = vmatpush.xpose.msra.mxu0 %v436
        %841 = vmatpush.xpose.msra.mxu0 %v432
        %842 = vmatpush.xpose.msra.mxu0 %v428
        %843 = vmatpush.xpose.msra.mxu0 %v424
        %844 = vmatmul.f32.gmra.mxu0 %v296
        %v845 = vpop.f32.mrf.mxu0
        %v846 = vadd.f32 %v733, %v845
        %847 = vmatmul.f32.gmra.mxu0 %v300
        %v848 = vpop.f32.mrf.mxu0
        %v849 = vadd.f32 %v736, %v848
        %850 = vmatmul.f32.gmra.mxu0 %v304
        %v851 = vpop.f32.mrf.mxu0
        %v852 = vadd.f32 %v739, %v851
        %853 = vmatmul.f32.gmra.mxu0 %v308
        %v854 = vpop.f32.mrf.mxu0
        %v855 = vadd.f32 %v742, %v854
        %856 = vmatmul.f32.gmra.mxu0 %v312
        %v857 = vpop.f32.mrf.mxu0
        %v858 = vadd.f32 %v745, %v857
        %859 = vmatmul.f32.gmra.mxu0 %v316
        %v860 = vpop.f32.mrf.mxu0
        %v861 = vadd.f32 %v748, %v860
        %862 = vmatmul.f32.gmra.mxu0 %v320
        %v863 = vpop.f32.mrf.mxu0
        %v864 = vadd.f32 %v751, %v863
        %865 = vmatmul.f32.gmra.mxu0 %v324
        %v866 = vpop.f32.mrf.mxu0
        %v867 = vadd.f32 %v754, %v866
        %868 = vmatmul.f32.gmra.mxu0 %v328
        %v869 = vpop.f32.mrf.mxu0
        %v870 = vadd.f32 %v757, %v869
        %871 = vmatmul.f32.gmra.mxu0 %v332
        %v872 = vpop.f32.mrf.mxu0
        %v873 = vadd.f32 %v760, %v872
        %874 = vmatmul.f32.gmra.mxu0 %v336
        %v875 = vpop.f32.mrf.mxu0
        %v876 = vadd.f32 %v763, %v875
        %877 = vmatmul.f32.gmra.mxu0 %v340
        %v878 = vpop.f32.mrf.mxu0
        %v879 = vadd.f32 %v766, %v878
        %880 = vmatmul.f32.gmra.mxu0 %v344
        %v881 = vpop.f32.mrf.mxu0
        %v882 = vadd.f32 %v769, %v881
        %883 = vmatmul.f32.gmra.mxu0 %v348
        %v884 = vpop.f32.mrf.mxu0
        %v885 = vadd.f32 %v772, %v884
        %886 = vmatmul.f32.gmra.mxu0 %v352
        %v887 = vpop.f32.mrf.mxu0
        %v888 = vadd.f32 %v775, %v887
        %889 = vmatmul.f32.gmra.mxu0 %v356
        %v890 = vpop.f32.mrf.mxu0
        %v891 = vadd.f32 %v778, %v890
        %892 = vmatmul.f32.gmra.mxu0 %v360
        %v893 = vpop.f32.mrf.mxu0
        %v894 = vadd.f32 %v781, %v893
        %895 = vmatmul.f32.gmra.mxu0 %v364
        %v896 = vpop.f32.mrf.mxu0
        %v897 = vadd.f32 %v784, %v896
        %898 = vmatmul.f32.gmra.mxu0 %v368
        %v899 = vpop.f32.mrf.mxu0
        %v900 = vadd.f32 %v787, %v899
        %901 = vmatmul.f32.gmra.mxu0 %v372
        %v902 = vpop.f32.mrf.mxu0
        %v903 = vadd.f32 %v790, %v902
        %904 = vmatmul.f32.gmra.mxu0 %v376
        %v905 = vpop.f32.mrf.mxu0
        %v906 = vadd.f32 %v793, %v905
        %907 = vmatmul.f32.gmra.mxu0 %v380
        %v908 = vpop.f32.mrf.mxu0
        %v909 = vadd.f32 %v796, %v908
        %910 = vmatmul.f32.gmra.mxu0 %v384
        %v911 = vpop.f32.mrf.mxu0
        %v912 = vadd.f32 %v799, %v911
        %913 = vmatmul.f32.gmra.mxu0 %v388
        %v914 = vpop.f32.mrf.mxu0
        %v915 = vadd.f32 %v802, %v914
        %916 = vmatmul.f32.gmra.mxu0 %v392
        %v917 = vpop.f32.mrf.mxu0
        %v918 = vadd.f32 %v805, %v917
        %919 = vmatmul.f32.gmra.mxu0 %v396
        %v920 = vpop.f32.mrf.mxu0
        %v921 = vadd.f32 %v808, %v920
        %922 = vmatmul.f32.gmra.mxu0 %v400
        %v923 = vpop.f32.mrf.mxu0
        %v924 = vadd.f32 %v811, %v923
        %925 = vmatmul.f32.gmra.mxu0 %v404
        %v926 = vpop.f32.mrf.mxu0
        %v927 = vadd.f32 %v814, %v926
        %928 = vmatmul.f32.gmra.mxu0 %v408
        %v929 = vpop.f32.mrf.mxu0
        %v930 = vadd.f32 %v817, %v929
        %931 = vmatmul.f32.gmra.mxu0 %v412
        %v932 = vpop.f32.mrf.mxu0
        %v933 = vadd.f32 %v820, %v932
        %934 = vmatmul.f32.gmra.mxu0 %v416
        %v935 = vpop.f32.mrf.mxu0
        %v936 = vadd.f32 %v823, %v935
        %937 = vmatmul.f32.gmra.mxu0 %v420
        %v938 = vpop.f32.mrf.mxu0
        %v939 = vadd.f32 %v826, %v938
        %940 = vdwg.mxu0
        %v941 = vmax.f32 %v846, 0.0
        %v942 = vmax.f32 %v849, 0.0
        %v943 = vmax.f32 %v852, 0.0
        %v944 = vmax.f32 %v855, 0.0
        %v945 = vmax.f32 %v858, 0.0
        %v946 = vmax.f32 %v861, 0.0
        %v947 = vmax.f32 %v864, 0.0
        %v948 = vmax.f32 %v867, 0.0
        %v949 = vmax.f32 %v870, 0.0
        %v950 = vmax.f32 %v873, 0.0
        %v951 = vmax.f32 %v876, 0.0
        %v952 = vmax.f32 %v879, 0.0
        %v953 = vmax.f32 %v882, 0.0
        %v954 = vmax.f32 %v885, 0.0
        %v955 = vmax.f32 %v888, 0.0
        %v956 = vmax.f32 %v891, 0.0
        %v957 = vmax.f32 %v894, 0.0
        %v958 = vmax.f32 %v897, 0.0
        %v959 = vmax.f32 %v900, 0.0
        %v960 = vmax.f32 %v903, 0.0
        %v961 = vmax.f32 %v906, 0.0
        %v962 = vmax.f32 %v909, 0.0
        %v963 = vmax.f32 %v912, 0.0
        %v964 = vmax.f32 %v915, 0.0
        %v965 = vmax.f32 %v918, 0.0
        %v966 = vmax.f32 %v921, 0.0
        %v967 = vmax.f32 %v924, 0.0
        %v968 = vmax.f32 %v927, 0.0
        %v969 = vmax.f32 %v930, 0.0
        %v970 = vmax.f32 %v933, 0.0
        %v971 = vmax.f32 %v936, 0.0
        %v972 = vmax.f32 %v939, 0.0
        %981 = vrot.lane.b32.xlu0 %v941, 64
        %v982 = vpop.permute.xlu0 %981
        %983 = vrot.lane.b32.xlu0 %v942, 64
        %v984 = vpop.permute.xlu0 %983
        %985 = vrot.lane.b32.xlu0 %v943, 64
        %v986 = vpop.permute.xlu0 %985
        %987 = vrot.lane.b32.xlu0 %v944, 64
        %v988 = vpop.permute.xlu0 %987
        %989 = vrot.lane.b32.xlu0 %v945, 64
        %v990 = vpop.permute.xlu0 %989
        %991 = vrot.lane.b32.xlu0 %v946, 64
        %v992 = vpop.permute.xlu0 %991
        %993 = vrot.lane.b32.xlu0 %v947, 64
        %v994 = vpop.permute.xlu0 %993
        %995 = vrot.lane.b32.xlu0 %v948, 64
        %v996 = vpop.permute.xlu0 %995
        %vm997 = vcmask 523264
        %v998 = vsel %vm997, %v982, 0
        %v1000 = vsel %vm997, %v984, 0
        %v1002 = vsel %vm997, %v986, 0
        %v1004 = vsel %vm997, %v988, 0
        %v1006 = vsel %vm997, %v990, 0
        %v1008 = vsel %vm997, %v992, 0
        %v1010 = vsel %vm997, %v994, 0
        %v1012 = vsel %vm997, %v996, 0
        %v1014 = vsel %vm997, %v941, 0
        %v1016 = vsel %vm997, %v942, 0
        %v1018 = vsel %vm997, %v943, 0
        %v1020 = vsel %vm997, %v944, 0
        %v1022 = vsel %vm997, %v945, 0
        %v1024 = vsel %vm997, %v946, 0
        %v1026 = vsel %vm997, %v947, 0
        %v1028 = vsel %vm997, %v948, 0
        %1030 = vmatpush.xpose.msra.mxu0 0.0
        %1031 = vmatpush.xpose.msra.mxu0 0.0
        %1032 = vmatpush.xpose.msra.mxu0 0.0
        %1033 = vmatpush.xpose.msra.mxu0 0.0
        %1034 = vmatpush.xpose.msra.mxu0 0.0
        %1035 = vmatpush.xpose.msra.mxu0 0.0
        %1036 = vmatpush.xpose.msra.mxu0 0.0
        %1037 = vmatpush.xpose.msra.mxu0 0.0
        %1038 = vmatpush.xpose.msra.mxu0 %v1028
        %1039 = vmatpush.xpose.msra.mxu0 %v1026
        %1040 = vmatpush.xpose.msra.mxu0 %v1024
        %1041 = vmatpush.xpose.msra.mxu0 %v1022
        %1042 = vmatpush.xpose.msra.mxu0 %v1020
        %1043 = vmatpush.xpose.msra.mxu0 %v1018
        %1044 = vmatpush.xpose.msra.mxu0 %v1016
        %1045 = vmatpush.xpose.msra.mxu0 %v1014
        %1046 = vmatmul.f32.gmra.mxu0 %v998
        %v1047 = vpop.f32.mrf.mxu0
        %v1048 = vadd.f32 0.0, %v1047
        %1049 = vmatmul.f32.gmra.mxu0 %v1000
        %v1050 = vpop.f32.mrf.mxu0
        %v1051 = vadd.f32 0.0, %v1050
        %1052 = vmatmul.f32.gmra.mxu0 %v1002
        %v1053 = vpop.f32.mrf.mxu0
        %v1054 = vadd.f32 0.0, %v1053
        %1055 = vmatmul.f32.gmra.mxu0 %v1004
        %v1056 = vpop.f32.mrf.mxu0
        %v1057 = vadd.f32 0.0, %v1056
        %1058 = vmatmul.f32.gmra.mxu0 %v1006
        %v1059 = vpop.f32.mrf.mxu0
        %v1060 = vadd.f32 0.0, %v1059
        %1061 = vmatmul.f32.gmra.mxu0 %v1008
        %v1062 = vpop.f32.mrf.mxu0
        %v1063 = vadd.f32 0.0, %v1062
        %1064 = vmatmul.f32.gmra.mxu0 %v1010
        %v1065 = vpop.f32.mrf.mxu0
        %v1066 = vadd.f32 0.0, %v1065
        %1067 = vmatmul.f32.gmra.mxu0 %v1012
        %v1068 = vpop.f32.mrf.mxu0
        %v1069 = vadd.f32 0.0, %v1068
        %1070 = vdwg.mxu0
        %1079 = vrot.lane.b32.xlu0 %v949, 64
        %v1080 = vpop.permute.xlu0 %1079
        %1081 = vrot.lane.b32.xlu0 %v950, 64
        %v1082 = vpop.permute.xlu0 %1081
        %1083 = vrot.lane.b32.xlu0 %v951, 64
        %v1084 = vpop.permute.xlu0 %1083
        %1085 = vrot.lane.b32.xlu0 %v952, 64
        %v1086 = vpop.permute.xlu0 %1085
        %1087 = vrot.lane.b32.xlu0 %v953, 64
        %v1088 = vpop.permute.xlu0 %1087
        %1089 = vrot.lane.b32.xlu0 %v954, 64
        %v1090 = vpop.permute.xlu0 %1089
        %1091 = vrot.lane.b32.xlu0 %v955, 64
        %v1092 = vpop.permute.xlu0 %1091
        %1093 = vrot.lane.b32.xlu0 %v956, 64
        %v1094 = vpop.permute.xlu0 %1093
        %v1095 = vsel %vm997, %v1080, 0
        %v1097 = vsel %vm997, %v1082, 0
        %v1099 = vsel %vm997, %v1084, 0
        %v1101 = vsel %vm997, %v1086, 0
        %v1103 = vsel %vm997, %v1088, 0
        %v1105 = vsel %vm997, %v1090, 0
        %v1107 = vsel %vm997, %v1092, 0
        %v1109 = vsel %vm997, %v1094, 0
        %v1111 = vsel %vm997, %v949, 0
        %v1113 = vsel %vm997, %v950, 0
        %v1115 = vsel %vm997, %v951, 0
        %v1117 = vsel %vm997, %v952, 0
        %v1119 = vsel %vm997, %v953, 0
        %v1121 = vsel %vm997, %v954, 0
        %v1123 = vsel %vm997, %v955, 0
        %v1125 = vsel %vm997, %v956, 0
        %1127 = vmatpush.xpose.msra.mxu0 0.0
        %1128 = vmatpush.xpose.msra.mxu0 0.0
        %1129 = vmatpush.xpose.msra.mxu0 0.0
        %1130 = vmatpush.xpose.msra.mxu0 0.0
        %1131 = vmatpush.xpose.msra.mxu0 0.0
        %1132 = vmatpush.xpose.msra.mxu0 0.0
        %1133 = vmatpush.xpose.msra.mxu0 0.0
        %1134 = vmatpush.xpose.msra.mxu0 0.0
        %1135 = vmatpush.xpose.msra.mxu0 %v1125
        %1136 = vmatpush.xpose.msra.mxu0 %v1123
        %1137 = vmatpush.xpose.msra.mxu0 %v1121
        %1138 = vmatpush.xpose.msra.mxu0 %v1119
        %1139 = vmatpush.xpose.msra.mxu0 %v1117
        %1140 = vmatpush.xpose.msra.mxu0 %v1115
        %1141 = vmatpush.xpose.msra.mxu0 %v1113
        %1142 = vmatpush.xpose.msra.mxu0 %v1111
        %1143 = vmatmul.f32.gmra.mxu0 %v1095
        %v1144 = vpop.f32.mrf.mxu0
        %v1145 = vadd.f32 0.0, %v1144
        %1146 = vmatmul.f32.gmra.mxu0 %v1097
        %v1147 = vpop.f32.mrf.mxu0
        %v1148 = vadd.f32 0.0, %v1147
        %1149 = vmatmul.f32.gmra.mxu0 %v1099
        %v1150 = vpop.f32.mrf.mxu0
        %v1151 = vadd.f32 0.0, %v1150
        %1152 = vmatmul.f32.gmra.mxu0 %v1101
        %v1153 = vpop.f32.mrf.mxu0
        %v1154 = vadd.f32 0.0, %v1153
        %1155 = vmatmul.f32.gmra.mxu0 %v1103
        %v1156 = vpop.f32.mrf.mxu0
        %v1157 = vadd.f32 0.0, %v1156
        %1158 = vmatmul.f32.gmra.mxu0 %v1105
        %v1159 = vpop.f32.mrf.mxu0
        %v1160 = vadd.f32 0.0, %v1159
        %1161 = vmatmul.f32.gmra.mxu0 %v1107
        %v1162 = vpop.f32.mrf.mxu0
        %v1163 = vadd.f32 0.0, %v1162
        %1164 = vmatmul.f32.gmra.mxu0 %v1109
        %v1165 = vpop.f32.mrf.mxu0
        %v1166 = vadd.f32 0.0, %v1165
        %1167 = vdwg.mxu0
        %1176 = vrot.lane.b32.xlu0 %v957, 64
        %v1177 = vpop.permute.xlu0 %1176
        %1178 = vrot.lane.b32.xlu0 %v958, 64
        %v1179 = vpop.permute.xlu0 %1178
        %1180 = vrot.lane.b32.xlu0 %v959, 64
        %v1181 = vpop.permute.xlu0 %1180
        %1182 = vrot.lane.b32.xlu0 %v960, 64
        %v1183 = vpop.permute.xlu0 %1182
        %1184 = vrot.lane.b32.xlu0 %v961, 64
        %v1185 = vpop.permute.xlu0 %1184
        %1186 = vrot.lane.b32.xlu0 %v962, 64
        %v1187 = vpop.permute.xlu0 %1186
        %1188 = vrot.lane.b32.xlu0 %v963, 64
        %v1189 = vpop.permute.xlu0 %1188
        %1190 = vrot.lane.b32.xlu0 %v964, 64
        %v1191 = vpop.permute.xlu0 %1190
        %v1192 = vsel %vm997, %v1177, 0
        %v1194 = vsel %vm997, %v1179, 0
        %v1196 = vsel %vm997, %v1181, 0
        %v1198 = vsel %vm997, %v1183, 0
        %v1200 = vsel %vm997, %v1185, 0
        %v1202 = vsel %vm997, %v1187, 0
        %v1204 = vsel %vm997, %v1189, 0
        %v1206 = vsel %vm997, %v1191, 0
        %v1208 = vsel %vm997, %v957, 0
        %v1210 = vsel %vm997, %v958, 0
        %v1212 = vsel %vm997, %v959, 0
        %v1214 = vsel %vm997, %v960, 0
        %v1216 = vsel %vm997, %v961, 0
        %v1218 = vsel %vm997, %v962, 0
        %v1220 = vsel %vm997, %v963, 0
        %v1222 = vsel %vm997, %v964, 0
        %1224 = vmatpush.xpose.msra.mxu0 0.0
        %1225 = vmatpush.xpose.msra.mxu0 0.0
        %1226 = vmatpush.xpose.msra.mxu0 0.0
        %1227 = vmatpush.xpose.msra.mxu0 0.0
        %1228 = vmatpush.xpose.msra.mxu0 0.0
        %1229 = vmatpush.xpose.msra.mxu0 0.0
        %1230 = vmatpush.xpose.msra.mxu0 0.0
        %1231 = vmatpush.xpose.msra.mxu0 0.0
        %1232 = vmatpush.xpose.msra.mxu0 %v1222
        %1233 = vmatpush.xpose.msra.mxu0 %v1220
        %1234 = vmatpush.xpose.msra.mxu0 %v1218
        %1235 = vmatpush.xpose.msra.mxu0 %v1216
        %1236 = vmatpush.xpose.msra.mxu0 %v1214
        %1237 = vmatpush.xpose.msra.mxu0 %v1212
        %1238 = vmatpush.xpose.msra.mxu0 %v1210
        %1239 = vmatpush.xpose.msra.mxu0 %v1208
        %1240 = vmatmul.f32.gmra.mxu0 %v1192
        %v1241 = vpop.f32.mrf.mxu0
        %v1242 = vadd.f32 0.0, %v1241
        %1243 = vmatmul.f32.gmra.mxu0 %v1194
        %v1244 = vpop.f32.mrf.mxu0
        %v1245 = vadd.f32 0.0, %v1244
        %1246 = vmatmul.f32.gmra.mxu0 %v1196
        %v1247 = vpop.f32.mrf.mxu0
        %v1248 = vadd.f32 0.0, %v1247
        %1249 = vmatmul.f32.gmra.mxu0 %v1198
        %v1250 = vpop.f32.mrf.mxu0
        %v1251 = vadd.f32 0.0, %v1250
        %1252 = vmatmul.f32.gmra.mxu0 %v1200
        %v1253 = vpop.f32.mrf.mxu0
        %v1254 = vadd.f32 0.0, %v1253
        %1255 = vmatmul.f32.gmra.mxu0 %v1202
        %v1256 = vpop.f32.mrf.mxu0
        %v1257 = vadd.f32 0.0, %v1256
        %1258 = vmatmul.f32.gmra.mxu0 %v1204
        %v1259 = vpop.f32.mrf.mxu0
        %v1260 = vadd.f32 0.0, %v1259
        %1261 = vmatmul.f32.gmra.mxu0 %v1206
        %v1262 = vpop.f32.mrf.mxu0
        %v1263 = vadd.f32 0.0, %v1262
        %1264 = vdwg.mxu0
        %1273 = vrot.lane.b32.xlu0 %v965, 64
        %v1274 = vpop.permute.xlu0 %1273
        %1275 = vrot.lane.b32.xlu0 %v966, 64
        %v1276 = vpop.permute.xlu0 %1275
        %1277 = vrot.lane.b32.xlu0 %v967, 64
        %v1278 = vpop.permute.xlu0 %1277
        %1279 = vrot.lane.b32.xlu0 %v968, 64
        %v1280 = vpop.permute.xlu0 %1279
        %1281 = vrot.lane.b32.xlu0 %v969, 64
        %v1282 = vpop.permute.xlu0 %1281
        %1283 = vrot.lane.b32.xlu0 %v970, 64
        %v1284 = vpop.permute.xlu0 %1283
        %1285 = vrot.lane.b32.xlu0 %v971, 64
        %v1286 = vpop.permute.xlu0 %1285
        %1287 = vrot.lane.b32.xlu0 %v972, 64
        %v1288 = vpop.permute.xlu0 %1287
        %v1289 = vsel %vm997, %v1274, 0
        %v1291 = vsel %vm997, %v1276, 0
        %v1293 = vsel %vm997, %v1278, 0
        %v1295 = vsel %vm997, %v1280, 0
        %v1297 = vsel %vm997, %v1282, 0
        %v1299 = vsel %vm997, %v1284, 0
        %v1301 = vsel %vm997, %v1286, 0
        %v1303 = vsel %vm997, %v1288, 0
        %v1305 = vsel %vm997, %v965, 0
        %v1307 = vsel %vm997, %v966, 0
        %v1309 = vsel %vm997, %v967, 0
        %v1311 = vsel %vm997, %v968, 0
        %v1313 = vsel %vm997, %v969, 0
        %v1315 = vsel %vm997, %v970, 0
        %v1317 = vsel %vm997, %v971, 0
        %v1319 = vsel %vm997, %v972, 0
        %1321 = vmatpush.xpose.msra.mxu0 0.0
        %1322 = vmatpush.xpose.msra.mxu0 0.0
        %1323 = vmatpush.xpose.msra.mxu0 0.0
        %1324 = vmatpush.xpose.msra.mxu0 0.0
        %1325 = vmatpush.xpose.msra.mxu0 0.0
        %1326 = vmatpush.xpose.msra.mxu0 0.0
        %1327 = vmatpush.xpose.msra.mxu0 0.0
        %1328 = vmatpush.xpose.msra.mxu0 0.0
        %1329 = vmatpush.xpose.msra.mxu0 %v1319
        %1330 = vmatpush.xpose.msra.mxu0 %v1317
        %1331 = vmatpush.xpose.msra.mxu0 %v1315
        %1332 = vmatpush.xpose.msra.mxu0 %v1313
        %1333 = vmatpush.xpose.msra.mxu0 %v1311
        %1334 = vmatpush.xpose.msra.mxu0 %v1309
        %1335 = vmatpush.xpose.msra.mxu0 %v1307
        %1336 = vmatpush.xpose.msra.mxu0 %v1305
        %1337 = vmatmul.f32.gmra.mxu0 %v1289
        %v1338 = vpop.f32.mrf.mxu0
        %v1339 = vadd.f32 0.0, %v1338
        %1340 = vmatmul.f32.gmra.mxu0 %v1291
        %v1341 = vpop.f32.mrf.mxu0
        %v1342 = vadd.f32 0.0, %v1341
        %1343 = vmatmul.f32.gmra.mxu0 %v1293
        %v1344 = vpop.f32.mrf.mxu0
        %v1345 = vadd.f32 0.0, %v1344
        %1346 = vmatmul.f32.gmra.mxu0 %v1295
        %v1347 = vpop.f32.mrf.mxu0
        %v1348 = vadd.f32 0.0, %v1347
        %1349 = vmatmul.f32.gmra.mxu0 %v1297
        %v1350 = vpop.f32.mrf.mxu0
        %v1351 = vadd.f32 0.0, %v1350
        %1352 = vmatmul.f32.gmra.mxu0 %v1299
        %v1353 = vpop.f32.mrf.mxu0
        %v1354 = vadd.f32 0.0, %v1353
        %1355 = vmatmul.f32.gmra.mxu0 %v1301
        %v1356 = vpop.f32.mrf.mxu0
        %v1357 = vadd.f32 0.0, %v1356
        %1358 = vmatmul.f32.gmra.mxu0 %v1303
        %v1359 = vpop.f32.mrf.mxu0
        %v1360 = vadd.f32 0.0, %v1359
        %1361 = vdwg.mxu0
        %v1362 = vsel %vm997, %v1048, inf
        %1363 = vmin.xlane.f32.xlu0 %v1362
        %v1364 = vpop.xlane.xlu0 %1363
        %v1365 = vsel %vm997, %v1051, inf
        %1366 = vmin.xlane.f32.xlu0 %v1365
        %v1367 = vpop.xlane.xlu0 %1366
        %v1368 = vsel %vm997, %v1054, inf
        %1369 = vmin.xlane.f32.xlu0 %v1368
        %v1370 = vpop.xlane.xlu0 %1369
        %v1371 = vsel %vm997, %v1057, inf
        %1372 = vmin.xlane.f32.xlu0 %v1371
        %v1373 = vpop.xlane.xlu0 %1372
        %v1374 = vsel %vm997, %v1060, inf
        %1375 = vmin.xlane.f32.xlu0 %v1374
        %v1376 = vpop.xlane.xlu0 %1375
        %v1377 = vsel %vm997, %v1063, inf
        %1378 = vmin.xlane.f32.xlu0 %v1377
        %v1379 = vpop.xlane.xlu0 %1378
        %v1380 = vsel %vm997, %v1066, inf
        %1381 = vmin.xlane.f32.xlu0 %v1380
        %v1382 = vpop.xlane.xlu0 %1381
        %v1383 = vsel %vm997, %v1069, inf
        %1384 = vmin.xlane.f32.xlu0 %v1383
        %v1385 = vpop.xlane.xlu0 %1384
        %v1386 = vsel %vm997, %v1145, inf
        %1387 = vmin.xlane.f32.xlu0 %v1386
        %v1388 = vpop.xlane.xlu0 %1387
        %v1389 = vsel %vm997, %v1148, inf
        %1390 = vmin.xlane.f32.xlu0 %v1389
        %v1391 = vpop.xlane.xlu0 %1390
        %v1392 = vsel %vm997, %v1151, inf
        %1393 = vmin.xlane.f32.xlu0 %v1392
        %v1394 = vpop.xlane.xlu0 %1393
        %v1395 = vsel %vm997, %v1154, inf
        %1396 = vmin.xlane.f32.xlu0 %v1395
        %v1397 = vpop.xlane.xlu0 %1396
        %v1398 = vsel %vm997, %v1157, inf
        %1399 = vmin.xlane.f32.xlu0 %v1398
        %v1400 = vpop.xlane.xlu0 %1399
        %v1401 = vsel %vm997, %v1160, inf
        %1402 = vmin.xlane.f32.xlu0 %v1401
        %v1403 = vpop.xlane.xlu0 %1402
        %v1404 = vsel %vm997, %v1163, inf
        %1405 = vmin.xlane.f32.xlu0 %v1404
        %v1406 = vpop.xlane.xlu0 %1405
        %v1407 = vsel %vm997, %v1166, inf
        %1408 = vmin.xlane.f32.xlu0 %v1407
        %v1409 = vpop.xlane.xlu0 %1408
        %v1410 = vsel %vm997, %v1242, inf
        %1411 = vmin.xlane.f32.xlu0 %v1410
        %v1412 = vpop.xlane.xlu0 %1411
        %v1413 = vsel %vm997, %v1245, inf
        %1414 = vmin.xlane.f32.xlu0 %v1413
        %v1415 = vpop.xlane.xlu0 %1414
        %v1416 = vsel %vm997, %v1248, inf
        %1417 = vmin.xlane.f32.xlu0 %v1416
        %v1418 = vpop.xlane.xlu0 %1417
        %v1419 = vsel %vm997, %v1251, inf
        %1420 = vmin.xlane.f32.xlu0 %v1419
        %v1421 = vpop.xlane.xlu0 %1420
        %v1422 = vsel %vm997, %v1254, inf
        %1423 = vmin.xlane.f32.xlu0 %v1422
        %v1424 = vpop.xlane.xlu0 %1423
        %v1425 = vsel %vm997, %v1257, inf
        %1426 = vmin.xlane.f32.xlu0 %v1425
        %v1427 = vpop.xlane.xlu0 %1426
        %v1428 = vsel %vm997, %v1260, inf
        %1429 = vmin.xlane.f32.xlu0 %v1428
        %v1430 = vpop.xlane.xlu0 %1429
        %v1431 = vsel %vm997, %v1263, inf
        %1432 = vmin.xlane.f32.xlu0 %v1431
        %v1433 = vpop.xlane.xlu0 %1432
        %v1434 = vsel %vm997, %v1339, inf
        %1435 = vmin.xlane.f32.xlu0 %v1434
        %v1436 = vpop.xlane.xlu0 %1435
        %v1437 = vsel %vm997, %v1342, inf
        %1438 = vmin.xlane.f32.xlu0 %v1437
        %v1439 = vpop.xlane.xlu0 %1438
        %v1440 = vsel %vm997, %v1345, inf
        %1441 = vmin.xlane.f32.xlu0 %v1440
        %v1442 = vpop.xlane.xlu0 %1441
        %v1443 = vsel %vm997, %v1348, inf
        %1444 = vmin.xlane.f32.xlu0 %v1443
        %v1445 = vpop.xlane.xlu0 %1444
        %v1446 = vsel %vm997, %v1351, inf
        %1447 = vmin.xlane.f32.xlu0 %v1446
        %v1448 = vpop.xlane.xlu0 %1447
        %v1449 = vsel %vm997, %v1354, inf
        %1450 = vmin.xlane.f32.xlu0 %v1449
        %v1451 = vpop.xlane.xlu0 %1450
        %v1452 = vsel %vm997, %v1357, inf
        %1453 = vmin.xlane.f32.xlu0 %v1452
        %v1454 = vpop.xlane.xlu0 %1453
        %v1455 = vsel %vm997, %v1360, inf
        %1456 = vmin.xlane.f32.xlu0 %v1455
        %v1457 = vpop.xlane.xlu0 %1456
        %v1458 = vsub.f32 %v1364, %v1048
        %v1459 = vsub.f32 %v1367, %v1051
        %v1460 = vsub.f32 %v1370, %v1054
        %v1461 = vsub.f32 %v1373, %v1057
        %v1462 = vsub.f32 %v1376, %v1060
        %v1463 = vsub.f32 %v1379, %v1063
        %v1464 = vsub.f32 %v1382, %v1066
        %v1465 = vsub.f32 %v1385, %v1069
        %v1466 = vsub.f32 %v1388, %v1145
        %v1467 = vsub.f32 %v1391, %v1148
        %v1468 = vsub.f32 %v1394, %v1151
        %v1469 = vsub.f32 %v1397, %v1154
        %v1470 = vsub.f32 %v1400, %v1157
        %v1471 = vsub.f32 %v1403, %v1160
        %v1472 = vsub.f32 %v1406, %v1163
        %v1473 = vsub.f32 %v1409, %v1166
        %v1474 = vsub.f32 %v1412, %v1242
        %v1475 = vsub.f32 %v1415, %v1245
        %v1476 = vsub.f32 %v1418, %v1248
        %v1477 = vsub.f32 %v1421, %v1251
        %v1478 = vsub.f32 %v1424, %v1254
        %v1479 = vsub.f32 %v1427, %v1257
        %v1480 = vsub.f32 %v1430, %v1260
        %v1481 = vsub.f32 %v1433, %v1263
        %v1482 = vsub.f32 %v1436, %v1339
        %v1483 = vsub.f32 %v1439, %v1342
        %v1484 = vsub.f32 %v1442, %v1345
        %v1485 = vsub.f32 %v1445, %v1348
        %v1486 = vsub.f32 %v1448, %v1351
        %v1487 = vsub.f32 %v1451, %v1354
        %v1488 = vsub.f32 %v1454, %v1357
        %v1489 = vsub.f32 %v1457, %v1360
        %v1490 = vmul.f32 %v1458, 1.442695
        %v1491 = vpow.pop %v1490
        %v1492 = vmul.f32 %v1459, 1.442695
        %v1493 = vpow.pop %v1492
        %v1494 = vmul.f32 %v1460, 1.442695
        %v1495 = vpow.pop %v1494
        %v1496 = vmul.f32 %v1461, 1.442695
        %v1497 = vpow.pop %v1496
        %v1498 = vmul.f32 %v1462, 1.442695
        %v1499 = vpow.pop %v1498
        %v1500 = vmul.f32 %v1463, 1.442695
        %v1501 = vpow.pop %v1500
        %v1502 = vmul.f32 %v1464, 1.442695
        %v1503 = vpow.pop %v1502
        %v1504 = vmul.f32 %v1465, 1.442695
        %v1505 = vpow.pop %v1504
        %v1506 = vmul.f32 %v1466, 1.442695
        %v1507 = vpow.pop %v1506
        %v1508 = vmul.f32 %v1467, 1.442695
        %v1509 = vpow.pop %v1508
        %v1510 = vmul.f32 %v1468, 1.442695
        %v1511 = vpow.pop %v1510
        %v1512 = vmul.f32 %v1469, 1.442695
        %v1513 = vpow.pop %v1512
        %v1514 = vmul.f32 %v1470, 1.442695
        %v1515 = vpow.pop %v1514
        %v1516 = vmul.f32 %v1471, 1.442695
        %v1517 = vpow.pop %v1516
        %v1518 = vmul.f32 %v1472, 1.442695
        %v1519 = vpow.pop %v1518
        %v1520 = vmul.f32 %v1473, 1.442695
        %v1521 = vpow.pop %v1520
        %v1522 = vmul.f32 %v1474, 1.442695
        %v1523 = vpow.pop %v1522
        %v1524 = vmul.f32 %v1475, 1.442695
        %v1525 = vpow.pop %v1524
        %v1526 = vmul.f32 %v1476, 1.442695
        %v1527 = vpow.pop %v1526
        %v1528 = vmul.f32 %v1477, 1.442695
        %v1529 = vpow.pop %v1528
        %v1530 = vmul.f32 %v1478, 1.442695
        %v1531 = vpow.pop %v1530
        %v1532 = vmul.f32 %v1479, 1.442695
        %v1533 = vpow.pop %v1532
        %v1534 = vmul.f32 %v1480, 1.442695
        %v1535 = vpow.pop %v1534
        %v1536 = vmul.f32 %v1481, 1.442695
        %v1537 = vpow.pop %v1536
        %v1538 = vmul.f32 %v1482, 1.442695
        %v1539 = vpow.pop %v1538
        %v1540 = vmul.f32 %v1483, 1.442695
        %v1541 = vpow.pop %v1540
        %v1542 = vmul.f32 %v1484, 1.442695
        %v1543 = vpow.pop %v1542
        %v1544 = vmul.f32 %v1485, 1.442695
        %v1545 = vpow.pop %v1544
        %v1546 = vmul.f32 %v1486, 1.442695
        %v1547 = vpow.pop %v1546
        %v1548 = vmul.f32 %v1487, 1.442695
        %v1549 = vpow.pop %v1548
        %v1550 = vmul.f32 %v1488, 1.442695
        %v1551 = vpow.pop %v1550
        %v1552 = vmul.f32 %v1489, 1.442695
        %v1553 = vpow.pop %v1552
        %v1554 = vsel %vm997, %v1491, 0.0
        %1555 = vadd.xlane.f32.xlu0 %v1554
        %v1556 = vpop.xlane.xlu0 %1555
        %v1557 = vsel %vm997, %v1493, 0.0
        %1558 = vadd.xlane.f32.xlu0 %v1557
        %v1559 = vpop.xlane.xlu0 %1558
        %v1560 = vsel %vm997, %v1495, 0.0
        %1561 = vadd.xlane.f32.xlu0 %v1560
        %v1562 = vpop.xlane.xlu0 %1561
        %v1563 = vsel %vm997, %v1497, 0.0
        %1564 = vadd.xlane.f32.xlu0 %v1563
        %v1565 = vpop.xlane.xlu0 %1564
        %v1566 = vsel %vm997, %v1499, 0.0
        %1567 = vadd.xlane.f32.xlu0 %v1566
        %v1568 = vpop.xlane.xlu0 %1567
        %v1569 = vsel %vm997, %v1501, 0.0
        %1570 = vadd.xlane.f32.xlu0 %v1569
        %v1571 = vpop.xlane.xlu0 %1570
        %v1572 = vsel %vm997, %v1503, 0.0
        %1573 = vadd.xlane.f32.xlu0 %v1572
        %v1574 = vpop.xlane.xlu0 %1573
        %v1575 = vsel %vm997, %v1505, 0.0
        %1576 = vadd.xlane.f32.xlu0 %v1575
        %v1577 = vpop.xlane.xlu0 %1576
        %v1578 = vsel %vm997, %v1507, 0.0
        %1579 = vadd.xlane.f32.xlu0 %v1578
        %v1580 = vpop.xlane.xlu0 %1579
        %v1581 = vsel %vm997, %v1509, 0.0
        %1582 = vadd.xlane.f32.xlu0 %v1581
        %v1583 = vpop.xlane.xlu0 %1582
        %v1584 = vsel %vm997, %v1511, 0.0
        %1585 = vadd.xlane.f32.xlu0 %v1584
        %v1586 = vpop.xlane.xlu0 %1585
        %v1587 = vsel %vm997, %v1513, 0.0
        %1588 = vadd.xlane.f32.xlu0 %v1587
        %v1589 = vpop.xlane.xlu0 %1588
        %v1590 = vsel %vm997, %v1515, 0.0
        %1591 = vadd.xlane.f32.xlu0 %v1590
        %v1592 = vpop.xlane.xlu0 %1591
        %v1593 = vsel %vm997, %v1517, 0.0
        %1594 = vadd.xlane.f32.xlu0 %v1593
        %v1595 = vpop.xlane.xlu0 %1594
        %v1596 = vsel %vm997, %v1519, 0.0
        %1597 = vadd.xlane.f32.xlu0 %v1596
        %v1598 = vpop.xlane.xlu0 %1597
        %v1599 = vsel %vm997, %v1521, 0.0
        %1600 = vadd.xlane.f32.xlu0 %v1599
        %v1601 = vpop.xlane.xlu0 %1600
        %v1602 = vsel %vm997, %v1523, 0.0
        %1603 = vadd.xlane.f32.xlu0 %v1602
        %v1604 = vpop.xlane.xlu0 %1603
        %v1605 = vsel %vm997, %v1525, 0.0
        %1606 = vadd.xlane.f32.xlu0 %v1605
        %v1607 = vpop.xlane.xlu0 %1606
        %v1608 = vsel %vm997, %v1527, 0.0
        %1609 = vadd.xlane.f32.xlu0 %v1608
        %v1610 = vpop.xlane.xlu0 %1609
        %v1611 = vsel %vm997, %v1529, 0.0
        %1612 = vadd.xlane.f32.xlu0 %v1611
        %v1613 = vpop.xlane.xlu0 %1612
        %v1614 = vsel %vm997, %v1531, 0.0
        %1615 = vadd.xlane.f32.xlu0 %v1614
        %v1616 = vpop.xlane.xlu0 %1615
        %v1617 = vsel %vm997, %v1533, 0.0
        %1618 = vadd.xlane.f32.xlu0 %v1617
        %v1619 = vpop.xlane.xlu0 %1618
        %v1620 = vsel %vm997, %v1535, 0.0
        %1621 = vadd.xlane.f32.xlu0 %v1620
        %v1622 = vpop.xlane.xlu0 %1621
        %v1623 = vsel %vm997, %v1537, 0.0
        %1624 = vadd.xlane.f32.xlu0 %v1623
        %v1625 = vpop.xlane.xlu0 %1624
        %v1626 = vsel %vm997, %v1539, 0.0
        %1627 = vadd.xlane.f32.xlu0 %v1626
        %v1628 = vpop.xlane.xlu0 %1627
        %v1629 = vsel %vm997, %v1541, 0.0
        %1630 = vadd.xlane.f32.xlu0 %v1629
        %v1631 = vpop.xlane.xlu0 %1630
        %v1632 = vsel %vm997, %v1543, 0.0
        %1633 = vadd.xlane.f32.xlu0 %v1632
        %v1634 = vpop.xlane.xlu0 %1633
        %v1635 = vsel %vm997, %v1545, 0.0
        %1636 = vadd.xlane.f32.xlu0 %v1635
        %v1637 = vpop.xlane.xlu0 %1636
        %v1638 = vsel %vm997, %v1547, 0.0
        %1639 = vadd.xlane.f32.xlu0 %v1638
        %v1640 = vpop.xlane.xlu0 %1639
        %v1641 = vsel %vm997, %v1549, 0.0
        %1642 = vadd.xlane.f32.xlu0 %v1641
        %v1643 = vpop.xlane.xlu0 %1642
        %v1644 = vsel %vm997, %v1551, 0.0
        %1645 = vadd.xlane.f32.xlu0 %v1644
        %v1646 = vpop.xlane.xlu0 %1645
        %v1647 = vsel %vm997, %v1553, 0.0
        %1648 = vadd.xlane.f32.xlu0 %v1647
        %v1649 = vpop.xlane.xlu0 %1648
        %v1650 = vrcp.pop %v1556
        %v1651 = vmul.f32 %v1556, %v1650
        %v1652 = vsub.f32 1.0, %v1651
        %v1653 = vmul.f32 %v1650, %v1652
        %v1654 = vadd.f32 %v1650, %v1653
        %vm1655 = vweird.f32 %v1556
        %vm1656 = vweird.f32 %v1650
        %vm1657 = vmor %vm1655, %vm1656
        %v1658 = vsel %vm1657, %v1650, %v1654
        %v1659 = vand.u32 2147483647, %v1556
        %vm1660 = vcmp.eq.f32.partialorder %v1659, 8.507059e+37
        %v1661 = vand.u32 %v1556, 2147483648
        %v1662 = vor.u32 1.1754944e-38, %v1661
        %v1663 = vsel %vm1660, %v1662, %v1658
        %v1664 = vrcp.pop %v1559
        %v1665 = vmul.f32 %v1559, %v1664
        %v1666 = vsub.f32 1.0, %v1665
        %v1667 = vmul.f32 %v1664, %v1666
        %v1668 = vadd.f32 %v1664, %v1667
        %vm1669 = vweird.f32 %v1559
        %vm1670 = vweird.f32 %v1664
        %vm1671 = vmor %vm1669, %vm1670
        %v1672 = vsel %vm1671, %v1664, %v1668
        %v1673 = vand.u32 2147483647, %v1559
        %vm1674 = vcmp.eq.f32.partialorder %v1673, 8.507059e+37
        %v1675 = vand.u32 %v1559, 2147483648
        %v1676 = vor.u32 1.1754944e-38, %v1675
        %v1677 = vsel %vm1674, %v1676, %v1672
        %v1678 = vrcp.pop %v1562
        %v1679 = vmul.f32 %v1562, %v1678
        %v1680 = vsub.f32 1.0, %v1679
        %v1681 = vmul.f32 %v1678, %v1680
        %v1682 = vadd.f32 %v1678, %v1681
        %vm1683 = vweird.f32 %v1562
        %vm1684 = vweird.f32 %v1678
        %vm1685 = vmor %vm1683, %vm1684
        %v1686 = vsel %vm1685, %v1678, %v1682
        %v1687 = vand.u32 2147483647, %v1562
        %vm1688 = vcmp.eq.f32.partialorder %v1687, 8.507059e+37
        %v1689 = vand.u32 %v1562, 2147483648
        %v1690 = vor.u32 1.1754944e-38, %v1689
        %v1691 = vsel %vm1688, %v1690, %v1686
        %v1692 = vrcp.pop %v1565
        %v1693 = vmul.f32 %v1565, %v1692
        %v1694 = vsub.f32 1.0, %v1693
        %v1695 = vmul.f32 %v1692, %v1694
        %v1696 = vadd.f32 %v1692, %v1695
        %vm1697 = vweird.f32 %v1565
        %vm1698 = vweird.f32 %v1692
        %vm1699 = vmor %vm1697, %vm1698
        %v1700 = vsel %vm1699, %v1692, %v1696
        %v1701 = vand.u32 2147483647, %v1565
        %vm1702 = vcmp.eq.f32.partialorder %v1701, 8.507059e+37
        %v1703 = vand.u32 %v1565, 2147483648
        %v1704 = vor.u32 1.1754944e-38, %v1703
        %v1705 = vsel %vm1702, %v1704, %v1700
        %v1706 = vrcp.pop %v1568
        %v1707 = vmul.f32 %v1568, %v1706
        %v1708 = vsub.f32 1.0, %v1707
        %v1709 = vmul.f32 %v1706, %v1708
        %v1710 = vadd.f32 %v1706, %v1709
        %vm1711 = vweird.f32 %v1568
        %vm1712 = vweird.f32 %v1706
        %vm1713 = vmor %vm1711, %vm1712
        %v1714 = vsel %vm1713, %v1706, %v1710
        %v1715 = vand.u32 2147483647, %v1568
        %vm1716 = vcmp.eq.f32.partialorder %v1715, 8.507059e+37
        %v1717 = vand.u32 %v1568, 2147483648
        %v1718 = vor.u32 1.1754944e-38, %v1717
        %v1719 = vsel %vm1716, %v1718, %v1714
        %v1720 = vrcp.pop %v1571
        %v1721 = vmul.f32 %v1571, %v1720
        %v1722 = vsub.f32 1.0, %v1721
        %v1723 = vmul.f32 %v1720, %v1722
        %v1724 = vadd.f32 %v1720, %v1723
        %vm1725 = vweird.f32 %v1571
        %vm1726 = vweird.f32 %v1720
        %vm1727 = vmor %vm1725, %vm1726
        %v1728 = vsel %vm1727, %v1720, %v1724
        %v1729 = vand.u32 2147483647, %v1571
        %vm1730 = vcmp.eq.f32.partialorder %v1729, 8.507059e+37
        %v1731 = vand.u32 %v1571, 2147483648
        %v1732 = vor.u32 1.1754944e-38, %v1731
        %v1733 = vsel %vm1730, %v1732, %v1728
        %v1734 = vrcp.pop %v1574
        %v1735 = vmul.f32 %v1574, %v1734
        %v1736 = vsub.f32 1.0, %v1735
        %v1737 = vmul.f32 %v1734, %v1736
        %v1738 = vadd.f32 %v1734, %v1737
        %vm1739 = vweird.f32 %v1574
        %vm1740 = vweird.f32 %v1734
        %vm1741 = vmor %vm1739, %vm1740
        %v1742 = vsel %vm1741, %v1734, %v1738
        %v1743 = vand.u32 2147483647, %v1574
        %vm1744 = vcmp.eq.f32.partialorder %v1743, 8.507059e+37
        %v1745 = vand.u32 %v1574, 2147483648
        %v1746 = vor.u32 1.1754944e-38, %v1745
        %v1747 = vsel %vm1744, %v1746, %v1742
        %v1748 = vrcp.pop %v1577
        %v1749 = vmul.f32 %v1577, %v1748
        %v1750 = vsub.f32 1.0, %v1749
        %v1751 = vmul.f32 %v1748, %v1750
        %v1752 = vadd.f32 %v1748, %v1751
        %vm1753 = vweird.f32 %v1577
        %vm1754 = vweird.f32 %v1748
        %vm1755 = vmor %vm1753, %vm1754
        %v1756 = vsel %vm1755, %v1748, %v1752
        %v1757 = vand.u32 2147483647, %v1577
        %vm1758 = vcmp.eq.f32.partialorder %v1757, 8.507059e+37
        %v1759 = vand.u32 %v1577, 2147483648
        %v1760 = vor.u32 1.1754944e-38, %v1759
        %v1761 = vsel %vm1758, %v1760, %v1756
        %v1762 = vrcp.pop %v1580
        %v1763 = vmul.f32 %v1580, %v1762
        %v1764 = vsub.f32 1.0, %v1763
        %v1765 = vmul.f32 %v1762, %v1764
        %v1766 = vadd.f32 %v1762, %v1765
        %vm1767 = vweird.f32 %v1580
        %vm1768 = vweird.f32 %v1762
        %vm1769 = vmor %vm1767, %vm1768
        %v1770 = vsel %vm1769, %v1762, %v1766
        %v1771 = vand.u32 2147483647, %v1580
        %vm1772 = vcmp.eq.f32.partialorder %v1771, 8.507059e+37
        %v1773 = vand.u32 %v1580, 2147483648
        %v1774 = vor.u32 1.1754944e-38, %v1773
        %v1775 = vsel %vm1772, %v1774, %v1770
        %v1776 = vrcp.pop %v1583
        %v1777 = vmul.f32 %v1583, %v1776
        %v1778 = vsub.f32 1.0, %v1777
        %v1779 = vmul.f32 %v1776, %v1778
        %v1780 = vadd.f32 %v1776, %v1779
        %vm1781 = vweird.f32 %v1583
        %vm1782 = vweird.f32 %v1776
        %vm1783 = vmor %vm1781, %vm1782
        %v1784 = vsel %vm1783, %v1776, %v1780
        %v1785 = vand.u32 2147483647, %v1583
        %vm1786 = vcmp.eq.f32.partialorder %v1785, 8.507059e+37
        %v1787 = vand.u32 %v1583, 2147483648
        %v1788 = vor.u32 1.1754944e-38, %v1787
        %v1789 = vsel %vm1786, %v1788, %v1784
        %v1790 = vrcp.pop %v1586
        %v1791 = vmul.f32 %v1586, %v1790
        %v1792 = vsub.f32 1.0, %v1791
        %v1793 = vmul.f32 %v1790, %v1792
        %v1794 = vadd.f32 %v1790, %v1793
        %vm1795 = vweird.f32 %v1586
        %vm1796 = vweird.f32 %v1790
        %vm1797 = vmor %vm1795, %vm1796
        %v1798 = vsel %vm1797, %v1790, %v1794
        %v1799 = vand.u32 2147483647, %v1586
        %vm1800 = vcmp.eq.f32.partialorder %v1799, 8.507059e+37
        %v1801 = vand.u32 %v1586, 2147483648
        %v1802 = vor.u32 1.1754944e-38, %v1801
        %v1803 = vsel %vm1800, %v1802, %v1798
        %v1804 = vrcp.pop %v1589
        %v1805 = vmul.f32 %v1589, %v1804
        %v1806 = vsub.f32 1.0, %v1805
        %v1807 = vmul.f32 %v1804, %v1806
        %v1808 = vadd.f32 %v1804, %v1807
        %vm1809 = vweird.f32 %v1589
        %vm1810 = vweird.f32 %v1804
        %vm1811 = vmor %vm1809, %vm1810
        %v1812 = vsel %vm1811, %v1804, %v1808
        %v1813 = vand.u32 2147483647, %v1589
        %vm1814 = vcmp.eq.f32.partialorder %v1813, 8.507059e+37
        %v1815 = vand.u32 %v1589, 2147483648
        %v1816 = vor.u32 1.1754944e-38, %v1815
        %v1817 = vsel %vm1814, %v1816, %v1812
        %v1818 = vrcp.pop %v1592
        %v1819 = vmul.f32 %v1592, %v1818
        %v1820 = vsub.f32 1.0, %v1819
        %v1821 = vmul.f32 %v1818, %v1820
        %v1822 = vadd.f32 %v1818, %v1821
        %vm1823 = vweird.f32 %v1592
        %vm1824 = vweird.f32 %v1818
        %vm1825 = vmor %vm1823, %vm1824
        %v1826 = vsel %vm1825, %v1818, %v1822
        %v1827 = vand.u32 2147483647, %v1592
        %vm1828 = vcmp.eq.f32.partialorder %v1827, 8.507059e+37
        %v1829 = vand.u32 %v1592, 2147483648
        %v1830 = vor.u32 1.1754944e-38, %v1829
        %v1831 = vsel %vm1828, %v1830, %v1826
        %v1832 = vrcp.pop %v1595
        %v1833 = vmul.f32 %v1595, %v1832
        %v1834 = vsub.f32 1.0, %v1833
        %v1835 = vmul.f32 %v1832, %v1834
        %v1836 = vadd.f32 %v1832, %v1835
        %vm1837 = vweird.f32 %v1595
        %vm1838 = vweird.f32 %v1832
        %vm1839 = vmor %vm1837, %vm1838
        %v1840 = vsel %vm1839, %v1832, %v1836
        %v1841 = vand.u32 2147483647, %v1595
        %vm1842 = vcmp.eq.f32.partialorder %v1841, 8.507059e+37
        %v1843 = vand.u32 %v1595, 2147483648
        %v1844 = vor.u32 1.1754944e-38, %v1843
        %v1845 = vsel %vm1842, %v1844, %v1840
        %v1846 = vrcp.pop %v1598
        %v1847 = vmul.f32 %v1598, %v1846
        %v1848 = vsub.f32 1.0, %v1847
        %v1849 = vmul.f32 %v1846, %v1848
        %v1850 = vadd.f32 %v1846, %v1849
        %vm1851 = vweird.f32 %v1598
        %vm1852 = vweird.f32 %v1846
        %vm1853 = vmor %vm1851, %vm1852
        %v1854 = vsel %vm1853, %v1846, %v1850
        %v1855 = vand.u32 2147483647, %v1598
        %vm1856 = vcmp.eq.f32.partialorder %v1855, 8.507059e+37
        %v1857 = vand.u32 %v1598, 2147483648
        %v1858 = vor.u32 1.1754944e-38, %v1857
        %v1859 = vsel %vm1856, %v1858, %v1854
        %v1860 = vrcp.pop %v1601
        %v1861 = vmul.f32 %v1601, %v1860
        %v1862 = vsub.f32 1.0, %v1861
        %v1863 = vmul.f32 %v1860, %v1862
        %v1864 = vadd.f32 %v1860, %v1863
        %vm1865 = vweird.f32 %v1601
        %vm1866 = vweird.f32 %v1860
        %vm1867 = vmor %vm1865, %vm1866
        %v1868 = vsel %vm1867, %v1860, %v1864
        %v1869 = vand.u32 2147483647, %v1601
        %vm1870 = vcmp.eq.f32.partialorder %v1869, 8.507059e+37
        %v1871 = vand.u32 %v1601, 2147483648
        %v1872 = vor.u32 1.1754944e-38, %v1871
        %v1873 = vsel %vm1870, %v1872, %v1868
        %v1874 = vrcp.pop %v1604
        %v1875 = vmul.f32 %v1604, %v1874
        %v1876 = vsub.f32 1.0, %v1875
        %v1877 = vmul.f32 %v1874, %v1876
        %v1878 = vadd.f32 %v1874, %v1877
        %vm1879 = vweird.f32 %v1604
        %vm1880 = vweird.f32 %v1874
        %vm1881 = vmor %vm1879, %vm1880
        %v1882 = vsel %vm1881, %v1874, %v1878
        %v1883 = vand.u32 2147483647, %v1604
        %vm1884 = vcmp.eq.f32.partialorder %v1883, 8.507059e+37
        %v1885 = vand.u32 %v1604, 2147483648
        %v1886 = vor.u32 1.1754944e-38, %v1885
        %v1887 = vsel %vm1884, %v1886, %v1882
        %v1888 = vrcp.pop %v1607
        %v1889 = vmul.f32 %v1607, %v1888
        %v1890 = vsub.f32 1.0, %v1889
        %v1891 = vmul.f32 %v1888, %v1890
        %v1892 = vadd.f32 %v1888, %v1891
        %vm1893 = vweird.f32 %v1607
        %vm1894 = vweird.f32 %v1888
        %vm1895 = vmor %vm1893, %vm1894
        %v1896 = vsel %vm1895, %v1888, %v1892
        %v1897 = vand.u32 2147483647, %v1607
        %vm1898 = vcmp.eq.f32.partialorder %v1897, 8.507059e+37
        %v1899 = vand.u32 %v1607, 2147483648
        %v1900 = vor.u32 1.1754944e-38, %v1899
        %v1901 = vsel %vm1898, %v1900, %v1896
        %v1902 = vrcp.pop %v1610
        %v1903 = vmul.f32 %v1610, %v1902
        %v1904 = vsub.f32 1.0, %v1903
        %v1905 = vmul.f32 %v1902, %v1904
        %v1906 = vadd.f32 %v1902, %v1905
        %vm1907 = vweird.f32 %v1610
        %vm1908 = vweird.f32 %v1902
        %vm1909 = vmor %vm1907, %vm1908
        %v1910 = vsel %vm1909, %v1902, %v1906
        %v1911 = vand.u32 2147483647, %v1610
        %vm1912 = vcmp.eq.f32.partialorder %v1911, 8.507059e+37
        %v1913 = vand.u32 %v1610, 2147483648
        %v1914 = vor.u32 1.1754944e-38, %v1913
        %v1915 = vsel %vm1912, %v1914, %v1910
        %v1916 = vrcp.pop %v1613
        %v1917 = vmul.f32 %v1613, %v1916
        %v1918 = vsub.f32 1.0, %v1917
        %v1919 = vmul.f32 %v1916, %v1918
        %v1920 = vadd.f32 %v1916, %v1919
        %vm1921 = vweird.f32 %v1613
        %vm1922 = vweird.f32 %v1916
        %vm1923 = vmor %vm1921, %vm1922
        %v1924 = vsel %vm1923, %v1916, %v1920
        %v1925 = vand.u32 2147483647, %v1613
        %vm1926 = vcmp.eq.f32.partialorder %v1925, 8.507059e+37
        %v1927 = vand.u32 %v1613, 2147483648
        %v1928 = vor.u32 1.1754944e-38, %v1927
        %v1929 = vsel %vm1926, %v1928, %v1924
        %v1930 = vrcp.pop %v1616
        %v1931 = vmul.f32 %v1616, %v1930
        %v1932 = vsub.f32 1.0, %v1931
        %v1933 = vmul.f32 %v1930, %v1932
        %v1934 = vadd.f32 %v1930, %v1933
        %vm1935 = vweird.f32 %v1616
        %vm1936 = vweird.f32 %v1930
        %vm1937 = vmor %vm1935, %vm1936
        %v1938 = vsel %vm1937, %v1930, %v1934
        %v1939 = vand.u32 2147483647, %v1616
        %vm1940 = vcmp.eq.f32.partialorder %v1939, 8.507059e+37
        %v1941 = vand.u32 %v1616, 2147483648
        %v1942 = vor.u32 1.1754944e-38, %v1941
        %v1943 = vsel %vm1940, %v1942, %v1938
        %v1944 = vrcp.pop %v1619
        %v1945 = vmul.f32 %v1619, %v1944
        %v1946 = vsub.f32 1.0, %v1945
        %v1947 = vmul.f32 %v1944, %v1946
        %v1948 = vadd.f32 %v1944, %v1947
        %vm1949 = vweird.f32 %v1619
        %vm1950 = vweird.f32 %v1944
        %vm1951 = vmor %vm1949, %vm1950
        %v1952 = vsel %vm1951, %v1944, %v1948
        %v1953 = vand.u32 2147483647, %v1619
        %vm1954 = vcmp.eq.f32.partialorder %v1953, 8.507059e+37
        %v1955 = vand.u32 %v1619, 2147483648
        %v1956 = vor.u32 1.1754944e-38, %v1955
        %v1957 = vsel %vm1954, %v1956, %v1952
        %v1958 = vrcp.pop %v1622
        %v1959 = vmul.f32 %v1622, %v1958
        %v1960 = vsub.f32 1.0, %v1959
        %v1961 = vmul.f32 %v1958, %v1960
        %v1962 = vadd.f32 %v1958, %v1961
        %vm1963 = vweird.f32 %v1622
        %vm1964 = vweird.f32 %v1958
        %vm1965 = vmor %vm1963, %vm1964
        %v1966 = vsel %vm1965, %v1958, %v1962
        %v1967 = vand.u32 2147483647, %v1622
        %vm1968 = vcmp.eq.f32.partialorder %v1967, 8.507059e+37
        %v1969 = vand.u32 %v1622, 2147483648
        %v1970 = vor.u32 1.1754944e-38, %v1969
        %v1971 = vsel %vm1968, %v1970, %v1966
        %v1972 = vrcp.pop %v1625
        %v1973 = vmul.f32 %v1625, %v1972
        %v1974 = vsub.f32 1.0, %v1973
        %v1975 = vmul.f32 %v1972, %v1974
        %v1976 = vadd.f32 %v1972, %v1975
        %vm1977 = vweird.f32 %v1625
        %vm1978 = vweird.f32 %v1972
        %vm1979 = vmor %vm1977, %vm1978
        %v1980 = vsel %vm1979, %v1972, %v1976
        %v1981 = vand.u32 2147483647, %v1625
        %vm1982 = vcmp.eq.f32.partialorder %v1981, 8.507059e+37
        %v1983 = vand.u32 %v1625, 2147483648
        %v1984 = vor.u32 1.1754944e-38, %v1983
        %v1985 = vsel %vm1982, %v1984, %v1980
        %v1986 = vrcp.pop %v1628
        %v1987 = vmul.f32 %v1628, %v1986
        %v1988 = vsub.f32 1.0, %v1987
        %v1989 = vmul.f32 %v1986, %v1988
        %v1990 = vadd.f32 %v1986, %v1989
        %vm1991 = vweird.f32 %v1628
        %vm1992 = vweird.f32 %v1986
        %vm1993 = vmor %vm1991, %vm1992
        %v1994 = vsel %vm1993, %v1986, %v1990
        %v1995 = vand.u32 2147483647, %v1628
        %vm1996 = vcmp.eq.f32.partialorder %v1995, 8.507059e+37
        %v1997 = vand.u32 %v1628, 2147483648
        %v1998 = vor.u32 1.1754944e-38, %v1997
        %v1999 = vsel %vm1996, %v1998, %v1994
        %v2000 = vrcp.pop %v1631
        %v2001 = vmul.f32 %v1631, %v2000
        %v2002 = vsub.f32 1.0, %v2001
        %v2003 = vmul.f32 %v2000, %v2002
        %v2004 = vadd.f32 %v2000, %v2003
        %vm2005 = vweird.f32 %v1631
        %vm2006 = vweird.f32 %v2000
        %vm2007 = vmor %vm2005, %vm2006
        %v2008 = vsel %vm2007, %v2000, %v2004
        %v2009 = vand.u32 2147483647, %v1631
        %vm2010 = vcmp.eq.f32.partialorder %v2009, 8.507059e+37
        %v2011 = vand.u32 %v1631, 2147483648
        %v2012 = vor.u32 1.1754944e-38, %v2011
        %v2013 = vsel %vm2010, %v2012, %v2008
        %v2014 = vrcp.pop %v1634
        %v2015 = vmul.f32 %v1634, %v2014
        %v2016 = vsub.f32 1.0, %v2015
        %v2017 = vmul.f32 %v2014, %v2016
        %v2018 = vadd.f32 %v2014, %v2017
        %vm2019 = vweird.f32 %v1634
        %vm2020 = vweird.f32 %v2014
        %vm2021 = vmor %vm2019, %vm2020
        %v2022 = vsel %vm2021, %v2014, %v2018
        %v2023 = vand.u32 2147483647, %v1634
        %vm2024 = vcmp.eq.f32.partialorder %v2023, 8.507059e+37
        %v2025 = vand.u32 %v1634, 2147483648
        %v2026 = vor.u32 1.1754944e-38, %v2025
        %v2027 = vsel %vm2024, %v2026, %v2022
        %v2028 = vrcp.pop %v1637
        %v2029 = vmul.f32 %v1637, %v2028
        %v2030 = vsub.f32 1.0, %v2029
        %v2031 = vmul.f32 %v2028, %v2030
        %v2032 = vadd.f32 %v2028, %v2031
        %vm2033 = vweird.f32 %v1637
        %vm2034 = vweird.f32 %v2028
        %vm2035 = vmor %vm2033, %vm2034
        %v2036 = vsel %vm2035, %v2028, %v2032
        %v2037 = vand.u32 2147483647, %v1637
        %vm2038 = vcmp.eq.f32.partialorder %v2037, 8.507059e+37
        %v2039 = vand.u32 %v1637, 2147483648
        %v2040 = vor.u32 1.1754944e-38, %v2039
        %v2041 = vsel %vm2038, %v2040, %v2036
        %v2042 = vrcp.pop %v1640
        %v2043 = vmul.f32 %v1640, %v2042
        %v2044 = vsub.f32 1.0, %v2043
        %v2045 = vmul.f32 %v2042, %v2044
        %v2046 = vadd.f32 %v2042, %v2045
        %vm2047 = vweird.f32 %v1640
        %vm2048 = vweird.f32 %v2042
        %vm2049 = vmor %vm2047, %vm2048
        %v2050 = vsel %vm2049, %v2042, %v2046
        %v2051 = vand.u32 2147483647, %v1640
        %vm2052 = vcmp.eq.f32.partialorder %v2051, 8.507059e+37
        %v2053 = vand.u32 %v1640, 2147483648
        %v2054 = vor.u32 1.1754944e-38, %v2053
        %v2055 = vsel %vm2052, %v2054, %v2050
        %v2056 = vrcp.pop %v1643
        %v2057 = vmul.f32 %v1643, %v2056
        %v2058 = vsub.f32 1.0, %v2057
        %v2059 = vmul.f32 %v2056, %v2058
        %v2060 = vadd.f32 %v2056, %v2059
        %vm2061 = vweird.f32 %v1643
        %vm2062 = vweird.f32 %v2056
        %vm2063 = vmor %vm2061, %vm2062
        %v2064 = vsel %vm2063, %v2056, %v2060
        %v2065 = vand.u32 2147483647, %v1643
        %vm2066 = vcmp.eq.f32.partialorder %v2065, 8.507059e+37
        %v2067 = vand.u32 %v1643, 2147483648
        %v2068 = vor.u32 1.1754944e-38, %v2067
        %v2069 = vsel %vm2066, %v2068, %v2064
        %v2070 = vrcp.pop %v1646
        %v2071 = vmul.f32 %v1646, %v2070
        %v2072 = vsub.f32 1.0, %v2071
        %v2073 = vmul.f32 %v2070, %v2072
        %v2074 = vadd.f32 %v2070, %v2073
        %vm2075 = vweird.f32 %v1646
        %vm2076 = vweird.f32 %v2070
        %vm2077 = vmor %vm2075, %vm2076
        %v2078 = vsel %vm2077, %v2070, %v2074
        %v2079 = vand.u32 2147483647, %v1646
        %vm2080 = vcmp.eq.f32.partialorder %v2079, 8.507059e+37
        %v2081 = vand.u32 %v1646, 2147483648
        %v2082 = vor.u32 1.1754944e-38, %v2081
        %v2083 = vsel %vm2080, %v2082, %v2078
        %v2084 = vrcp.pop %v1649
        %v2085 = vmul.f32 %v1649, %v2084
        %v2086 = vsub.f32 1.0, %v2085
        %v2087 = vmul.f32 %v2084, %v2086
        %v2088 = vadd.f32 %v2084, %v2087
        %vm2089 = vweird.f32 %v1649
        %vm2090 = vweird.f32 %v2084
        %vm2091 = vmor %vm2089, %vm2090
        %v2092 = vsel %vm2091, %v2084, %v2088
        %v2093 = vand.u32 2147483647, %v1649
        %vm2094 = vcmp.eq.f32.partialorder %v2093, 8.507059e+37
        %v2095 = vand.u32 %v1649, 2147483648
        %v2096 = vor.u32 1.1754944e-38, %v2095
        %v2097 = vsel %vm2094, %v2096, %v2092
        %s2098 = sld [smem:[#allocation2]]
        %v2099 = vstv %s2098
        %v2100 = vmul.f32 %v2099, %v1663
        %v2101 = vmul.f32 %v2099, %v1677
        %v2102 = vmul.f32 %v2099, %v1691
        %v2103 = vmul.f32 %v2099, %v1705
        %v2104 = vmul.f32 %v2099, %v1719
        %v2105 = vmul.f32 %v2099, %v1733
        %v2106 = vmul.f32 %v2099, %v1747
        %v2107 = vmul.f32 %v2099, %v1761
        %v2108 = vmul.f32 %v2099, %v1775
        %v2109 = vmul.f32 %v2099, %v1789
        %v2110 = vmul.f32 %v2099, %v1803
        %v2111 = vmul.f32 %v2099, %v1817
        %v2112 = vmul.f32 %v2099, %v1831
        %v2113 = vmul.f32 %v2099, %v1845
        %v2114 = vmul.f32 %v2099, %v1859
        %v2115 = vmul.f32 %v2099, %v1873
        %v2116 = vmul.f32 %v2099, %v1887
        %v2117 = vmul.f32 %v2099, %v1901
        %v2118 = vmul.f32 %v2099, %v1915
        %v2119 = vmul.f32 %v2099, %v1929
        %v2120 = vmul.f32 %v2099, %v1943
        %v2121 = vmul.f32 %v2099, %v1957
        %v2122 = vmul.f32 %v2099, %v1971
        %v2123 = vmul.f32 %v2099, %v1985
        %v2124 = vmul.f32 %v2099, %v1999
        %v2125 = vmul.f32 %v2099, %v2013
        %v2126 = vmul.f32 %v2099, %v2027
        %v2127 = vmul.f32 %v2099, %v2041
        %v2128 = vmul.f32 %v2099, %v2055
        %v2129 = vmul.f32 %v2099, %v2069
        %v2130 = vmul.f32 %v2099, %v2083
        %v2131 = vmul.f32 %v2099, %v2097
        %v2132 = vmul.f32 %v1491, %v2100
        %v2133 = vmul.f32 %v1493, %v2101
        %v2134 = vmul.f32 %v1495, %v2102
        %v2135 = vmul.f32 %v1497, %v2103
        %v2136 = vmul.f32 %v1499, %v2104
        %v2137 = vmul.f32 %v1501, %v2105
        %v2138 = vmul.f32 %v1503, %v2106
        %v2139 = vmul.f32 %v1505, %v2107
        %v2140 = vmul.f32 %v1507, %v2108
        %v2141 = vmul.f32 %v1509, %v2109
        %v2142 = vmul.f32 %v1511, %v2110
        %v2143 = vmul.f32 %v1513, %v2111
        %v2144 = vmul.f32 %v1515, %v2112
        %v2145 = vmul.f32 %v1517, %v2113
        %v2146 = vmul.f32 %v1519, %v2114
        %v2147 = vmul.f32 %v1521, %v2115
        %v2148 = vmul.f32 %v1523, %v2116
        %v2149 = vmul.f32 %v1525, %v2117
        %v2150 = vmul.f32 %v1527, %v2118
        %v2151 = vmul.f32 %v1529, %v2119
        %v2152 = vmul.f32 %v1531, %v2120
        %v2153 = vmul.f32 %v1533, %v2121
        %v2154 = vmul.f32 %v1535, %v2122
        %v2155 = vmul.f32 %v1537, %v2123
        %v2156 = vmul.f32 %v1539, %v2124
        %v2157 = vmul.f32 %v1541, %v2125
        %v2158 = vmul.f32 %v1543, %v2126
        %v2159 = vmul.f32 %v1545, %v2127
        %v2160 = vmul.f32 %v1547, %v2128
        %v2161 = vmul.f32 %v1549, %v2129
        %v2162 = vmul.f32 %v1551, %v2130
        %v2163 = vmul.f32 %v1553, %v2131
        %v2164 = vld [vmem:[%s3] sm:$0xff]
        %v2165 = vld [vmem:[%s3 + $0x8] sm:$0xff]
        %v2166 = vld [vmem:[%s3 + $0x10] sm:$0xff]
        %v2167 = vld [vmem:[%s3 + $0x18] sm:$0xff]
        %v2168 = vld [vmem:[%s3 + $0x20] sm:$0xff]
        %v2169 = vld [vmem:[%s3 + $0x28] sm:$0xff]
        %v2170 = vld [vmem:[%s3 + $0x30] sm:$0xff]
        %v2171 = vld [vmem:[%s3 + $0x38] sm:$0xff]
        %v2172 = vld [vmem:[%s5] sm:$0xff]
        %v2173 = vld [vmem:[%s5 + $0x8] sm:$0xff]
        %v2174 = vld [vmem:[%s5 + $0x10] sm:$0xff]
        %v2175 = vld [vmem:[%s5 + $0x18] sm:$0xff]
        %v2176 = vld [vmem:[%s5 + $0x20] sm:$0xff]
        %v2177 = vld [vmem:[%s5 + $0x28] sm:$0xff]
        %v2178 = vld [vmem:[%s5 + $0x30] sm:$0xff]
        %v2179 = vld [vmem:[%s5 + $0x38] sm:$0xff]
        %v2180 = vld [vmem:[%s256] sm:$0xff]
        %v2181 = vld [vmem:[%s256 + $0x8] sm:$0xff]
        %v2182 = vld [vmem:[%s256 + $0x10] sm:$0xff]
        %v2183 = vld [vmem:[%s256 + $0x18] sm:$0xff]
        %v2184 = vld [vmem:[%s256 + $0x20] sm:$0xff]
        %v2185 = vld [vmem:[%s256 + $0x28] sm:$0xff]
        %v2186 = vld [vmem:[%s256 + $0x30] sm:$0xff]
        %v2187 = vld [vmem:[%s256 + $0x38] sm:$0xff]
        %v2188 = vld [vmem:[%s256 + $0x40] sm:$0xff]
        %v2189 = vld [vmem:[%s256 + $0x48] sm:$0xff]
        %v2190 = vld [vmem:[%s256 + $0x50] sm:$0xff]
        %v2191 = vld [vmem:[%s256 + $0x58] sm:$0xff]
        %v2192 = vld [vmem:[%s256 + $0x60] sm:$0xff]
        %v2193 = vld [vmem:[%s256 + $0x68] sm:$0xff]
        %v2194 = vld [vmem:[%s256 + $0x70] sm:$0xff]
        %v2195 = vld [vmem:[%s256 + $0x78] sm:$0xff]
        %v2196 = vld [vmem:[%s256 + $0x80] sm:$0xff]
        %v2197 = vld [vmem:[%s256 + $0x88] sm:$0xff]
        %v2198 = vld [vmem:[%s256 + $0x90] sm:$0xff]
        %v2199 = vld [vmem:[%s256 + $0x98] sm:$0xff]
        %v2200 = vld [vmem:[%s256 + $0xa0] sm:$0xff]
        %v2201 = vld [vmem:[%s256 + $0xa8] sm:$0xff]
        %v2202 = vld [vmem:[%s256 + $0xb0] sm:$0xff]
        %v2203 = vld [vmem:[%s256 + $0xb8] sm:$0xff]
        %v2204 = vld [vmem:[%s256 + $0xc0] sm:$0xff]
        %v2205 = vld [vmem:[%s256 + $0xc8] sm:$0xff]
        %v2206 = vld [vmem:[%s256 + $0xd0] sm:$0xff]
        %v2207 = vld [vmem:[%s256 + $0xd8] sm:$0xff]
        %v2208 = vld [vmem:[%s256 + $0xe0] sm:$0xff]
        %v2209 = vld [vmem:[%s256 + $0xe8] sm:$0xff]
        %v2210 = vld [vmem:[%s256 + $0xf0] sm:$0xff]
        %v2211 = vld [vmem:[%s256 + $0xf8] sm:$0xff]
        %2213 = vset.pattern.permute.xlu0 0
        %2214 = vperm.xlu0 %2213, %v2172
        %v2215 = vpop.permute.xlu0 %2214
        %2218 = vset.pattern.permute.xlu0 0
        %2219 = vperm.xlu0 %2218, %v2173
        %v2220 = vpop.permute.xlu0 %2219
        %2223 = vset.pattern.permute.xlu0 0
        %2224 = vperm.xlu0 %2223, %v2174
        %v2225 = vpop.permute.xlu0 %2224
        %2228 = vset.pattern.permute.xlu0 0
        %2229 = vperm.xlu0 %2228, %v2175
        %v2230 = vpop.permute.xlu0 %2229
        %2233 = vset.pattern.permute.xlu0 0
        %2234 = vperm.xlu0 %2233, %v2176
        %v2235 = vpop.permute.xlu0 %2234
        %2238 = vset.pattern.permute.xlu0 0
        %2239 = vperm.xlu0 %2238, %v2177
        %v2240 = vpop.permute.xlu0 %2239
        %2243 = vset.pattern.permute.xlu0 0
        %2244 = vperm.xlu0 %2243, %v2178
        %v2245 = vpop.permute.xlu0 %2244
        %2248 = vset.pattern.permute.xlu0 0
        %2249 = vperm.xlu0 %2248, %v2179
        %v2250 = vpop.permute.xlu0 %2249
        %v2253 = vsel %vm997, %v2164, 0
        %v2256 = vsel %vm997, %v2165, 0
        %v2259 = vsel %vm997, %v2166, 0
        %v2262 = vsel %vm997, %v2167, 0
        %v2265 = vsel %vm997, %v2168, 0
        %v2268 = vsel %vm997, %v2169, 0
        %v2271 = vsel %vm997, %v2170, 0
        %v2274 = vsel %vm997, %v2171, 0
        %2276 = vmatpush.msra.mxu0 0.0
        %2277 = vmatpush.msra.mxu0 0.0
        %2278 = vmatpush.msra.mxu0 0.0
        %2279 = vmatpush.msra.mxu0 0.0
        %2280 = vmatpush.msra.mxu0 0.0
        %2281 = vmatpush.msra.mxu0 0.0
        %2282 = vmatpush.msra.mxu0 0.0
        %2283 = vmatpush.msra.mxu0 0.0
        %2284 = vmatpush.msra.mxu0 %v2208
        %2285 = vmatpush.msra.mxu0 %v2204
        %2286 = vmatpush.msra.mxu0 %v2200
        %2287 = vmatpush.msra.mxu0 %v2196
        %2288 = vmatpush.msra.mxu0 %v2192
        %2289 = vmatpush.msra.mxu0 %v2188
        %2290 = vmatpush.msra.mxu0 %v2184
        %2291 = vmatpush.msra.mxu0 %v2180
        %2292 = vmatmul.f32.gmra.mxu0 %v2253
        %v2293 = vpop.f32.mrf.mxu0
        %v2294 = vadd.f32 %v2215, %v2293
        %2295 = vmatmul.f32.gmra.mxu0 %v2256
        %v2296 = vpop.f32.mrf.mxu0
        %v2297 = vadd.f32 %v2220, %v2296
        %2298 = vmatmul.f32.gmra.mxu0 %v2259
        %v2299 = vpop.f32.mrf.mxu0
        %v2300 = vadd.f32 %v2225, %v2299
        %2301 = vmatmul.f32.gmra.mxu0 %v2262
        %v2302 = vpop.f32.mrf.mxu0
        %v2303 = vadd.f32 %v2230, %v2302
        %2304 = vmatmul.f32.gmra.mxu0 %v2265
        %v2305 = vpop.f32.mrf.mxu0
        %v2306 = vadd.f32 %v2235, %v2305
        %2307 = vmatmul.f32.gmra.mxu0 %v2268
        %v2308 = vpop.f32.mrf.mxu0
        %v2309 = vadd.f32 %v2240, %v2308
        %2310 = vmatmul.f32.gmra.mxu0 %v2271
        %v2311 = vpop.f32.mrf.mxu0
        %v2312 = vadd.f32 %v2245, %v2311
        %2313 = vmatmul.f32.gmra.mxu0 %v2274
        %v2314 = vpop.f32.mrf.mxu0
        %v2315 = vadd.f32 %v2250, %v2314
        %2316 = vdwg.mxu0
        %2317 = vmatpush.msra.mxu0 0.0
        %2318 = vmatpush.msra.mxu0 0.0
        %2319 = vmatpush.msra.mxu0 0.0
        %2320 = vmatpush.msra.mxu0 0.0
        %2321 = vmatpush.msra.mxu0 0.0
        %2322 = vmatpush.msra.mxu0 0.0
        %2323 = vmatpush.msra.mxu0 0.0
        %2324 = vmatpush.msra.mxu0 0.0
        %2325 = vmatpush.msra.mxu0 %v2209
        %2326 = vmatpush.msra.mxu0 %v2205
        %2327 = vmatpush.msra.mxu0 %v2201
        %2328 = vmatpush.msra.mxu0 %v2197
        %2329 = vmatpush.msra.mxu0 %v2193
        %2330 = vmatpush.msra.mxu0 %v2189
        %2331 = vmatpush.msra.mxu0 %v2185
        %2332 = vmatpush.msra.mxu0 %v2181
        %2333 = vmatmul.f32.gmra.mxu0 %v2253
        %v2334 = vpop.f32.mrf.mxu0
        %v2335 = vadd.f32 %v2215, %v2334
        %2336 = vmatmul.f32.gmra.mxu0 %v2256
        %v2337 = vpop.f32.mrf.mxu0
        %v2338 = vadd.f32 %v2220, %v2337
        %2339 = vmatmul.f32.gmra.mxu0 %v2259
        %v2340 = vpop.f32.mrf.mxu0
        %v2341 = vadd.f32 %v2225, %v2340
        %2342 = vmatmul.f32.gmra.mxu0 %v2262
        %v2343 = vpop.f32.mrf.mxu0
        %v2344 = vadd.f32 %v2230, %v2343
        %2345 = vmatmul.f32.gmra.mxu0 %v2265
        %v2346 = vpop.f32.mrf.mxu0
        %v2347 = vadd.f32 %v2235, %v2346
        %2348 = vmatmul.f32.gmra.mxu0 %v2268
        %v2349 = vpop.f32.mrf.mxu0
        %v2350 = vadd.f32 %v2240, %v2349
        %2351 = vmatmul.f32.gmra.mxu0 %v2271
        %v2352 = vpop.f32.mrf.mxu0
        %v2353 = vadd.f32 %v2245, %v2352
        %2354 = vmatmul.f32.gmra.mxu0 %v2274
        %v2355 = vpop.f32.mrf.mxu0
        %v2356 = vadd.f32 %v2250, %v2355
        %2357 = vdwg.mxu0
        %2358 = vmatpush.msra.mxu0 0.0
        %2359 = vmatpush.msra.mxu0 0.0
        %2360 = vmatpush.msra.mxu0 0.0
        %2361 = vmatpush.msra.mxu0 0.0
        %2362 = vmatpush.msra.mxu0 0.0
        %2363 = vmatpush.msra.mxu0 0.0
        %2364 = vmatpush.msra.mxu0 0.0
        %2365 = vmatpush.msra.mxu0 0.0
        %2366 = vmatpush.msra.mxu0 %v2210
        %2367 = vmatpush.msra.mxu0 %v2206
        %2368 = vmatpush.msra.mxu0 %v2202
        %2369 = vmatpush.msra.mxu0 %v2198
        %2370 = vmatpush.msra.mxu0 %v2194
        %2371 = vmatpush.msra.mxu0 %v2190
        %2372 = vmatpush.msra.mxu0 %v2186
        %2373 = vmatpush.msra.mxu0 %v2182
        %2374 = vmatmul.f32.gmra.mxu0 %v2253
        %v2375 = vpop.f32.mrf.mxu0
        %v2376 = vadd.f32 %v2215, %v2375
        %2377 = vmatmul.f32.gmra.mxu0 %v2256
        %v2378 = vpop.f32.mrf.mxu0
        %v2379 = vadd.f32 %v2220, %v2378
        %2380 = vmatmul.f32.gmra.mxu0 %v2259
        %v2381 = vpop.f32.mrf.mxu0
        %v2382 = vadd.f32 %v2225, %v2381
        %2383 = vmatmul.f32.gmra.mxu0 %v2262
        %v2384 = vpop.f32.mrf.mxu0
        %v2385 = vadd.f32 %v2230, %v2384
        %2386 = vmatmul.f32.gmra.mxu0 %v2265
        %v2387 = vpop.f32.mrf.mxu0
        %v2388 = vadd.f32 %v2235, %v2387
        %2389 = vmatmul.f32.gmra.mxu0 %v2268
        %v2390 = vpop.f32.mrf.mxu0
        %v2391 = vadd.f32 %v2240, %v2390
        %2392 = vmatmul.f32.gmra.mxu0 %v2271
        %v2393 = vpop.f32.mrf.mxu0
        %v2394 = vadd.f32 %v2245, %v2393
        %2395 = vmatmul.f32.gmra.mxu0 %v2274
        %v2396 = vpop.f32.mrf.mxu0
        %v2397 = vadd.f32 %v2250, %v2396
        %2398 = vdwg.mxu0
        %2399 = vmatpush.msra.mxu0 0.0
        %2400 = vmatpush.msra.mxu0 0.0
        %2401 = vmatpush.msra.mxu0 0.0
        %2402 = vmatpush.msra.mxu0 0.0
        %2403 = vmatpush.msra.mxu0 0.0
        %2404 = vmatpush.msra.mxu0 0.0
        %2405 = vmatpush.msra.mxu0 0.0
        %2406 = vmatpush.msra.mxu0 0.0
        %2407 = vmatpush.msra.mxu0 %v2211
        %2408 = vmatpush.msra.mxu0 %v2207
        %2409 = vmatpush.msra.mxu0 %v2203
        %2410 = vmatpush.msra.mxu0 %v2199
        %2411 = vmatpush.msra.mxu0 %v2195
        %2412 = vmatpush.msra.mxu0 %v2191
        %2413 = vmatpush.msra.mxu0 %v2187
        %2414 = vmatpush.msra.mxu0 %v2183
        %2415 = vmatmul.f32.gmra.mxu0 %v2253
        %v2416 = vpop.f32.mrf.mxu0
        %v2417 = vadd.f32 %v2215, %v2416
        %2418 = vmatmul.f32.gmra.mxu0 %v2256
        %v2419 = vpop.f32.mrf.mxu0
        %v2420 = vadd.f32 %v2220, %v2419
        %2421 = vmatmul.f32.gmra.mxu0 %v2259
        %v2422 = vpop.f32.mrf.mxu0
        %v2423 = vadd.f32 %v2225, %v2422
        %2424 = vmatmul.f32.gmra.mxu0 %v2262
        %v2425 = vpop.f32.mrf.mxu0
        %v2426 = vadd.f32 %v2230, %v2425
        %2427 = vmatmul.f32.gmra.mxu0 %v2265
        %v2428 = vpop.f32.mrf.mxu0
        %v2429 = vadd.f32 %v2235, %v2428
        %2430 = vmatmul.f32.gmra.mxu0 %v2268
        %v2431 = vpop.f32.mrf.mxu0
        %v2432 = vadd.f32 %v2240, %v2431
        %2433 = vmatmul.f32.gmra.mxu0 %v2271
        %v2434 = vpop.f32.mrf.mxu0
        %v2435 = vadd.f32 %v2245, %v2434
        %2436 = vmatmul.f32.gmra.mxu0 %v2274
        %v2437 = vpop.f32.mrf.mxu0
        %v2438 = vadd.f32 %v2250, %v2437
        %2439 = vdwg.mxu0
        %v2440 = vmax.f32 %v2294, 0.0
        %v2441 = vmax.f32 %v2335, 0.0
        %v2442 = vmax.f32 %v2376, 0.0
        %v2443 = vmax.f32 %v2417, 0.0
        %v2444 = vmax.f32 %v2297, 0.0
        %v2445 = vmax.f32 %v2338, 0.0
        %v2446 = vmax.f32 %v2379, 0.0
        %v2447 = vmax.f32 %v2420, 0.0
        %v2448 = vmax.f32 %v2300, 0.0
        %v2449 = vmax.f32 %v2341, 0.0
        %v2450 = vmax.f32 %v2382, 0.0
        %v2451 = vmax.f32 %v2423, 0.0
        %v2452 = vmax.f32 %v2303, 0.0
        %v2453 = vmax.f32 %v2344, 0.0
        %v2454 = vmax.f32 %v2385, 0.0
        %v2455 = vmax.f32 %v2426, 0.0
        %v2456 = vmax.f32 %v2306, 0.0
        %v2457 = vmax.f32 %v2347, 0.0
        %v2458 = vmax.f32 %v2388, 0.0
        %v2459 = vmax.f32 %v2429, 0.0
        %v2460 = vmax.f32 %v2309, 0.0
        %v2461 = vmax.f32 %v2350, 0.0
        %v2462 = vmax.f32 %v2391, 0.0
        %v2463 = vmax.f32 %v2432, 0.0
        %v2464 = vmax.f32 %v2312, 0.0
        %v2465 = vmax.f32 %v2353, 0.0
        %v2466 = vmax.f32 %v2394, 0.0
        %v2467 = vmax.f32 %v2435, 0.0
        %v2468 = vmax.f32 %v2315, 0.0
        %v2469 = vmax.f32 %v2356, 0.0
        %v2470 = vmax.f32 %v2397, 0.0
        %v2471 = vmax.f32 %v2438, 0.0
        %v2473 = vsel %vm997, %v2132, 0
        %v2476 = vsel %vm997, %v2133, 0
        %v2479 = vsel %vm997, %v2134, 0
        %v2482 = vsel %vm997, %v2135, 0
        %v2485 = vsel %vm997, %v2136, 0
        %v2488 = vsel %vm997, %v2137, 0
        %v2491 = vsel %vm997, %v2138, 0
        %v2494 = vsel %vm997, %v2139, 0
        %2496 = vmatpush.msra.mxu0 0.0
        %2497 = vmatpush.msra.mxu0 0.0
        %2498 = vmatpush.msra.mxu0 0.0
        %2499 = vmatpush.msra.mxu0 0.0
        %2500 = vmatpush.msra.mxu0 0.0
        %2501 = vmatpush.msra.mxu0 0.0
        %2502 = vmatpush.msra.mxu0 0.0
        %2503 = vmatpush.msra.mxu0 0.0
        %2504 = vmatpush.msra.mxu0 %v2468
        %2505 = vmatpush.msra.mxu0 %v2464
        %2506 = vmatpush.msra.mxu0 %v2460
        %2507 = vmatpush.msra.mxu0 %v2456
        %2508 = vmatpush.msra.mxu0 %v2452
        %2509 = vmatpush.msra.mxu0 %v2448
        %2510 = vmatpush.msra.mxu0 %v2444
        %2511 = vmatpush.msra.mxu0 %v2440
        %2512 = vmatmul.f32.gmra.mxu0 %v2473
        %v2513 = vpop.f32.mrf.mxu0
        %v2514 = vadd.f32 %v2180, %v2513
        %2515 = vmatmul.f32.gmra.mxu0 %v2476
        %v2516 = vpop.f32.mrf.mxu0
        %v2517 = vadd.f32 %v2184, %v2516
        %2518 = vmatmul.f32.gmra.mxu0 %v2479
        %v2519 = vpop.f32.mrf.mxu0
        %v2520 = vadd.f32 %v2188, %v2519
        %2521 = vmatmul.f32.gmra.mxu0 %v2482
        %v2522 = vpop.f32.mrf.mxu0
        %v2523 = vadd.f32 %v2192, %v2522
        %2524 = vmatmul.f32.gmra.mxu0 %v2485
        %v2525 = vpop.f32.mrf.mxu0
        %v2526 = vadd.f32 %v2196, %v2525
        %2527 = vmatmul.f32.gmra.mxu0 %v2488
        %v2528 = vpop.f32.mrf.mxu0
        %v2529 = vadd.f32 %v2200, %v2528
        %2530 = vmatmul.f32.gmra.mxu0 %v2491
        %v2531 = vpop.f32.mrf.mxu0
        %v2532 = vadd.f32 %v2204, %v2531
        %2533 = vmatmul.f32.gmra.mxu0 %v2494
        %v2534 = vpop.f32.mrf.mxu0
        %v2535 = vadd.f32 %v2208, %v2534
        %2536 = vdwg.mxu0
        %2537 = vmatpush.msra.mxu0 0.0
        %2538 = vmatpush.msra.mxu0 0.0
        %2539 = vmatpush.msra.mxu0 0.0
        %2540 = vmatpush.msra.mxu0 0.0
        %2541 = vmatpush.msra.mxu0 0.0
        %2542 = vmatpush.msra.mxu0 0.0
        %2543 = vmatpush.msra.mxu0 0.0
        %2544 = vmatpush.msra.mxu0 0.0
        %2545 = vmatpush.msra.mxu0 %v2469
        %2546 = vmatpush.msra.mxu0 %v2465
        %2547 = vmatpush.msra.mxu0 %v2461
        %2548 = vmatpush.msra.mxu0 %v2457
        %2549 = vmatpush.msra.mxu0 %v2453
        %2550 = vmatpush.msra.mxu0 %v2449
        %2551 = vmatpush.msra.mxu0 %v2445
        %2552 = vmatpush.msra.mxu0 %v2441
        %2553 = vmatmul.f32.gmra.mxu0 %v2473
        %v2554 = vpop.f32.mrf.mxu0
        %v2555 = vadd.f32 %v2181, %v2554
        %2556 = vmatmul.f32.gmra.mxu0 %v2476
        %v2557 = vpop.f32.mrf.mxu0
        %v2558 = vadd.f32 %v2185, %v2557
        %2559 = vmatmul.f32.gmra.mxu0 %v2479
        %v2560 = vpop.f32.mrf.mxu0
        %v2561 = vadd.f32 %v2189, %v2560
        %2562 = vmatmul.f32.gmra.mxu0 %v2482
        %v2563 = vpop.f32.mrf.mxu0
        %v2564 = vadd.f32 %v2193, %v2563
        %2565 = vmatmul.f32.gmra.mxu0 %v2485
        %v2566 = vpop.f32.mrf.mxu0
        %v2567 = vadd.f32 %v2197, %v2566
        %2568 = vmatmul.f32.gmra.mxu0 %v2488
        %v2569 = vpop.f32.mrf.mxu0
        %v2570 = vadd.f32 %v2201, %v2569
        %2571 = vmatmul.f32.gmra.mxu0 %v2491
        %v2572 = vpop.f32.mrf.mxu0
        %v2573 = vadd.f32 %v2205, %v2572
        %2574 = vmatmul.f32.gmra.mxu0 %v2494
        %v2575 = vpop.f32.mrf.mxu0
        %v2576 = vadd.f32 %v2209, %v2575
        %2577 = vdwg.mxu0
        %2578 = vmatpush.msra.mxu0 0.0
        %2579 = vmatpush.msra.mxu0 0.0
        %2580 = vmatpush.msra.mxu0 0.0
        %2581 = vmatpush.msra.mxu0 0.0
        %2582 = vmatpush.msra.mxu0 0.0
        %2583 = vmatpush.msra.mxu0 0.0
        %2584 = vmatpush.msra.mxu0 0.0
        %2585 = vmatpush.msra.mxu0 0.0
        %2586 = vmatpush.msra.mxu0 %v2470
        %2587 = vmatpush.msra.mxu0 %v2466
        %2588 = vmatpush.msra.mxu0 %v2462
        %2589 = vmatpush.msra.mxu0 %v2458
        %2590 = vmatpush.msra.mxu0 %v2454
        %2591 = vmatpush.msra.mxu0 %v2450
        %2592 = vmatpush.msra.mxu0 %v2446
        %2593 = vmatpush.msra.mxu0 %v2442
        %2594 = vmatmul.f32.gmra.mxu0 %v2473
        %v2595 = vpop.f32.mrf.mxu0
        %v2596 = vadd.f32 %v2182, %v2595
        %2597 = vmatmul.f32.gmra.mxu0 %v2476
        %v2598 = vpop.f32.mrf.mxu0
        %v2599 = vadd.f32 %v2186, %v2598
        %2600 = vmatmul.f32.gmra.mxu0 %v2479
        %v2601 = vpop.f32.mrf.mxu0
        %v2602 = vadd.f32 %v2190, %v2601
        %2603 = vmatmul.f32.gmra.mxu0 %v2482
        %v2604 = vpop.f32.mrf.mxu0
        %v2605 = vadd.f32 %v2194, %v2604
        %2606 = vmatmul.f32.gmra.mxu0 %v2485
        %v2607 = vpop.f32.mrf.mxu0
        %v2608 = vadd.f32 %v2198, %v2607
        %2609 = vmatmul.f32.gmra.mxu0 %v2488
        %v2610 = vpop.f32.mrf.mxu0
        %v2611 = vadd.f32 %v2202, %v2610
        %2612 = vmatmul.f32.gmra.mxu0 %v2491
        %v2613 = vpop.f32.mrf.mxu0
        %v2614 = vadd.f32 %v2206, %v2613
        %2615 = vmatmul.f32.gmra.mxu0 %v2494
        %v2616 = vpop.f32.mrf.mxu0
        %v2617 = vadd.f32 %v2210, %v2616
        %2618 = vdwg.mxu0
        %2619 = vmatpush.msra.mxu0 0.0
        %2620 = vmatpush.msra.mxu0 0.0
        %2621 = vmatpush.msra.mxu0 0.0
        %2622 = vmatpush.msra.mxu0 0.0
        %2623 = vmatpush.msra.mxu0 0.0
        %2624 = vmatpush.msra.mxu0 0.0
        %2625 = vmatpush.msra.mxu0 0.0
        %2626 = vmatpush.msra.mxu0 0.0
        %2627 = vmatpush.msra.mxu0 %v2471
        %2628 = vmatpush.msra.mxu0 %v2467
        %2629 = vmatpush.msra.mxu0 %v2463
        %2630 = vmatpush.msra.mxu0 %v2459
        %2631 = vmatpush.msra.mxu0 %v2455
        %2632 = vmatpush.msra.mxu0 %v2451
        %2633 = vmatpush.msra.mxu0 %v2447
        %2634 = vmatpush.msra.mxu0 %v2443
        %2635 = vmatmul.f32.gmra.mxu0 %v2473
        %v2636 = vpop.f32.mrf.mxu0
        %v2637 = vadd.f32 %v2183, %v2636
        %2638 = vmatmul.f32.gmra.mxu0 %v2476
        %v2639 = vpop.f32.mrf.mxu0
        %v2640 = vadd.f32 %v2187, %v2639
        %2641 = vmatmul.f32.gmra.mxu0 %v2479
        %v2642 = vpop.f32.mrf.mxu0
        %v2643 = vadd.f32 %v2191, %v2642
        %2644 = vmatmul.f32.gmra.mxu0 %v2482
        %v2645 = vpop.f32.mrf.mxu0
        %v2646 = vadd.f32 %v2195, %v2645
        %2647 = vmatmul.f32.gmra.mxu0 %v2485
        %v2648 = vpop.f32.mrf.mxu0
        %v2649 = vadd.f32 %v2199, %v2648
        %2650 = vmatmul.f32.gmra.mxu0 %v2488
        %v2651 = vpop.f32.mrf.mxu0
        %v2652 = vadd.f32 %v2203, %v2651
        %2653 = vmatmul.f32.gmra.mxu0 %v2491
        %v2654 = vpop.f32.mrf.mxu0
        %v2655 = vadd.f32 %v2207, %v2654
        %2656 = vmatmul.f32.gmra.mxu0 %v2494
        %v2657 = vpop.f32.mrf.mxu0
        %v2658 = vadd.f32 %v2211, %v2657
        %2659 = vdwg.mxu0
        %2660 = vst [vmem:[%s290] sm:$0xff] %v2514
        %2661 = vst [vmem:[%s290 + $0x8] sm:$0xff] %v2555
        %2662 = vst [vmem:[%s290 + $0x10] sm:$0xff] %v2596
        %2663 = vst [vmem:[%s290 + $0x18] sm:$0xff] %v2637
        %2664 = vst [vmem:[%s290 + $0x20] sm:$0xff] %v2517
        %2665 = vst [vmem:[%s290 + $0x28] sm:$0xff] %v2558
        %2666 = vst [vmem:[%s290 + $0x30] sm:$0xff] %v2599
        %2667 = vst [vmem:[%s290 + $0x38] sm:$0xff] %v2640
        %2668 = vst [vmem:[%s290 + $0x40] sm:$0xff] %v2520
        %2669 = vst [vmem:[%s290 + $0x48] sm:$0xff] %v2561
        %2670 = vst [vmem:[%s290 + $0x50] sm:$0xff] %v2602
        %2671 = vst [vmem:[%s290 + $0x58] sm:$0xff] %v2643
        %2672 = vst [vmem:[%s290 + $0x60] sm:$0xff] %v2523
        %2673 = vst [vmem:[%s290 + $0x68] sm:$0xff] %v2564
        %2674 = vst [vmem:[%s290 + $0x70] sm:$0xff] %v2605
        %2675 = vst [vmem:[%s290 + $0x78] sm:$0xff] %v2646
        %2676 = vst [vmem:[%s290 + $0x80] sm:$0xff] %v2526
        %2677 = vst [vmem:[%s290 + $0x88] sm:$0xff] %v2567
        %2678 = vst [vmem:[%s290 + $0x90] sm:$0xff] %v2608
        %2679 = vst [vmem:[%s290 + $0x98] sm:$0xff] %v2649
        %2680 = vst [vmem:[%s290 + $0xa0] sm:$0xff] %v2529
        %2681 = vst [vmem:[%s290 + $0xa8] sm:$0xff] %v2570
        %2682 = vst [vmem:[%s290 + $0xb0] sm:$0xff] %v2611
        %2683 = vst [vmem:[%s290 + $0xb8] sm:$0xff] %v2652
        %2684 = vst [vmem:[%s290 + $0xc0] sm:$0xff] %v2532
        %2685 = vst [vmem:[%s290 + $0xc8] sm:$0xff] %v2573
        %2686 = vst [vmem:[%s290 + $0xd0] sm:$0xff] %v2614
        %2687 = vst [vmem:[%s290 + $0xd8] sm:$0xff] %v2655
        %2688 = vst [vmem:[%s290 + $0xe0] sm:$0xff] %v2535
        %2689 = vst [vmem:[%s290 + $0xe8] sm:$0xff] %v2576
        %2690 = vst [vmem:[%s290 + $0xf0] sm:$0xff] %v2617
        %2691 = vst [vmem:[%s290 + $0xf8] sm:$0xff] %v2658
        %s2692 = scalar_lea.vmem %s256, 256 [#allocation3]
        %v2693 = vld [vmem:[%s2692] sm:$0xff]
        %v2694 = vld [vmem:[%s2692 + $0x8] sm:$0xff]
        %v2695 = vld [vmem:[%s2692 + $0x10] sm:$0xff]
        %v2696 = vld [vmem:[%s2692 + $0x18] sm:$0xff]
        %v2697 = vld [vmem:[%s2692 + $0x20] sm:$0xff]
        %v2698 = vld [vmem:[%s2692 + $0x28] sm:$0xff]
        %v2699 = vld [vmem:[%s2692 + $0x30] sm:$0xff]
        %v2700 = vld [vmem:[%s2692 + $0x38] sm:$0xff]
        %v2701 = vld [vmem:[%s2692 + $0x40] sm:$0xff]
        %v2702 = vld [vmem:[%s2692 + $0x48] sm:$0xff]
        %v2703 = vld [vmem:[%s2692 + $0x50] sm:$0xff]
        %v2704 = vld [vmem:[%s2692 + $0x58] sm:$0xff]
        %v2705 = vld [vmem:[%s2692 + $0x60] sm:$0xff]
        %v2706 = vld [vmem:[%s2692 + $0x68] sm:$0xff]
        %v2707 = vld [vmem:[%s2692 + $0x70] sm:$0xff]
        %v2708 = vld [vmem:[%s2692 + $0x78] sm:$0xff]
        %v2709 = vld [vmem:[%s2692 + $0x80] sm:$0xff]
        %v2710 = vld [vmem:[%s2692 + $0x88] sm:$0xff]
        %v2711 = vld [vmem:[%s2692 + $0x90] sm:$0xff]
        %v2712 = vld [vmem:[%s2692 + $0x98] sm:$0xff]
        %v2713 = vld [vmem:[%s2692 + $0xa0] sm:$0xff]
        %v2714 = vld [vmem:[%s2692 + $0xa8] sm:$0xff]
        %v2715 = vld [vmem:[%s2692 + $0xb0] sm:$0xff]
        %v2716 = vld [vmem:[%s2692 + $0xb8] sm:$0xff]
        %v2717 = vld [vmem:[%s2692 + $0xc0] sm:$0xff]
        %v2718 = vld [vmem:[%s2692 + $0xc8] sm:$0xff]
        %v2719 = vld [vmem:[%s2692 + $0xd0] sm:$0xff]
        %v2720 = vld [vmem:[%s2692 + $0xd8] sm:$0xff]
        %v2721 = vld [vmem:[%s2692 + $0xe0] sm:$0xff]
        %v2722 = vld [vmem:[%s2692 + $0xe8] sm:$0xff]
        %v2723 = vld [vmem:[%s2692 + $0xf0] sm:$0xff]
        %v2724 = vld [vmem:[%s2692 + $0xf8] sm:$0xff]
        %2725 = vmatpush.msra.mxu0 0.0
        %2726 = vmatpush.msra.mxu0 0.0
        %2727 = vmatpush.msra.mxu0 0.0
        %2728 = vmatpush.msra.mxu0 0.0
        %2729 = vmatpush.msra.mxu0 0.0
        %2730 = vmatpush.msra.mxu0 0.0
        %2731 = vmatpush.msra.mxu0 0.0
        %2732 = vmatpush.msra.mxu0 0.0
        %2733 = vmatpush.msra.mxu0 %v2721
        %2734 = vmatpush.msra.mxu0 %v2717
        %2735 = vmatpush.msra.mxu0 %v2713
        %2736 = vmatpush.msra.mxu0 %v2709
        %2737 = vmatpush.msra.mxu0 %v2705
        %2738 = vmatpush.msra.mxu0 %v2701
        %2739 = vmatpush.msra.mxu0 %v2697
        %2740 = vmatpush.msra.mxu0 %v2693
        %2741 = vmatmul.f32.gmra.mxu0 %v2253
        %v2742 = vpop.f32.mrf.mxu0
        %v2743 = vadd.f32 %v2215, %v2742
        %2744 = vmatmul.f32.gmra.mxu0 %v2256
        %v2745 = vpop.f32.mrf.mxu0
        %v2746 = vadd.f32 %v2220, %v2745
        %2747 = vmatmul.f32.gmra.mxu0 %v2259
        %v2748 = vpop.f32.mrf.mxu0
        %v2749 = vadd.f32 %v2225, %v2748
        %2750 = vmatmul.f32.gmra.mxu0 %v2262
        %v2751 = vpop.f32.mrf.mxu0
        %v2752 = vadd.f32 %v2230, %v2751
        %2753 = vmatmul.f32.gmra.mxu0 %v2265
        %v2754 = vpop.f32.mrf.mxu0
        %v2755 = vadd.f32 %v2235, %v2754
        %2756 = vmatmul.f32.gmra.mxu0 %v2268
        %v2757 = vpop.f32.mrf.mxu0
        %v2758 = vadd.f32 %v2240, %v2757
        %2759 = vmatmul.f32.gmra.mxu0 %v2271
        %v2760 = vpop.f32.mrf.mxu0
        %v2761 = vadd.f32 %v2245, %v2760
        %2762 = vmatmul.f32.gmra.mxu0 %v2274
        %v2763 = vpop.f32.mrf.mxu0
        %v2764 = vadd.f32 %v2250, %v2763
        %2765 = vdwg.mxu0
        %2766 = vmatpush.msra.mxu0 0.0
        %2767 = vmatpush.msra.mxu0 0.0
        %2768 = vmatpush.msra.mxu0 0.0
        %2769 = vmatpush.msra.mxu0 0.0
        %2770 = vmatpush.msra.mxu0 0.0
        %2771 = vmatpush.msra.mxu0 0.0
        %2772 = vmatpush.msra.mxu0 0.0
        %2773 = vmatpush.msra.mxu0 0.0
        %2774 = vmatpush.msra.mxu0 %v2722
        %2775 = vmatpush.msra.mxu0 %v2718
        %2776 = vmatpush.msra.mxu0 %v2714
        %2777 = vmatpush.msra.mxu0 %v2710
        %2778 = vmatpush.msra.mxu0 %v2706
        %2779 = vmatpush.msra.mxu0 %v2702
        %2780 = vmatpush.msra.mxu0 %v2698
        %2781 = vmatpush.msra.mxu0 %v2694
        %2782 = vmatmul.f32.gmra.mxu0 %v2253
        %v2783 = vpop.f32.mrf.mxu0
        %v2784 = vadd.f32 %v2215, %v2783
        %2785 = vmatmul.f32.gmra.mxu0 %v2256
        %v2786 = vpop.f32.mrf.mxu0
        %v2787 = vadd.f32 %v2220, %v2786
        %2788 = vmatmul.f32.gmra.mxu0 %v2259
        %v2789 = vpop.f32.mrf.mxu0
        %v2790 = vadd.f32 %v2225, %v2789
        %2791 = vmatmul.f32.gmra.mxu0 %v2262
        %v2792 = vpop.f32.mrf.mxu0
        %v2793 = vadd.f32 %v2230, %v2792
        %2794 = vmatmul.f32.gmra.mxu0 %v2265
        %v2795 = vpop.f32.mrf.mxu0
        %v2796 = vadd.f32 %v2235, %v2795
        %2797 = vmatmul.f32.gmra.mxu0 %v2268
        %v2798 = vpop.f32.mrf.mxu0
        %v2799 = vadd.f32 %v2240, %v2798
        %2800 = vmatmul.f32.gmra.mxu0 %v2271
        %v2801 = vpop.f32.mrf.mxu0
        %v2802 = vadd.f32 %v2245, %v2801
        %2803 = vmatmul.f32.gmra.mxu0 %v2274
        %v2804 = vpop.f32.mrf.mxu0
        %v2805 = vadd.f32 %v2250, %v2804
        %2806 = vdwg.mxu0
        %2807 = vmatpush.msra.mxu0 0.0
        %2808 = vmatpush.msra.mxu0 0.0
        %2809 = vmatpush.msra.mxu0 0.0
        %2810 = vmatpush.msra.mxu0 0.0
        %2811 = vmatpush.msra.mxu0 0.0
        %2812 = vmatpush.msra.mxu0 0.0
        %2813 = vmatpush.msra.mxu0 0.0
        %2814 = vmatpush.msra.mxu0 0.0
        %2815 = vmatpush.msra.mxu0 %v2723
        %2816 = vmatpush.msra.mxu0 %v2719
        %2817 = vmatpush.msra.mxu0 %v2715
        %2818 = vmatpush.msra.mxu0 %v2711
        %2819 = vmatpush.msra.mxu0 %v2707
        %2820 = vmatpush.msra.mxu0 %v2703
        %2821 = vmatpush.msra.mxu0 %v2699
        %2822 = vmatpush.msra.mxu0 %v2695
        %2823 = vmatmul.f32.gmra.mxu0 %v2253
        %v2824 = vpop.f32.mrf.mxu0
        %v2825 = vadd.f32 %v2215, %v2824
        %2826 = vmatmul.f32.gmra.mxu0 %v2256
        %v2827 = vpop.f32.mrf.mxu0
        %v2828 = vadd.f32 %v2220, %v2827
        %2829 = vmatmul.f32.gmra.mxu0 %v2259
        %v2830 = vpop.f32.mrf.mxu0
        %v2831 = vadd.f32 %v2225, %v2830
        %2832 = vmatmul.f32.gmra.mxu0 %v2262
        %v2833 = vpop.f32.mrf.mxu0
        %v2834 = vadd.f32 %v2230, %v2833
        %2835 = vmatmul.f32.gmra.mxu0 %v2265
        %v2836 = vpop.f32.mrf.mxu0
        %v2837 = vadd.f32 %v2235, %v2836
        %2838 = vmatmul.f32.gmra.mxu0 %v2268
        %v2839 = vpop.f32.mrf.mxu0
        %v2840 = vadd.f32 %v2240, %v2839
        %2841 = vmatmul.f32.gmra.mxu0 %v2271
        %v2842 = vpop.f32.mrf.mxu0
        %v2843 = vadd.f32 %v2245, %v2842
        %2844 = vmatmul.f32.gmra.mxu0 %v2274
        %v2845 = vpop.f32.mrf.mxu0
        %v2846 = vadd.f32 %v2250, %v2845
        %2847 = vdwg.mxu0
        %2848 = vmatpush.msra.mxu0 0.0
        %2849 = vmatpush.msra.mxu0 0.0
        %2850 = vmatpush.msra.mxu0 0.0
        %2851 = vmatpush.msra.mxu0 0.0
        %2852 = vmatpush.msra.mxu0 0.0
        %2853 = vmatpush.msra.mxu0 0.0
        %2854 = vmatpush.msra.mxu0 0.0
        %2855 = vmatpush.msra.mxu0 0.0
        %2856 = vmatpush.msra.mxu0 %v2724
        %2857 = vmatpush.msra.mxu0 %v2720
        %2858 = vmatpush.msra.mxu0 %v2716
        %2859 = vmatpush.msra.mxu0 %v2712
        %2860 = vmatpush.msra.mxu0 %v2708
        %2861 = vmatpush.msra.mxu0 %v2704
        %2862 = vmatpush.msra.mxu0 %v2700
        %2863 = vmatpush.msra.mxu0 %v2696
        %2864 = vmatmul.f32.gmra.mxu0 %v2253
        %v2865 = vpop.f32.mrf.mxu0
        %v2866 = vadd.f32 %v2215, %v2865
        %2867 = vmatmul.f32.gmra.mxu0 %v2256
        %v2868 = vpop.f32.mrf.mxu0
        %v2869 = vadd.f32 %v2220, %v2868
        %2870 = vmatmul.f32.gmra.mxu0 %v2259
        %v2871 = vpop.f32.mrf.mxu0
        %v2872 = vadd.f32 %v2225, %v2871
        %2873 = vmatmul.f32.gmra.mxu0 %v2262
        %v2874 = vpop.f32.mrf.mxu0
        %v2875 = vadd.f32 %v2230, %v2874
        %2876 = vmatmul.f32.gmra.mxu0 %v2265
        %v2877 = vpop.f32.mrf.mxu0
        %v2878 = vadd.f32 %v2235, %v2877
        %2879 = vmatmul.f32.gmra.mxu0 %v2268
        %v2880 = vpop.f32.mrf.mxu0
        %v2881 = vadd.f32 %v2240, %v2880
        %2882 = vmatmul.f32.gmra.mxu0 %v2271
        %v2883 = vpop.f32.mrf.mxu0
        %v2884 = vadd.f32 %v2245, %v2883
        %2885 = vmatmul.f32.gmra.mxu0 %v2274
        %v2886 = vpop.f32.mrf.mxu0
        %v2887 = vadd.f32 %v2250, %v2886
        %2888 = vdwg.mxu0
        %v2889 = vmax.f32 %v2743, 0.0
        %v2890 = vmax.f32 %v2784, 0.0
        %v2891 = vmax.f32 %v2825, 0.0
        %v2892 = vmax.f32 %v2866, 0.0
        %v2893 = vmax.f32 %v2746, 0.0
        %v2894 = vmax.f32 %v2787, 0.0
        %v2895 = vmax.f32 %v2828, 0.0
        %v2896 = vmax.f32 %v2869, 0.0
        %v2897 = vmax.f32 %v2749, 0.0
        %v2898 = vmax.f32 %v2790, 0.0
        %v2899 = vmax.f32 %v2831, 0.0
        %v2900 = vmax.f32 %v2872, 0.0
        %v2901 = vmax.f32 %v2752, 0.0
        %v2902 = vmax.f32 %v2793, 0.0
        %v2903 = vmax.f32 %v2834, 0.0
        %v2904 = vmax.f32 %v2875, 0.0
        %v2905 = vmax.f32 %v2755, 0.0
        %v2906 = vmax.f32 %v2796, 0.0
        %v2907 = vmax.f32 %v2837, 0.0
        %v2908 = vmax.f32 %v2878, 0.0
        %v2909 = vmax.f32 %v2758, 0.0
        %v2910 = vmax.f32 %v2799, 0.0
        %v2911 = vmax.f32 %v2840, 0.0
        %v2912 = vmax.f32 %v2881, 0.0
        %v2913 = vmax.f32 %v2761, 0.0
        %v2914 = vmax.f32 %v2802, 0.0
        %v2915 = vmax.f32 %v2843, 0.0
        %v2916 = vmax.f32 %v2884, 0.0
        %v2917 = vmax.f32 %v2764, 0.0
        %v2918 = vmax.f32 %v2805, 0.0
        %v2919 = vmax.f32 %v2846, 0.0
        %v2920 = vmax.f32 %v2887, 0.0
        %v2922 = vsel %vm997, %v2140, 0
        %v2925 = vsel %vm997, %v2141, 0
        %v2928 = vsel %vm997, %v2142, 0
        %v2931 = vsel %vm997, %v2143, 0
        %v2934 = vsel %vm997, %v2144, 0
        %v2937 = vsel %vm997, %v2145, 0
        %v2940 = vsel %vm997, %v2146, 0
        %v2943 = vsel %vm997, %v2147, 0
        %2945 = vmatpush.msra.mxu0 0.0
        %2946 = vmatpush.msra.mxu0 0.0
        %2947 = vmatpush.msra.mxu0 0.0
        %2948 = vmatpush.msra.mxu0 0.0
        %2949 = vmatpush.msra.mxu0 0.0
        %2950 = vmatpush.msra.mxu0 0.0
        %2951 = vmatpush.msra.mxu0 0.0
        %2952 = vmatpush.msra.mxu0 0.0
        %2953 = vmatpush.msra.mxu0 %v2917
        %2954 = vmatpush.msra.mxu0 %v2913
        %2955 = vmatpush.msra.mxu0 %v2909
        %2956 = vmatpush.msra.mxu0 %v2905
        %2957 = vmatpush.msra.mxu0 %v2901
        %2958 = vmatpush.msra.mxu0 %v2897
        %2959 = vmatpush.msra.mxu0 %v2893
        %2960 = vmatpush.msra.mxu0 %v2889
        %2961 = vmatmul.f32.gmra.mxu0 %v2922
        %v2962 = vpop.f32.mrf.mxu0
        %v2963 = vadd.f32 %v2693, %v2962
        %2964 = vmatmul.f32.gmra.mxu0 %v2925
        %v2965 = vpop.f32.mrf.mxu0
        %v2966 = vadd.f32 %v2697, %v2965
        %2967 = vmatmul.f32.gmra.mxu0 %v2928
        %v2968 = vpop.f32.mrf.mxu0
        %v2969 = vadd.f32 %v2701, %v2968
        %2970 = vmatmul.f32.gmra.mxu0 %v2931
        %v2971 = vpop.f32.mrf.mxu0
        %v2972 = vadd.f32 %v2705, %v2971
        %2973 = vmatmul.f32.gmra.mxu0 %v2934
        %v2974 = vpop.f32.mrf.mxu0
        %v2975 = vadd.f32 %v2709, %v2974
        %2976 = vmatmul.f32.gmra.mxu0 %v2937
        %v2977 = vpop.f32.mrf.mxu0
        %v2978 = vadd.f32 %v2713, %v2977
        %2979 = vmatmul.f32.gmra.mxu0 %v2940
        %v2980 = vpop.f32.mrf.mxu0
        %v2981 = vadd.f32 %v2717, %v2980
        %2982 = vmatmul.f32.gmra.mxu0 %v2943
        %v2983 = vpop.f32.mrf.mxu0
        %v2984 = vadd.f32 %v2721, %v2983
        %2985 = vdwg.mxu0
        %2986 = vmatpush.msra.mxu0 0.0
        %2987 = vmatpush.msra.mxu0 0.0
        %2988 = vmatpush.msra.mxu0 0.0
        %2989 = vmatpush.msra.mxu0 0.0
        %2990 = vmatpush.msra.mxu0 0.0
        %2991 = vmatpush.msra.mxu0 0.0
        %2992 = vmatpush.msra.mxu0 0.0
        %2993 = vmatpush.msra.mxu0 0.0
        %2994 = vmatpush.msra.mxu0 %v2918
        %2995 = vmatpush.msra.mxu0 %v2914
        %2996 = vmatpush.msra.mxu0 %v2910
        %2997 = vmatpush.msra.mxu0 %v2906
        %2998 = vmatpush.msra.mxu0 %v2902
        %2999 = vmatpush.msra.mxu0 %v2898
        %3000 = vmatpush.msra.mxu0 %v2894
        %3001 = vmatpush.msra.mxu0 %v2890
        %3002 = vmatmul.f32.gmra.mxu0 %v2922
        %v3003 = vpop.f32.mrf.mxu0
        %v3004 = vadd.f32 %v2694, %v3003
        %3005 = vmatmul.f32.gmra.mxu0 %v2925
        %v3006 = vpop.f32.mrf.mxu0
        %v3007 = vadd.f32 %v2698, %v3006
        %3008 = vmatmul.f32.gmra.mxu0 %v2928
        %v3009 = vpop.f32.mrf.mxu0
        %v3010 = vadd.f32 %v2702, %v3009
        %3011 = vmatmul.f32.gmra.mxu0 %v2931
        %v3012 = vpop.f32.mrf.mxu0
        %v3013 = vadd.f32 %v2706, %v3012
        %3014 = vmatmul.f32.gmra.mxu0 %v2934
        %v3015 = vpop.f32.mrf.mxu0
        %v3016 = vadd.f32 %v2710, %v3015
        %3017 = vmatmul.f32.gmra.mxu0 %v2937
        %v3018 = vpop.f32.mrf.mxu0
        %v3019 = vadd.f32 %v2714, %v3018
        %3020 = vmatmul.f32.gmra.mxu0 %v2940
        %v3021 = vpop.f32.mrf.mxu0
        %v3022 = vadd.f32 %v2718, %v3021
        %3023 = vmatmul.f32.gmra.mxu0 %v2943
        %v3024 = vpop.f32.mrf.mxu0
        %v3025 = vadd.f32 %v2722, %v3024
        %3026 = vdwg.mxu0
        %3027 = vmatpush.msra.mxu0 0.0
        %3028 = vmatpush.msra.mxu0 0.0
        %3029 = vmatpush.msra.mxu0 0.0
        %3030 = vmatpush.msra.mxu0 0.0
        %3031 = vmatpush.msra.mxu0 0.0
        %3032 = vmatpush.msra.mxu0 0.0
        %3033 = vmatpush.msra.mxu0 0.0
        %3034 = vmatpush.msra.mxu0 0.0
        %3035 = vmatpush.msra.mxu0 %v2919
        %3036 = vmatpush.msra.mxu0 %v2915
        %3037 = vmatpush.msra.mxu0 %v2911
        %3038 = vmatpush.msra.mxu0 %v2907
        %3039 = vmatpush.msra.mxu0 %v2903
        %3040 = vmatpush.msra.mxu0 %v2899
        %3041 = vmatpush.msra.mxu0 %v2895
        %3042 = vmatpush.msra.mxu0 %v2891
        %3043 = vmatmul.f32.gmra.mxu0 %v2922
        %v3044 = vpop.f32.mrf.mxu0
        %v3045 = vadd.f32 %v2695, %v3044
        %3046 = vmatmul.f32.gmra.mxu0 %v2925
        %v3047 = vpop.f32.mrf.mxu0
        %v3048 = vadd.f32 %v2699, %v3047
        %3049 = vmatmul.f32.gmra.mxu0 %v2928
        %v3050 = vpop.f32.mrf.mxu0
        %v3051 = vadd.f32 %v2703, %v3050
        %3052 = vmatmul.f32.gmra.mxu0 %v2931
        %v3053 = vpop.f32.mrf.mxu0
        %v3054 = vadd.f32 %v2707, %v3053
        %3055 = vmatmul.f32.gmra.mxu0 %v2934
        %v3056 = vpop.f32.mrf.mxu0
        %v3057 = vadd.f32 %v2711, %v3056
        %3058 = vmatmul.f32.gmra.mxu0 %v2937
        %v3059 = vpop.f32.mrf.mxu0
        %v3060 = vadd.f32 %v2715, %v3059
        %3061 = vmatmul.f32.gmra.mxu0 %v2940
        %v3062 = vpop.f32.mrf.mxu0
        %v3063 = vadd.f32 %v2719, %v3062
        %3064 = vmatmul.f32.gmra.mxu0 %v2943
        %v3065 = vpop.f32.mrf.mxu0
        %v3066 = vadd.f32 %v2723, %v3065
        %3067 = vdwg.mxu0
        %3068 = vmatpush.msra.mxu0 0.0
        %3069 = vmatpush.msra.mxu0 0.0
        %3070 = vmatpush.msra.mxu0 0.0
        %3071 = vmatpush.msra.mxu0 0.0
        %3072 = vmatpush.msra.mxu0 0.0
        %3073 = vmatpush.msra.mxu0 0.0
        %3074 = vmatpush.msra.mxu0 0.0
        %3075 = vmatpush.msra.mxu0 0.0
        %3076 = vmatpush.msra.mxu0 %v2920
        %3077 = vmatpush.msra.mxu0 %v2916
        %3078 = vmatpush.msra.mxu0 %v2912
        %3079 = vmatpush.msra.mxu0 %v2908
        %3080 = vmatpush.msra.mxu0 %v2904
        %3081 = vmatpush.msra.mxu0 %v2900
        %3082 = vmatpush.msra.mxu0 %v2896
        %3083 = vmatpush.msra.mxu0 %v2892
        %3084 = vmatmul.f32.gmra.mxu0 %v2922
        %v3085 = vpop.f32.mrf.mxu0
        %v3086 = vadd.f32 %v2696, %v3085
        %3087 = vmatmul.f32.gmra.mxu0 %v2925
        %v3088 = vpop.f32.mrf.mxu0
        %v3089 = vadd.f32 %v2700, %v3088
        %3090 = vmatmul.f32.gmra.mxu0 %v2928
        %v3091 = vpop.f32.mrf.mxu0
        %v3092 = vadd.f32 %v2704, %v3091
        %3093 = vmatmul.f32.gmra.mxu0 %v2931
        %v3094 = vpop.f32.mrf.mxu0
        %v3095 = vadd.f32 %v2708, %v3094
        %3096 = vmatmul.f32.gmra.mxu0 %v2934
        %v3097 = vpop.f32.mrf.mxu0
        %v3098 = vadd.f32 %v2712, %v3097
        %3099 = vmatmul.f32.gmra.mxu0 %v2937
        %v3100 = vpop.f32.mrf.mxu0
        %v3101 = vadd.f32 %v2716, %v3100
        %3102 = vmatmul.f32.gmra.mxu0 %v2940
        %v3103 = vpop.f32.mrf.mxu0
        %v3104 = vadd.f32 %v2720, %v3103
        %3105 = vmatmul.f32.gmra.mxu0 %v2943
        %v3106 = vpop.f32.mrf.mxu0
        %v3107 = vadd.f32 %v2724, %v3106
        %3108 = vdwg.mxu0
        %s3109 = scalar_lea.vmem %s290, 256 [#allocation8]
        %3110 = vst [vmem:[%s3109] sm:$0xff] %v2963
        %3111 = vst [vmem:[%s3109 + $0x8] sm:$0xff] %v3004
        %3112 = vst [vmem:[%s3109 + $0x10] sm:$0xff] %v3045
        %3113 = vst [vmem:[%s3109 + $0x18] sm:$0xff] %v3086
        %3114 = vst [vmem:[%s3109 + $0x20] sm:$0xff] %v2966
        %3115 = vst [vmem:[%s3109 + $0x28] sm:$0xff] %v3007
        %3116 = vst [vmem:[%s3109 + $0x30] sm:$0xff] %v3048
        %3117 = vst [vmem:[%s3109 + $0x38] sm:$0xff] %v3089
        %3118 = vst [vmem:[%s3109 + $0x40] sm:$0xff] %v2969
        %3119 = vst [vmem:[%s3109 + $0x48] sm:$0xff] %v3010
        %3120 = vst [vmem:[%s3109 + $0x50] sm:$0xff] %v3051
        %3121 = vst [vmem:[%s3109 + $0x58] sm:$0xff] %v3092
        %3122 = vst [vmem:[%s3109 + $0x60] sm:$0xff] %v2972
        %3123 = vst [vmem:[%s3109 + $0x68] sm:$0xff] %v3013
        %3124 = vst [vmem:[%s3109 + $0x70] sm:$0xff] %v3054
        %3125 = vst [vmem:[%s3109 + $0x78] sm:$0xff] %v3095
        %3126 = vst [vmem:[%s3109 + $0x80] sm:$0xff] %v2975
        %3127 = vst [vmem:[%s3109 + $0x88] sm:$0xff] %v3016
        %3128 = vst [vmem:[%s3109 + $0x90] sm:$0xff] %v3057
        %3129 = vst [vmem:[%s3109 + $0x98] sm:$0xff] %v3098
        %3130 = vst [vmem:[%s3109 + $0xa0] sm:$0xff] %v2978
        %3131 = vst [vmem:[%s3109 + $0xa8] sm:$0xff] %v3019
        %3132 = vst [vmem:[%s3109 + $0xb0] sm:$0xff] %v3060
        %3133 = vst [vmem:[%s3109 + $0xb8] sm:$0xff] %v3101
        %3134 = vst [vmem:[%s3109 + $0xc0] sm:$0xff] %v2981
        %3135 = vst [vmem:[%s3109 + $0xc8] sm:$0xff] %v3022
        %3136 = vst [vmem:[%s3109 + $0xd0] sm:$0xff] %v3063
        %3137 = vst [vmem:[%s3109 + $0xd8] sm:$0xff] %v3104
        %3138 = vst [vmem:[%s3109 + $0xe0] sm:$0xff] %v2984
        %3139 = vst [vmem:[%s3109 + $0xe8] sm:$0xff] %v3025
        %3140 = vst [vmem:[%s3109 + $0xf0] sm:$0xff] %v3066
        %3141 = vst [vmem:[%s3109 + $0xf8] sm:$0xff] %v3107
        %s3142 = scalar_lea.vmem %s256, 512 [#allocation3]
        %v3143 = vld [vmem:[%s3142] sm:$0xff]
        %v3144 = vld [vmem:[%s3142 + $0x8] sm:$0xff]
        %v3145 = vld [vmem:[%s3142 + $0x10] sm:$0xff]
        %v3146 = vld [vmem:[%s3142 + $0x18] sm:$0xff]
        %v3147 = vld [vmem:[%s3142 + $0x20] sm:$0xff]
        %v3148 = vld [vmem:[%s3142 + $0x28] sm:$0xff]
        %v3149 = vld [vmem:[%s3142 + $0x30] sm:$0xff]
        %v3150 = vld [vmem:[%s3142 + $0x38] sm:$0xff]
        %v3151 = vld [vmem:[%s3142 + $0x40] sm:$0xff]
        %v3152 = vld [vmem:[%s3142 + $0x48] sm:$0xff]
        %v3153 = vld [vmem:[%s3142 + $0x50] sm:$0xff]
        %v3154 = vld [vmem:[%s3142 + $0x58] sm:$0xff]
        %v3155 = vld [vmem:[%s3142 + $0x60] sm:$0xff]
        %v3156 = vld [vmem:[%s3142 + $0x68] sm:$0xff]
        %v3157 = vld [vmem:[%s3142 + $0x70] sm:$0xff]
        %v3158 = vld [vmem:[%s3142 + $0x78] sm:$0xff]
        %v3159 = vld [vmem:[%s3142 + $0x80] sm:$0xff]
        %v3160 = vld [vmem:[%s3142 + $0x88] sm:$0xff]
        %v3161 = vld [vmem:[%s3142 + $0x90] sm:$0xff]
        %v3162 = vld [vmem:[%s3142 + $0x98] sm:$0xff]
        %v3163 = vld [vmem:[%s3142 + $0xa0] sm:$0xff]
        %v3164 = vld [vmem:[%s3142 + $0xa8] sm:$0xff]
        %v3165 = vld [vmem:[%s3142 + $0xb0] sm:$0xff]
        %v3166 = vld [vmem:[%s3142 + $0xb8] sm:$0xff]
        %v3167 = vld [vmem:[%s3142 + $0xc0] sm:$0xff]
        %v3168 = vld [vmem:[%s3142 + $0xc8] sm:$0xff]
        %v3169 = vld [vmem:[%s3142 + $0xd0] sm:$0xff]
        %v3170 = vld [vmem:[%s3142 + $0xd8] sm:$0xff]
        %v3171 = vld [vmem:[%s3142 + $0xe0] sm:$0xff]
        %v3172 = vld [vmem:[%s3142 + $0xe8] sm:$0xff]
        %v3173 = vld [vmem:[%s3142 + $0xf0] sm:$0xff]
        %v3174 = vld [vmem:[%s3142 + $0xf8] sm:$0xff]
        %3175 = vmatpush.msra.mxu0 0.0
        %3176 = vmatpush.msra.mxu0 0.0
        %3177 = vmatpush.msra.mxu0 0.0
        %3178 = vmatpush.msra.mxu0 0.0
        %3179 = vmatpush.msra.mxu0 0.0
        %3180 = vmatpush.msra.mxu0 0.0
        %3181 = vmatpush.msra.mxu0 0.0
        %3182 = vmatpush.msra.mxu0 0.0
        %3183 = vmatpush.msra.mxu0 %v3171
        %3184 = vmatpush.msra.mxu0 %v3167
        %3185 = vmatpush.msra.mxu0 %v3163
        %3186 = vmatpush.msra.mxu0 %v3159
        %3187 = vmatpush.msra.mxu0 %v3155
        %3188 = vmatpush.msra.mxu0 %v3151
        %3189 = vmatpush.msra.mxu0 %v3147
        %3190 = vmatpush.msra.mxu0 %v3143
        %3191 = vmatmul.f32.gmra.mxu0 %v2253
        %v3192 = vpop.f32.mrf.mxu0
        %v3193 = vadd.f32 %v2215, %v3192
        %3194 = vmatmul.f32.gmra.mxu0 %v2256
        %v3195 = vpop.f32.mrf.mxu0
        %v3196 = vadd.f32 %v2220, %v3195
        %3197 = vmatmul.f32.gmra.mxu0 %v2259
        %v3198 = vpop.f32.mrf.mxu0
        %v3199 = vadd.f32 %v2225, %v3198
        %3200 = vmatmul.f32.gmra.mxu0 %v2262
        %v3201 = vpop.f32.mrf.mxu0
        %v3202 = vadd.f32 %v2230, %v3201
        %3203 = vmatmul.f32.gmra.mxu0 %v2265
        %v3204 = vpop.f32.mrf.mxu0
        %v3205 = vadd.f32 %v2235, %v3204
        %3206 = vmatmul.f32.gmra.mxu0 %v2268
        %v3207 = vpop.f32.mrf.mxu0
        %v3208 = vadd.f32 %v2240, %v3207
        %3209 = vmatmul.f32.gmra.mxu0 %v2271
        %v3210 = vpop.f32.mrf.mxu0
        %v3211 = vadd.f32 %v2245, %v3210
        %3212 = vmatmul.f32.gmra.mxu0 %v2274
        %v3213 = vpop.f32.mrf.mxu0
        %v3214 = vadd.f32 %v2250, %v3213
        %3215 = vdwg.mxu0
        %3216 = vmatpush.msra.mxu0 0.0
        %3217 = vmatpush.msra.mxu0 0.0
        %3218 = vmatpush.msra.mxu0 0.0
        %3219 = vmatpush.msra.mxu0 0.0
        %3220 = vmatpush.msra.mxu0 0.0
        %3221 = vmatpush.msra.mxu0 0.0
        %3222 = vmatpush.msra.mxu0 0.0
        %3223 = vmatpush.msra.mxu0 0.0
        %3224 = vmatpush.msra.mxu0 %v3172
        %3225 = vmatpush.msra.mxu0 %v3168
        %3226 = vmatpush.msra.mxu0 %v3164
        %3227 = vmatpush.msra.mxu0 %v3160
        %3228 = vmatpush.msra.mxu0 %v3156
        %3229 = vmatpush.msra.mxu0 %v3152
        %3230 = vmatpush.msra.mxu0 %v3148
        %3231 = vmatpush.msra.mxu0 %v3144
        %3232 = vmatmul.f32.gmra.mxu0 %v2253
        %v3233 = vpop.f32.mrf.mxu0
        %v3234 = vadd.f32 %v2215, %v3233
        %3235 = vmatmul.f32.gmra.mxu0 %v2256
        %v3236 = vpop.f32.mrf.mxu0
        %v3237 = vadd.f32 %v2220, %v3236
        %3238 = vmatmul.f32.gmra.mxu0 %v2259
        %v3239 = vpop.f32.mrf.mxu0
        %v3240 = vadd.f32 %v2225, %v3239
        %3241 = vmatmul.f32.gmra.mxu0 %v2262
        %v3242 = vpop.f32.mrf.mxu0
        %v3243 = vadd.f32 %v2230, %v3242
        %3244 = vmatmul.f32.gmra.mxu0 %v2265
        %v3245 = vpop.f32.mrf.mxu0
        %v3246 = vadd.f32 %v2235, %v3245
        %3247 = vmatmul.f32.gmra.mxu0 %v2268
        %v3248 = vpop.f32.mrf.mxu0
        %v3249 = vadd.f32 %v2240, %v3248
        %3250 = vmatmul.f32.gmra.mxu0 %v2271
        %v3251 = vpop.f32.mrf.mxu0
        %v3252 = vadd.f32 %v2245, %v3251
        %3253 = vmatmul.f32.gmra.mxu0 %v2274
        %v3254 = vpop.f32.mrf.mxu0
        %v3255 = vadd.f32 %v2250, %v3254
        %3256 = vdwg.mxu0
        %3257 = vmatpush.msra.mxu0 0.0
        %3258 = vmatpush.msra.mxu0 0.0
        %3259 = vmatpush.msra.mxu0 0.0
        %3260 = vmatpush.msra.mxu0 0.0
        %3261 = vmatpush.msra.mxu0 0.0
        %3262 = vmatpush.msra.mxu0 0.0
        %3263 = vmatpush.msra.mxu0 0.0
        %3264 = vmatpush.msra.mxu0 0.0
        %3265 = vmatpush.msra.mxu0 %v3173
        %3266 = vmatpush.msra.mxu0 %v3169
        %3267 = vmatpush.msra.mxu0 %v3165
        %3268 = vmatpush.msra.mxu0 %v3161
        %3269 = vmatpush.msra.mxu0 %v3157
        %3270 = vmatpush.msra.mxu0 %v3153
        %3271 = vmatpush.msra.mxu0 %v3149
        %3272 = vmatpush.msra.mxu0 %v3145
        %3273 = vmatmul.f32.gmra.mxu0 %v2253
        %v3274 = vpop.f32.mrf.mxu0
        %v3275 = vadd.f32 %v2215, %v3274
        %3276 = vmatmul.f32.gmra.mxu0 %v2256
        %v3277 = vpop.f32.mrf.mxu0
        %v3278 = vadd.f32 %v2220, %v3277
        %3279 = vmatmul.f32.gmra.mxu0 %v2259
        %v3280 = vpop.f32.mrf.mxu0
        %v3281 = vadd.f32 %v2225, %v3280
        %3282 = vmatmul.f32.gmra.mxu0 %v2262
        %v3283 = vpop.f32.mrf.mxu0
        %v3284 = vadd.f32 %v2230, %v3283
        %3285 = vmatmul.f32.gmra.mxu0 %v2265
        %v3286 = vpop.f32.mrf.mxu0
        %v3287 = vadd.f32 %v2235, %v3286
        %3288 = vmatmul.f32.gmra.mxu0 %v2268
        %v3289 = vpop.f32.mrf.mxu0
        %v3290 = vadd.f32 %v2240, %v3289
        %3291 = vmatmul.f32.gmra.mxu0 %v2271
        %v3292 = vpop.f32.mrf.mxu0
        %v3293 = vadd.f32 %v2245, %v3292
        %3294 = vmatmul.f32.gmra.mxu0 %v2274
        %v3295 = vpop.f32.mrf.mxu0
        %v3296 = vadd.f32 %v2250, %v3295
        %3297 = vdwg.mxu0
        %3298 = vmatpush.msra.mxu0 0.0
        %3299 = vmatpush.msra.mxu0 0.0
        %3300 = vmatpush.msra.mxu0 0.0
        %3301 = vmatpush.msra.mxu0 0.0
        %3302 = vmatpush.msra.mxu0 0.0
        %3303 = vmatpush.msra.mxu0 0.0
        %3304 = vmatpush.msra.mxu0 0.0
        %3305 = vmatpush.msra.mxu0 0.0
        %3306 = vmatpush.msra.mxu0 %v3174
        %3307 = vmatpush.msra.mxu0 %v3170
        %3308 = vmatpush.msra.mxu0 %v3166
        %3309 = vmatpush.msra.mxu0 %v3162
        %3310 = vmatpush.msra.mxu0 %v3158
        %3311 = vmatpush.msra.mxu0 %v3154
        %3312 = vmatpush.msra.mxu0 %v3150
        %3313 = vmatpush.msra.mxu0 %v3146
        %3314 = vmatmul.f32.gmra.mxu0 %v2253
        %v3315 = vpop.f32.mrf.mxu0
        %v3316 = vadd.f32 %v2215, %v3315
        %3317 = vmatmul.f32.gmra.mxu0 %v2256
        %v3318 = vpop.f32.mrf.mxu0
        %v3319 = vadd.f32 %v2220, %v3318
        %3320 = vmatmul.f32.gmra.mxu0 %v2259
        %v3321 = vpop.f32.mrf.mxu0
        %v3322 = vadd.f32 %v2225, %v3321
        %3323 = vmatmul.f32.gmra.mxu0 %v2262
        %v3324 = vpop.f32.mrf.mxu0
        %v3325 = vadd.f32 %v2230, %v3324
        %3326 = vmatmul.f32.gmra.mxu0 %v2265
        %v3327 = vpop.f32.mrf.mxu0
        %v3328 = vadd.f32 %v2235, %v3327
        %3329 = vmatmul.f32.gmra.mxu0 %v2268
        %v3330 = vpop.f32.mrf.mxu0
        %v3331 = vadd.f32 %v2240, %v3330
        %3332 = vmatmul.f32.gmra.mxu0 %v2271
        %v3333 = vpop.f32.mrf.mxu0
        %v3334 = vadd.f32 %v2245, %v3333
        %3335 = vmatmul.f32.gmra.mxu0 %v2274
        %v3336 = vpop.f32.mrf.mxu0
        %v3337 = vadd.f32 %v2250, %v3336
        %3338 = vdwg.mxu0
        %v3339 = vmax.f32 %v3193, 0.0
        %v3340 = vmax.f32 %v3234, 0.0
        %v3341 = vmax.f32 %v3275, 0.0
        %v3342 = vmax.f32 %v3316, 0.0
        %v3343 = vmax.f32 %v3196, 0.0
        %v3344 = vmax.f32 %v3237, 0.0
        %v3345 = vmax.f32 %v3278, 0.0
        %v3346 = vmax.f32 %v3319, 0.0
        %v3347 = vmax.f32 %v3199, 0.0
        %v3348 = vmax.f32 %v3240, 0.0
        %v3349 = vmax.f32 %v3281, 0.0
        %v3350 = vmax.f32 %v3322, 0.0
        %v3351 = vmax.f32 %v3202, 0.0
        %v3352 = vmax.f32 %v3243, 0.0
        %v3353 = vmax.f32 %v3284, 0.0
        %v3354 = vmax.f32 %v3325, 0.0
        %v3355 = vmax.f32 %v3205, 0.0
        %v3356 = vmax.f32 %v3246, 0.0
        %v3357 = vmax.f32 %v3287, 0.0
        %v3358 = vmax.f32 %v3328, 0.0
        %v3359 = vmax.f32 %v3208, 0.0
        %v3360 = vmax.f32 %v3249, 0.0
        %v3361 = vmax.f32 %v3290, 0.0
        %v3362 = vmax.f32 %v3331, 0.0
        %v3363 = vmax.f32 %v3211, 0.0
        %v3364 = vmax.f32 %v3252, 0.0
        %v3365 = vmax.f32 %v3293, 0.0
        %v3366 = vmax.f32 %v3334, 0.0
        %v3367 = vmax.f32 %v3214, 0.0
        %v3368 = vmax.f32 %v3255, 0.0
        %v3369 = vmax.f32 %v3296, 0.0
        %v3370 = vmax.f32 %v3337, 0.0
        %v3372 = vsel %vm997, %v2148, 0
        %v3375 = vsel %vm997, %v2149, 0
        %v3378 = vsel %vm997, %v2150, 0
        %v3381 = vsel %vm997, %v2151, 0
        %v3384 = vsel %vm997, %v2152, 0
        %v3387 = vsel %vm997, %v2153, 0
        %v3390 = vsel %vm997, %v2154, 0
        %v3393 = vsel %vm997, %v2155, 0
        %3395 = vmatpush.msra.mxu0 0.0
        %3396 = vmatpush.msra.mxu0 0.0
        %3397 = vmatpush.msra.mxu0 0.0
        %3398 = vmatpush.msra.mxu0 0.0
        %3399 = vmatpush.msra.mxu0 0.0
        %3400 = vmatpush.msra.mxu0 0.0
        %3401 = vmatpush.msra.mxu0 0.0
        %3402 = vmatpush.msra.mxu0 0.0
        %3403 = vmatpush.msra.mxu0 %v3367
        %3404 = vmatpush.msra.mxu0 %v3363
        %3405 = vmatpush.msra.mxu0 %v3359
        %3406 = vmatpush.msra.mxu0 %v3355
        %3407 = vmatpush.msra.mxu0 %v3351
        %3408 = vmatpush.msra.mxu0 %v3347
        %3409 = vmatpush.msra.mxu0 %v3343
        %3410 = vmatpush.msra.mxu0 %v3339
        %3411 = vmatmul.f32.gmra.mxu0 %v3372
        %v3412 = vpop.f32.mrf.mxu0
        %v3413 = vadd.f32 %v3143, %v3412
        %3414 = vmatmul.f32.gmra.mxu0 %v3375
        %v3415 = vpop.f32.mrf.mxu0
        %v3416 = vadd.f32 %v3147, %v3415
        %3417 = vmatmul.f32.gmra.mxu0 %v3378
        %v3418 = vpop.f32.mrf.mxu0
        %v3419 = vadd.f32 %v3151, %v3418
        %3420 = vmatmul.f32.gmra.mxu0 %v3381
        %v3421 = vpop.f32.mrf.mxu0
        %v3422 = vadd.f32 %v3155, %v3421
        %3423 = vmatmul.f32.gmra.mxu0 %v3384
        %v3424 = vpop.f32.mrf.mxu0
        %v3425 = vadd.f32 %v3159, %v3424
        %3426 = vmatmul.f32.gmra.mxu0 %v3387
        %v3427 = vpop.f32.mrf.mxu0
        %v3428 = vadd.f32 %v3163, %v3427
        %3429 = vmatmul.f32.gmra.mxu0 %v3390
        %v3430 = vpop.f32.mrf.mxu0
        %v3431 = vadd.f32 %v3167, %v3430
        %3432 = vmatmul.f32.gmra.mxu0 %v3393
        %v3433 = vpop.f32.mrf.mxu0
        %v3434 = vadd.f32 %v3171, %v3433
        %3435 = vdwg.mxu0
        %3436 = vmatpush.msra.mxu0 0.0
        %3437 = vmatpush.msra.mxu0 0.0
        %3438 = vmatpush.msra.mxu0 0.0
        %3439 = vmatpush.msra.mxu0 0.0
        %3440 = vmatpush.msra.mxu0 0.0
        %3441 = vmatpush.msra.mxu0 0.0
        %3442 = vmatpush.msra.mxu0 0.0
        %3443 = vmatpush.msra.mxu0 0.0
        %3444 = vmatpush.msra.mxu0 %v3368
        %3445 = vmatpush.msra.mxu0 %v3364
        %3446 = vmatpush.msra.mxu0 %v3360
        %3447 = vmatpush.msra.mxu0 %v3356
        %3448 = vmatpush.msra.mxu0 %v3352
        %3449 = vmatpush.msra.mxu0 %v3348
        %3450 = vmatpush.msra.mxu0 %v3344
        %3451 = vmatpush.msra.mxu0 %v3340
        %3452 = vmatmul.f32.gmra.mxu0 %v3372
        %v3453 = vpop.f32.mrf.mxu0
        %v3454 = vadd.f32 %v3144, %v3453
        %3455 = vmatmul.f32.gmra.mxu0 %v3375
        %v3456 = vpop.f32.mrf.mxu0
        %v3457 = vadd.f32 %v3148, %v3456
        %3458 = vmatmul.f32.gmra.mxu0 %v3378
        %v3459 = vpop.f32.mrf.mxu0
        %v3460 = vadd.f32 %v3152, %v3459
        %3461 = vmatmul.f32.gmra.mxu0 %v3381
        %v3462 = vpop.f32.mrf.mxu0
        %v3463 = vadd.f32 %v3156, %v3462
        %3464 = vmatmul.f32.gmra.mxu0 %v3384
        %v3465 = vpop.f32.mrf.mxu0
        %v3466 = vadd.f32 %v3160, %v3465
        %3467 = vmatmul.f32.gmra.mxu0 %v3387
        %v3468 = vpop.f32.mrf.mxu0
        %v3469 = vadd.f32 %v3164, %v3468
        %3470 = vmatmul.f32.gmra.mxu0 %v3390
        %v3471 = vpop.f32.mrf.mxu0
        %v3472 = vadd.f32 %v3168, %v3471
        %3473 = vmatmul.f32.gmra.mxu0 %v3393
        %v3474 = vpop.f32.mrf.mxu0
        %v3475 = vadd.f32 %v3172, %v3474
        %3476 = vdwg.mxu0
        %3477 = vmatpush.msra.mxu0 0.0
        %3478 = vmatpush.msra.mxu0 0.0
        %3479 = vmatpush.msra.mxu0 0.0
        %3480 = vmatpush.msra.mxu0 0.0
        %3481 = vmatpush.msra.mxu0 0.0
        %3482 = vmatpush.msra.mxu0 0.0
        %3483 = vmatpush.msra.mxu0 0.0
        %3484 = vmatpush.msra.mxu0 0.0
        %3485 = vmatpush.msra.mxu0 %v3369
        %3486 = vmatpush.msra.mxu0 %v3365
        %3487 = vmatpush.msra.mxu0 %v3361
        %3488 = vmatpush.msra.mxu0 %v3357
        %3489 = vmatpush.msra.mxu0 %v3353
        %3490 = vmatpush.msra.mxu0 %v3349
        %3491 = vmatpush.msra.mxu0 %v3345
        %3492 = vmatpush.msra.mxu0 %v3341
        %3493 = vmatmul.f32.gmra.mxu0 %v3372
        %v3494 = vpop.f32.mrf.mxu0
        %v3495 = vadd.f32 %v3145, %v3494
        %3496 = vmatmul.f32.gmra.mxu0 %v3375
        %v3497 = vpop.f32.mrf.mxu0
        %v3498 = vadd.f32 %v3149, %v3497
        %3499 = vmatmul.f32.gmra.mxu0 %v3378
        %v3500 = vpop.f32.mrf.mxu0
        %v3501 = vadd.f32 %v3153, %v3500
        %3502 = vmatmul.f32.gmra.mxu0 %v3381
        %v3503 = vpop.f32.mrf.mxu0
        %v3504 = vadd.f32 %v3157, %v3503
        %3505 = vmatmul.f32.gmra.mxu0 %v3384
        %v3506 = vpop.f32.mrf.mxu0
        %v3507 = vadd.f32 %v3161, %v3506
        %3508 = vmatmul.f32.gmra.mxu0 %v3387
        %v3509 = vpop.f32.mrf.mxu0
        %v3510 = vadd.f32 %v3165, %v3509
        %3511 = vmatmul.f32.gmra.mxu0 %v3390
        %v3512 = vpop.f32.mrf.mxu0
        %v3513 = vadd.f32 %v3169, %v3512
        %3514 = vmatmul.f32.gmra.mxu0 %v3393
        %v3515 = vpop.f32.mrf.mxu0
        %v3516 = vadd.f32 %v3173, %v3515
        %3517 = vdwg.mxu0
        %3518 = vmatpush.msra.mxu0 0.0
        %3519 = vmatpush.msra.mxu0 0.0
        %3520 = vmatpush.msra.mxu0 0.0
        %3521 = vmatpush.msra.mxu0 0.0
        %3522 = vmatpush.msra.mxu0 0.0
        %3523 = vmatpush.msra.mxu0 0.0
        %3524 = vmatpush.msra.mxu0 0.0
        %3525 = vmatpush.msra.mxu0 0.0
        %3526 = vmatpush.msra.mxu0 %v3370
        %3527 = vmatpush.msra.mxu0 %v3366
        %3528 = vmatpush.msra.mxu0 %v3362
        %3529 = vmatpush.msra.mxu0 %v3358
        %3530 = vmatpush.msra.mxu0 %v3354
        %3531 = vmatpush.msra.mxu0 %v3350
        %3532 = vmatpush.msra.mxu0 %v3346
        %3533 = vmatpush.msra.mxu0 %v3342
        %3534 = vmatmul.f32.gmra.mxu0 %v3372
        %v3535 = vpop.f32.mrf.mxu0
        %v3536 = vadd.f32 %v3146, %v3535
        %3537 = vmatmul.f32.gmra.mxu0 %v3375
        %v3538 = vpop.f32.mrf.mxu0
        %v3539 = vadd.f32 %v3150, %v3538
        %3540 = vmatmul.f32.gmra.mxu0 %v3378
        %v3541 = vpop.f32.mrf.mxu0
        %v3542 = vadd.f32 %v3154, %v3541
        %3543 = vmatmul.f32.gmra.mxu0 %v3381
        %v3544 = vpop.f32.mrf.mxu0
        %v3545 = vadd.f32 %v3158, %v3544
        %3546 = vmatmul.f32.gmra.mxu0 %v3384
        %v3547 = vpop.f32.mrf.mxu0
        %v3548 = vadd.f32 %v3162, %v3547
        %3549 = vmatmul.f32.gmra.mxu0 %v3387
        %v3550 = vpop.f32.mrf.mxu0
        %v3551 = vadd.f32 %v3166, %v3550
        %3552 = vmatmul.f32.gmra.mxu0 %v3390
        %v3553 = vpop.f32.mrf.mxu0
        %v3554 = vadd.f32 %v3170, %v3553
        %3555 = vmatmul.f32.gmra.mxu0 %v3393
        %v3556 = vpop.f32.mrf.mxu0
        %v3557 = vadd.f32 %v3174, %v3556
        %3558 = vdwg.mxu0
        %s3559 = scalar_lea.vmem %s290, 512 [#allocation8]
        %3560 = vst [vmem:[%s3559] sm:$0xff] %v3413
        %3561 = vst [vmem:[%s3559 + $0x8] sm:$0xff] %v3454
        %3562 = vst [vmem:[%s3559 + $0x10] sm:$0xff] %v3495
        %3563 = vst [vmem:[%s3559 + $0x18] sm:$0xff] %v3536
        %3564 = vst [vmem:[%s3559 + $0x20] sm:$0xff] %v3416
        %3565 = vst [vmem:[%s3559 + $0x28] sm:$0xff] %v3457
        %3566 = vst [vmem:[%s3559 + $0x30] sm:$0xff] %v3498
        %3567 = vst [vmem:[%s3559 + $0x38] sm:$0xff] %v3539
        %3568 = vst [vmem:[%s3559 + $0x40] sm:$0xff] %v3419
        %3569 = vst [vmem:[%s3559 + $0x48] sm:$0xff] %v3460
        %3570 = vst [vmem:[%s3559 + $0x50] sm:$0xff] %v3501
        %3571 = vst [vmem:[%s3559 + $0x58] sm:$0xff] %v3542
        %3572 = vst [vmem:[%s3559 + $0x60] sm:$0xff] %v3422
        %3573 = vst [vmem:[%s3559 + $0x68] sm:$0xff] %v3463
        %3574 = vst [vmem:[%s3559 + $0x70] sm:$0xff] %v3504
        %3575 = vst [vmem:[%s3559 + $0x78] sm:$0xff] %v3545
        %3576 = vst [vmem:[%s3559 + $0x80] sm:$0xff] %v3425
        %3577 = vst [vmem:[%s3559 + $0x88] sm:$0xff] %v3466
        %3578 = vst [vmem:[%s3559 + $0x90] sm:$0xff] %v3507
        %3579 = vst [vmem:[%s3559 + $0x98] sm:$0xff] %v3548
        %3580 = vst [vmem:[%s3559 + $0xa0] sm:$0xff] %v3428
        %3581 = vst [vmem:[%s3559 + $0xa8] sm:$0xff] %v3469
        %3582 = vst [vmem:[%s3559 + $0xb0] sm:$0xff] %v3510
        %3583 = vst [vmem:[%s3559 + $0xb8] sm:$0xff] %v3551
        %3584 = vst [vmem:[%s3559 + $0xc0] sm:$0xff] %v3431
        %3585 = vst [vmem:[%s3559 + $0xc8] sm:$0xff] %v3472
        %3586 = vst [vmem:[%s3559 + $0xd0] sm:$0xff] %v3513
        %3587 = vst [vmem:[%s3559 + $0xd8] sm:$0xff] %v3554
        %3588 = vst [vmem:[%s3559 + $0xe0] sm:$0xff] %v3434
        %3589 = vst [vmem:[%s3559 + $0xe8] sm:$0xff] %v3475
        %3590 = vst [vmem:[%s3559 + $0xf0] sm:$0xff] %v3516
        %3591 = vst [vmem:[%s3559 + $0xf8] sm:$0xff] %v3557
        %s3592 = scalar_lea.vmem %s256, 768 [#allocation3]
        %v3593 = vld [vmem:[%s3592] sm:$0xff]
        %v3594 = vld [vmem:[%s3592 + $0x8] sm:$0xff]
        %v3595 = vld [vmem:[%s3592 + $0x10] sm:$0xff]
        %v3596 = vld [vmem:[%s3592 + $0x18] sm:$0xff]
        %v3597 = vld [vmem:[%s3592 + $0x20] sm:$0xff]
        %v3598 = vld [vmem:[%s3592 + $0x28] sm:$0xff]
        %v3599 = vld [vmem:[%s3592 + $0x30] sm:$0xff]
        %v3600 = vld [vmem:[%s3592 + $0x38] sm:$0xff]
        %v3601 = vld [vmem:[%s3592 + $0x40] sm:$0xff]
        %v3602 = vld [vmem:[%s3592 + $0x48] sm:$0xff]
        %v3603 = vld [vmem:[%s3592 + $0x50] sm:$0xff]
        %v3604 = vld [vmem:[%s3592 + $0x58] sm:$0xff]
        %v3605 = vld [vmem:[%s3592 + $0x60] sm:$0xff]
        %v3606 = vld [vmem:[%s3592 + $0x68] sm:$0xff]
        %v3607 = vld [vmem:[%s3592 + $0x70] sm:$0xff]
        %v3608 = vld [vmem:[%s3592 + $0x78] sm:$0xff]
        %v3609 = vld [vmem:[%s3592 + $0x80] sm:$0xff]
        %v3610 = vld [vmem:[%s3592 + $0x88] sm:$0xff]
        %v3611 = vld [vmem:[%s3592 + $0x90] sm:$0xff]
        %v3612 = vld [vmem:[%s3592 + $0x98] sm:$0xff]
        %v3613 = vld [vmem:[%s3592 + $0xa0] sm:$0xff]
        %v3614 = vld [vmem:[%s3592 + $0xa8] sm:$0xff]
        %v3615 = vld [vmem:[%s3592 + $0xb0] sm:$0xff]
        %v3616 = vld [vmem:[%s3592 + $0xb8] sm:$0xff]
        %v3617 = vld [vmem:[%s3592 + $0xc0] sm:$0xff]
        %v3618 = vld [vmem:[%s3592 + $0xc8] sm:$0xff]
        %v3619 = vld [vmem:[%s3592 + $0xd0] sm:$0xff]
        %v3620 = vld [vmem:[%s3592 + $0xd8] sm:$0xff]
        %v3621 = vld [vmem:[%s3592 + $0xe0] sm:$0xff]
        %v3622 = vld [vmem:[%s3592 + $0xe8] sm:$0xff]
        %v3623 = vld [vmem:[%s3592 + $0xf0] sm:$0xff]
        %v3624 = vld [vmem:[%s3592 + $0xf8] sm:$0xff]
        %3625 = vmatpush.msra.mxu0 0.0
        %3626 = vmatpush.msra.mxu0 0.0
        %3627 = vmatpush.msra.mxu0 0.0
        %3628 = vmatpush.msra.mxu0 0.0
        %3629 = vmatpush.msra.mxu0 0.0
        %3630 = vmatpush.msra.mxu0 0.0
        %3631 = vmatpush.msra.mxu0 0.0
        %3632 = vmatpush.msra.mxu0 0.0
        %3633 = vmatpush.msra.mxu0 %v3621
        %3634 = vmatpush.msra.mxu0 %v3617
        %3635 = vmatpush.msra.mxu0 %v3613
        %3636 = vmatpush.msra.mxu0 %v3609
        %3637 = vmatpush.msra.mxu0 %v3605
        %3638 = vmatpush.msra.mxu0 %v3601
        %3639 = vmatpush.msra.mxu0 %v3597
        %3640 = vmatpush.msra.mxu0 %v3593
        %3641 = vmatmul.f32.gmra.mxu0 %v2253
        %v3642 = vpop.f32.mrf.mxu0
        %v3643 = vadd.f32 %v2215, %v3642
        %3644 = vmatmul.f32.gmra.mxu0 %v2256
        %v3645 = vpop.f32.mrf.mxu0
        %v3646 = vadd.f32 %v2220, %v3645
        %3647 = vmatmul.f32.gmra.mxu0 %v2259
        %v3648 = vpop.f32.mrf.mxu0
        %v3649 = vadd.f32 %v2225, %v3648
        %3650 = vmatmul.f32.gmra.mxu0 %v2262
        %v3651 = vpop.f32.mrf.mxu0
        %v3652 = vadd.f32 %v2230, %v3651
        %3653 = vmatmul.f32.gmra.mxu0 %v2265
        %v3654 = vpop.f32.mrf.mxu0
        %v3655 = vadd.f32 %v2235, %v3654
        %3656 = vmatmul.f32.gmra.mxu0 %v2268
        %v3657 = vpop.f32.mrf.mxu0
        %v3658 = vadd.f32 %v2240, %v3657
        %3659 = vmatmul.f32.gmra.mxu0 %v2271
        %v3660 = vpop.f32.mrf.mxu0
        %v3661 = vadd.f32 %v2245, %v3660
        %3662 = vmatmul.f32.gmra.mxu0 %v2274
        %v3663 = vpop.f32.mrf.mxu0
        %v3664 = vadd.f32 %v2250, %v3663
        %3665 = vdwg.mxu0
        %3666 = vmatpush.msra.mxu0 0.0
        %3667 = vmatpush.msra.mxu0 0.0
        %3668 = vmatpush.msra.mxu0 0.0
        %3669 = vmatpush.msra.mxu0 0.0
        %3670 = vmatpush.msra.mxu0 0.0
        %3671 = vmatpush.msra.mxu0 0.0
        %3672 = vmatpush.msra.mxu0 0.0
        %3673 = vmatpush.msra.mxu0 0.0
        %3674 = vmatpush.msra.mxu0 %v3622
        %3675 = vmatpush.msra.mxu0 %v3618
        %3676 = vmatpush.msra.mxu0 %v3614
        %3677 = vmatpush.msra.mxu0 %v3610
        %3678 = vmatpush.msra.mxu0 %v3606
        %3679 = vmatpush.msra.mxu0 %v3602
        %3680 = vmatpush.msra.mxu0 %v3598
        %3681 = vmatpush.msra.mxu0 %v3594
        %3682 = vmatmul.f32.gmra.mxu0 %v2253
        %v3683 = vpop.f32.mrf.mxu0
        %v3684 = vadd.f32 %v2215, %v3683
        %3685 = vmatmul.f32.gmra.mxu0 %v2256
        %v3686 = vpop.f32.mrf.mxu0
        %v3687 = vadd.f32 %v2220, %v3686
        %3688 = vmatmul.f32.gmra.mxu0 %v2259
        %v3689 = vpop.f32.mrf.mxu0
        %v3690 = vadd.f32 %v2225, %v3689
        %3691 = vmatmul.f32.gmra.mxu0 %v2262
        %v3692 = vpop.f32.mrf.mxu0
        %v3693 = vadd.f32 %v2230, %v3692
        %3694 = vmatmul.f32.gmra.mxu0 %v2265
        %v3695 = vpop.f32.mrf.mxu0
        %v3696 = vadd.f32 %v2235, %v3695
        %3697 = vmatmul.f32.gmra.mxu0 %v2268
        %v3698 = vpop.f32.mrf.mxu0
        %v3699 = vadd.f32 %v2240, %v3698
        %3700 = vmatmul.f32.gmra.mxu0 %v2271
        %v3701 = vpop.f32.mrf.mxu0
        %v3702 = vadd.f32 %v2245, %v3701
        %3703 = vmatmul.f32.gmra.mxu0 %v2274
        %v3704 = vpop.f32.mrf.mxu0
        %v3705 = vadd.f32 %v2250, %v3704
        %3706 = vdwg.mxu0
        %3707 = vmatpush.msra.mxu0 0.0
        %3708 = vmatpush.msra.mxu0 0.0
        %3709 = vmatpush.msra.mxu0 0.0
        %3710 = vmatpush.msra.mxu0 0.0
        %3711 = vmatpush.msra.mxu0 0.0
        %3712 = vmatpush.msra.mxu0 0.0
        %3713 = vmatpush.msra.mxu0 0.0
        %3714 = vmatpush.msra.mxu0 0.0
        %3715 = vmatpush.msra.mxu0 %v3623
        %3716 = vmatpush.msra.mxu0 %v3619
        %3717 = vmatpush.msra.mxu0 %v3615
        %3718 = vmatpush.msra.mxu0 %v3611
        %3719 = vmatpush.msra.mxu0 %v3607
        %3720 = vmatpush.msra.mxu0 %v3603
        %3721 = vmatpush.msra.mxu0 %v3599
        %3722 = vmatpush.msra.mxu0 %v3595
        %3723 = vmatmul.f32.gmra.mxu0 %v2253
        %v3724 = vpop.f32.mrf.mxu0
        %v3725 = vadd.f32 %v2215, %v3724
        %3726 = vmatmul.f32.gmra.mxu0 %v2256
        %v3727 = vpop.f32.mrf.mxu0
        %v3728 = vadd.f32 %v2220, %v3727
        %3729 = vmatmul.f32.gmra.mxu0 %v2259
        %v3730 = vpop.f32.mrf.mxu0
        %v3731 = vadd.f32 %v2225, %v3730
        %3732 = vmatmul.f32.gmra.mxu0 %v2262
        %v3733 = vpop.f32.mrf.mxu0
        %v3734 = vadd.f32 %v2230, %v3733
        %3735 = vmatmul.f32.gmra.mxu0 %v2265
        %v3736 = vpop.f32.mrf.mxu0
        %v3737 = vadd.f32 %v2235, %v3736
        %3738 = vmatmul.f32.gmra.mxu0 %v2268
        %v3739 = vpop.f32.mrf.mxu0
        %v3740 = vadd.f32 %v2240, %v3739
        %3741 = vmatmul.f32.gmra.mxu0 %v2271
        %v3742 = vpop.f32.mrf.mxu0
        %v3743 = vadd.f32 %v2245, %v3742
        %3744 = vmatmul.f32.gmra.mxu0 %v2274
        %v3745 = vpop.f32.mrf.mxu0
        %v3746 = vadd.f32 %v2250, %v3745
        %3747 = vdwg.mxu0
        %3748 = vmatpush.msra.mxu0 0.0
        %3749 = vmatpush.msra.mxu0 0.0
        %3750 = vmatpush.msra.mxu0 0.0
        %3751 = vmatpush.msra.mxu0 0.0
        %3752 = vmatpush.msra.mxu0 0.0
        %3753 = vmatpush.msra.mxu0 0.0
        %3754 = vmatpush.msra.mxu0 0.0
        %3755 = vmatpush.msra.mxu0 0.0
        %3756 = vmatpush.msra.mxu0 %v3624
        %3757 = vmatpush.msra.mxu0 %v3620
        %3758 = vmatpush.msra.mxu0 %v3616
        %3759 = vmatpush.msra.mxu0 %v3612
        %3760 = vmatpush.msra.mxu0 %v3608
        %3761 = vmatpush.msra.mxu0 %v3604
        %3762 = vmatpush.msra.mxu0 %v3600
        %3763 = vmatpush.msra.mxu0 %v3596
        %3764 = vmatmul.f32.gmra.mxu0 %v2253
        %v3765 = vpop.f32.mrf.mxu0
        %v3766 = vadd.f32 %v2215, %v3765
        %3767 = vmatmul.f32.gmra.mxu0 %v2256
        %v3768 = vpop.f32.mrf.mxu0
        %v3769 = vadd.f32 %v2220, %v3768
        %3770 = vmatmul.f32.gmra.mxu0 %v2259
        %v3771 = vpop.f32.mrf.mxu0
        %v3772 = vadd.f32 %v2225, %v3771
        %3773 = vmatmul.f32.gmra.mxu0 %v2262
        %v3774 = vpop.f32.mrf.mxu0
        %v3775 = vadd.f32 %v2230, %v3774
        %3776 = vmatmul.f32.gmra.mxu0 %v2265
        %v3777 = vpop.f32.mrf.mxu0
        %v3778 = vadd.f32 %v2235, %v3777
        %3779 = vmatmul.f32.gmra.mxu0 %v2268
        %v3780 = vpop.f32.mrf.mxu0
        %v3781 = vadd.f32 %v2240, %v3780
        %3782 = vmatmul.f32.gmra.mxu0 %v2271
        %v3783 = vpop.f32.mrf.mxu0
        %v3784 = vadd.f32 %v2245, %v3783
        %3785 = vmatmul.f32.gmra.mxu0 %v2274
        %v3786 = vpop.f32.mrf.mxu0
        %v3787 = vadd.f32 %v2250, %v3786
        %3788 = vdwg.mxu0
        %v3789 = vmax.f32 %v3643, 0.0
        %v3790 = vmax.f32 %v3684, 0.0
        %v3791 = vmax.f32 %v3725, 0.0
        %v3792 = vmax.f32 %v3766, 0.0
        %v3793 = vmax.f32 %v3646, 0.0
        %v3794 = vmax.f32 %v3687, 0.0
        %v3795 = vmax.f32 %v3728, 0.0
        %v3796 = vmax.f32 %v3769, 0.0
        %v3797 = vmax.f32 %v3649, 0.0
        %v3798 = vmax.f32 %v3690, 0.0
        %v3799 = vmax.f32 %v3731, 0.0
        %v3800 = vmax.f32 %v3772, 0.0
        %v3801 = vmax.f32 %v3652, 0.0
        %v3802 = vmax.f32 %v3693, 0.0
        %v3803 = vmax.f32 %v3734, 0.0
        %v3804 = vmax.f32 %v3775, 0.0
        %v3805 = vmax.f32 %v3655, 0.0
        %v3806 = vmax.f32 %v3696, 0.0
        %v3807 = vmax.f32 %v3737, 0.0
        %v3808 = vmax.f32 %v3778, 0.0
        %v3809 = vmax.f32 %v3658, 0.0
        %v3810 = vmax.f32 %v3699, 0.0
        %v3811 = vmax.f32 %v3740, 0.0
        %v3812 = vmax.f32 %v3781, 0.0
        %v3813 = vmax.f32 %v3661, 0.0
        %v3814 = vmax.f32 %v3702, 0.0
        %v3815 = vmax.f32 %v3743, 0.0
        %v3816 = vmax.f32 %v3784, 0.0
        %v3817 = vmax.f32 %v3664, 0.0
        %v3818 = vmax.f32 %v3705, 0.0
        %v3819 = vmax.f32 %v3746, 0.0
        %v3820 = vmax.f32 %v3787, 0.0
        %v3822 = vsel %vm997, %v2156, 0
        %v3825 = vsel %vm997, %v2157, 0
        %v3828 = vsel %vm997, %v2158, 0
        %v3831 = vsel %vm997, %v2159, 0
        %v3834 = vsel %vm997, %v2160, 0
        %v3837 = vsel %vm997, %v2161, 0
        %v3840 = vsel %vm997, %v2162, 0
        %v3843 = vsel %vm997, %v2163, 0
        %3845 = vmatpush.msra.mxu0 0.0
        %3846 = vmatpush.msra.mxu0 0.0
        %3847 = vmatpush.msra.mxu0 0.0
        %3848 = vmatpush.msra.mxu0 0.0
        %3849 = vmatpush.msra.mxu0 0.0
        %3850 = vmatpush.msra.mxu0 0.0
        %3851 = vmatpush.msra.mxu0 0.0
        %3852 = vmatpush.msra.mxu0 0.0
        %3853 = vmatpush.msra.mxu0 %v3817
        %3854 = vmatpush.msra.mxu0 %v3813
        %3855 = vmatpush.msra.mxu0 %v3809
        %3856 = vmatpush.msra.mxu0 %v3805
        %3857 = vmatpush.msra.mxu0 %v3801
        %3858 = vmatpush.msra.mxu0 %v3797
        %3859 = vmatpush.msra.mxu0 %v3793
        %3860 = vmatpush.msra.mxu0 %v3789
        %3861 = vmatmul.f32.gmra.mxu0 %v3822
        %v3862 = vpop.f32.mrf.mxu0
        %v3863 = vadd.f32 %v3593, %v3862
        %3864 = vmatmul.f32.gmra.mxu0 %v3825
        %v3865 = vpop.f32.mrf.mxu0
        %v3866 = vadd.f32 %v3597, %v3865
        %3867 = vmatmul.f32.gmra.mxu0 %v3828
        %v3868 = vpop.f32.mrf.mxu0
        %v3869 = vadd.f32 %v3601, %v3868
        %3870 = vmatmul.f32.gmra.mxu0 %v3831
        %v3871 = vpop.f32.mrf.mxu0
        %v3872 = vadd.f32 %v3605, %v3871
        %3873 = vmatmul.f32.gmra.mxu0 %v3834
        %v3874 = vpop.f32.mrf.mxu0
        %v3875 = vadd.f32 %v3609, %v3874
        %3876 = vmatmul.f32.gmra.mxu0 %v3837
        %v3877 = vpop.f32.mrf.mxu0
        %v3878 = vadd.f32 %v3613, %v3877
        %3879 = vmatmul.f32.gmra.mxu0 %v3840
        %v3880 = vpop.f32.mrf.mxu0
        %v3881 = vadd.f32 %v3617, %v3880
        %3882 = vmatmul.f32.gmra.mxu0 %v3843
        %v3883 = vpop.f32.mrf.mxu0
        %v3884 = vadd.f32 %v3621, %v3883
        %3885 = vdwg.mxu0
        %3886 = vmatpush.msra.mxu0 0.0
        %3887 = vmatpush.msra.mxu0 0.0
        %3888 = vmatpush.msra.mxu0 0.0
        %3889 = vmatpush.msra.mxu0 0.0
        %3890 = vmatpush.msra.mxu0 0.0
        %3891 = vmatpush.msra.mxu0 0.0
        %3892 = vmatpush.msra.mxu0 0.0
        %3893 = vmatpush.msra.mxu0 0.0
        %3894 = vmatpush.msra.mxu0 %v3818
        %3895 = vmatpush.msra.mxu0 %v3814
        %3896 = vmatpush.msra.mxu0 %v3810
        %3897 = vmatpush.msra.mxu0 %v3806
        %3898 = vmatpush.msra.mxu0 %v3802
        %3899 = vmatpush.msra.mxu0 %v3798
        %3900 = vmatpush.msra.mxu0 %v3794
        %3901 = vmatpush.msra.mxu0 %v3790
        %3902 = vmatmul.f32.gmra.mxu0 %v3822
        %v3903 = vpop.f32.mrf.mxu0
        %v3904 = vadd.f32 %v3594, %v3903
        %3905 = vmatmul.f32.gmra.mxu0 %v3825
        %v3906 = vpop.f32.mrf.mxu0
        %v3907 = vadd.f32 %v3598, %v3906
        %3908 = vmatmul.f32.gmra.mxu0 %v3828
        %v3909 = vpop.f32.mrf.mxu0
        %v3910 = vadd.f32 %v3602, %v3909
        %3911 = vmatmul.f32.gmra.mxu0 %v3831
        %v3912 = vpop.f32.mrf.mxu0
        %v3913 = vadd.f32 %v3606, %v3912
        %3914 = vmatmul.f32.gmra.mxu0 %v3834
        %v3915 = vpop.f32.mrf.mxu0
        %v3916 = vadd.f32 %v3610, %v3915
        %3917 = vmatmul.f32.gmra.mxu0 %v3837
        %v3918 = vpop.f32.mrf.mxu0
        %v3919 = vadd.f32 %v3614, %v3918
        %3920 = vmatmul.f32.gmra.mxu0 %v3840
        %v3921 = vpop.f32.mrf.mxu0
        %v3922 = vadd.f32 %v3618, %v3921
        %3923 = vmatmul.f32.gmra.mxu0 %v3843
        %v3924 = vpop.f32.mrf.mxu0
        %v3925 = vadd.f32 %v3622, %v3924
        %3926 = vdwg.mxu0
        %3927 = vmatpush.msra.mxu0 0.0
        %3928 = vmatpush.msra.mxu0 0.0
        %3929 = vmatpush.msra.mxu0 0.0
        %3930 = vmatpush.msra.mxu0 0.0
        %3931 = vmatpush.msra.mxu0 0.0
        %3932 = vmatpush.msra.mxu0 0.0
        %3933 = vmatpush.msra.mxu0 0.0
        %3934 = vmatpush.msra.mxu0 0.0
        %3935 = vmatpush.msra.mxu0 %v3819
        %3936 = vmatpush.msra.mxu0 %v3815
        %3937 = vmatpush.msra.mxu0 %v3811
        %3938 = vmatpush.msra.mxu0 %v3807
        %3939 = vmatpush.msra.mxu0 %v3803
        %3940 = vmatpush.msra.mxu0 %v3799
        %3941 = vmatpush.msra.mxu0 %v3795
        %3942 = vmatpush.msra.mxu0 %v3791
        %3943 = vmatmul.f32.gmra.mxu0 %v3822
        %v3944 = vpop.f32.mrf.mxu0
        %v3945 = vadd.f32 %v3595, %v3944
        %3946 = vmatmul.f32.gmra.mxu0 %v3825
        %v3947 = vpop.f32.mrf.mxu0
        %v3948 = vadd.f32 %v3599, %v3947
        %3949 = vmatmul.f32.gmra.mxu0 %v3828
        %v3950 = vpop.f32.mrf.mxu0
        %v3951 = vadd.f32 %v3603, %v3950
        %3952 = vmatmul.f32.gmra.mxu0 %v3831
        %v3953 = vpop.f32.mrf.mxu0
        %v3954 = vadd.f32 %v3607, %v3953
        %3955 = vmatmul.f32.gmra.mxu0 %v3834
        %v3956 = vpop.f32.mrf.mxu0
        %v3957 = vadd.f32 %v3611, %v3956
        %3958 = vmatmul.f32.gmra.mxu0 %v3837
        %v3959 = vpop.f32.mrf.mxu0
        %v3960 = vadd.f32 %v3615, %v3959
        %3961 = vmatmul.f32.gmra.mxu0 %v3840
        %v3962 = vpop.f32.mrf.mxu0
        %v3963 = vadd.f32 %v3619, %v3962
        %3964 = vmatmul.f32.gmra.mxu0 %v3843
        %v3965 = vpop.f32.mrf.mxu0
        %v3966 = vadd.f32 %v3623, %v3965
        %3967 = vdwg.mxu0
        %3968 = vmatpush.msra.mxu0 0.0
        %3969 = vmatpush.msra.mxu0 0.0
        %3970 = vmatpush.msra.mxu0 0.0
        %3971 = vmatpush.msra.mxu0 0.0
        %3972 = vmatpush.msra.mxu0 0.0
        %3973 = vmatpush.msra.mxu0 0.0
        %3974 = vmatpush.msra.mxu0 0.0
        %3975 = vmatpush.msra.mxu0 0.0
        %3976 = vmatpush.msra.mxu0 %v3820
        %3977 = vmatpush.msra.mxu0 %v3816
        %3978 = vmatpush.msra.mxu0 %v3812
        %3979 = vmatpush.msra.mxu0 %v3808
        %3980 = vmatpush.msra.mxu0 %v3804
        %3981 = vmatpush.msra.mxu0 %v3800
        %3982 = vmatpush.msra.mxu0 %v3796
        %3983 = vmatpush.msra.mxu0 %v3792
        %3984 = vmatmul.f32.gmra.mxu0 %v3822
        %v3985 = vpop.f32.mrf.mxu0
        %v3986 = vadd.f32 %v3596, %v3985
        %3987 = vmatmul.f32.gmra.mxu0 %v3825
        %v3988 = vpop.f32.mrf.mxu0
        %v3989 = vadd.f32 %v3600, %v3988
        %3990 = vmatmul.f32.gmra.mxu0 %v3828
        %v3991 = vpop.f32.mrf.mxu0
        %v3992 = vadd.f32 %v3604, %v3991
        %3993 = vmatmul.f32.gmra.mxu0 %v3831
        %v3994 = vpop.f32.mrf.mxu0
        %v3995 = vadd.f32 %v3608, %v3994
        %3996 = vmatmul.f32.gmra.mxu0 %v3834
        %v3997 = vpop.f32.mrf.mxu0
        %v3998 = vadd.f32 %v3612, %v3997
        %3999 = vmatmul.f32.gmra.mxu0 %v3837
        %v4000 = vpop.f32.mrf.mxu0
        %v4001 = vadd.f32 %v3616, %v4000
        %4002 = vmatmul.f32.gmra.mxu0 %v3840
        %v4003 = vpop.f32.mrf.mxu0
        %v4004 = vadd.f32 %v3620, %v4003
        %4005 = vmatmul.f32.gmra.mxu0 %v3843
        %v4006 = vpop.f32.mrf.mxu0
        %v4007 = vadd.f32 %v3624, %v4006
        %4008 = vdwg.mxu0
        %s4009 = scalar_lea.vmem %s290, 768 [#allocation8]
        %4010 = vst [vmem:[%s4009] sm:$0xff] %v3863
        %4011 = vst [vmem:[%s4009 + $0x8] sm:$0xff] %v3904
        %4012 = vst [vmem:[%s4009 + $0x10] sm:$0xff] %v3945
        %4013 = vst [vmem:[%s4009 + $0x18] sm:$0xff] %v3986
        %4014 = vst [vmem:[%s4009 + $0x20] sm:$0xff] %v3866
        %4015 = vst [vmem:[%s4009 + $0x28] sm:$0xff] %v3907
        %4016 = vst [vmem:[%s4009 + $0x30] sm:$0xff] %v3948
        %4017 = vst [vmem:[%s4009 + $0x38] sm:$0xff] %v3989
        %4018 = vst [vmem:[%s4009 + $0x40] sm:$0xff] %v3869
        %4019 = vst [vmem:[%s4009 + $0x48] sm:$0xff] %v3910
        %4020 = vst [vmem:[%s4009 + $0x50] sm:$0xff] %v3951
        %4021 = vst [vmem:[%s4009 + $0x58] sm:$0xff] %v3992
        %4022 = vst [vmem:[%s4009 + $0x60] sm:$0xff] %v3872
        %4023 = vst [vmem:[%s4009 + $0x68] sm:$0xff] %v3913
        %4024 = vst [vmem:[%s4009 + $0x70] sm:$0xff] %v3954
        %4025 = vst [vmem:[%s4009 + $0x78] sm:$0xff] %v3995
        %4026 = vst [vmem:[%s4009 + $0x80] sm:$0xff] %v3875
        %4027 = vst [vmem:[%s4009 + $0x88] sm:$0xff] %v3916
        %4028 = vst [vmem:[%s4009 + $0x90] sm:$0xff] %v3957
        %4029 = vst [vmem:[%s4009 + $0x98] sm:$0xff] %v3998
        %4030 = vst [vmem:[%s4009 + $0xa0] sm:$0xff] %v3878
        %4031 = vst [vmem:[%s4009 + $0xa8] sm:$0xff] %v3919
        %4032 = vst [vmem:[%s4009 + $0xb0] sm:$0xff] %v3960
        %4033 = vst [vmem:[%s4009 + $0xb8] sm:$0xff] %v4001
        %4034 = vst [vmem:[%s4009 + $0xc0] sm:$0xff] %v3881
        %4035 = vst [vmem:[%s4009 + $0xc8] sm:$0xff] %v3922
        %4036 = vst [vmem:[%s4009 + $0xd0] sm:$0xff] %v3963
        %4037 = vst [vmem:[%s4009 + $0xd8] sm:$0xff] %v4004
        %4038 = vst [vmem:[%s4009 + $0xe0] sm:$0xff] %v3884
        %4039 = vst [vmem:[%s4009 + $0xe8] sm:$0xff] %v3925
        %4040 = vst [vmem:[%s4009 + $0xf0] sm:$0xff] %v3966
        %4041 = vst [vmem:[%s4009 + $0xf8] sm:$0xff] %v4007
        %s4042 = sand.u32 %s164, 1
        %s4043 = scalar_lea.sflag [#allocation5], %s4042
        %s4044 = sand.u32 %s164, 1
        %s4045 = smul.addr %s4044, 1024
        %s4046 = scalar_lea.vmem [#allocation8], %s4045
        // Predicated region
        $region53: #{tpu_custom_call.1} parent=43 // pred_check
          %p4047 = pneg %p174
        $region54: #{tpu_custom_call.1} parent=43 // pred_check_branch
          %4049 = sbr.rel (%p4047) target = $region56
        $region55: #{tpu_custom_call.1} parent=43 // pred_region
          %s4050 = smul.u32 4, %s25
          %4052 = vsyncadd %s4043, 0
          %s4053 = smul.addr %s4050, 32
          %s4054 = smul.addr %s4053, 8
          %s4055 = scalar_lea.hbm %s6, %s4054
          %s4056 = sshll.u32 %s4046, 4
          %s4057 = int_to_ptr.vmem [resolvable:$true] %s4056
          %s4058 = sshll.u32 %s4055, 4
          %s4059 = int_to_ptr.hbm [resolvable:$true] %s4058
          %4064 = dma.vmem_to_hbm [thread:$0]  %s4057, 16384, %s4059, %s4043, 512, 512, 32
        $region56: #{tpu_custom_call.1} parent=43 // pred_fallthru
          _
      $region44: #{tpu_custom_call.1} parent=5 // pred_fallthru
        _
      %p4065 = scmp.le.s32.totalorder 2, %s20
      // Predicated region
      $region57: #{tpu_custom_call.1} parent=5 // pred_check
        %p4066 = pneg %p4065
      $region58: #{tpu_custom_call.1} parent=5 // pred_check_branch
        %4068 = sbr.rel (%p4066) target = $region60
      $region59: #{tpu_custom_call.1} parent=5 // pred_region
        %s4069 = ssub.s32 %s20, 2
        // Predicated region
        $region61: #{tpu_custom_call.1} parent=59 // pred_check
          %p4070 = pneg %p180
        $region62: #{tpu_custom_call.1} parent=59 // pred_check_branch
          %4072 = sbr.rel (%p4070) target = $region64
        $region63: #{tpu_custom_call.1} parent=59 // pred_region
          %s4073 = sand.u32 %s165, 1
          %s4074 = scalar_lea.sflag [#allocation5], %s4073
          %s4075 = sand.u32 %s165, 1
          %s4076 = smul.addr %s4075, 1024
          %s4077 = scalar_lea.vmem [#allocation8], %s4076
          %4079 = dma.done %s4074, 16384
        $region64: #{tpu_custom_call.1} parent=59 // pred_fallthru
          _
      $region60: #{tpu_custom_call.1} parent=5 // pred_fallthru
        _
    $region6: #{tpu_custom_call.1} parent=1 // loop_footer
      %s24 = sadd.s32 1, %s20
    $region7: #{tpu_custom_call.1} parent=1 // loop_footer_branch
      %19 = sbr.rel target = $region3
    $region8: #{tpu_custom_call.1} parent=1 // loop_exit
      _
    %4080 = vsyncpa [#allocation4], 1
    %s4081 = scalar_lea.sflag [#allocation4], 1
    %4082 = vsyncpa %s4081, 1
    %4083 = vsyncpa [#allocation7], 1
    %4084 = vsyncpa [#allocation5], 1
    %s4085 = scalar_lea.sflag [#allocation5], 1
    %4086 = vsyncpa %s4085, 1

</llo_original>
